<compile_context>
chip_gen: v6e
topology: v6e:2x2x1
jax: 0.10.0
libtpu: 0.0.40
codegen_flags: <defaults>
</compile_context>

<pallas_src>
import math

import jax
import jax.numpy as jnp
from jax import lax
from jax.experimental import pallas as pl
from jax.experimental.pallas import tpu as pltpu

# ---- small, module-consistent sizes (original: model_dim=16, n_samples=2**15, table_size=512) ----
MODEL_DIM = 16
N_TABLES = 4
TABLE_SIZE = 512
N_SAMPLES = 512          # toy version of exp.n_samples (2**15 in the original)
N_FRAMES = 16            # toy version of exp.n_frames
BATCH = 2

TS = 512                 # samples per Pallas program; at real n_samples raise to 2048
CHUNK = 128              # in-kernel sub-tile along samples (sublane axis)
SLAB = 128               # in-kernel sub-tile along table positions (lane axis)
N_SLABS = TABLE_SIZE // SLAB

STD = 0.01
INV_NORM = 1.0 / (STD * math.sqrt(2.0 * math.pi))
# folded constants: pdf = INV_NORM * exp(-((g - mu)/(STD*sqrt(2)))^2)
PHASE_SCALE = 1.0 / (STD * math.sqrt(2.0))
GRID_SCALE = 1.0 / ((TABLE_SIZE - 1) * STD * math.sqrt(2.0))
FREQ_BIAS = 0.0009070294784580499

# f32 preserves the original module's output exactly; bf16 halves the dominant HBM writeback
# (store-bound on v5e/v6e at real n_samples) and feeds the MXU a bf16 LHS.
SK_DTYPE = jnp.float32


# ----------------------------- Pallas kernel (hot path) -----------------------------
def _synth_kernel(wt_ref, c_ref, fe_ref, out_ref, sk_ref):
    # Loop-invariant operands hoisted once per program:
    #   * wavetable RHS slabs, lane-dense (N_TABLES, SLAB) — tiny, stays resident.
    #   * pre-scaled linspace grid slabs, generated in-register (no DMA).
    wt = wt_ref[...]                                                   # (N_TABLES, TABLE_SIZE)
    wt_slabs = [wt[:, s * SLAB:(s + 1) * SLAB].astype(SK_DTYPE) for s in range(N_SLABS)]
    g_slabs = []
    for s in range(N_SLABS):
        idx = lax.broadcasted_iota(jnp.int32, (1, SLAB), 1) + (s * SLAB)
        g_slabs.append(idx.astype(jnp.float32) * GRID_SCALE)           # scaled linspace slab

    def chunk_body(i, carry):
        off = pl.multiple_of(i * CHUNK, CHUNK)
        c = c_ref[0, pl.ds(off, CHUNK), :]                             # (CHUNK, N_TABLES)
        fe = fe_ref[0, pl.ds(off, CHUNK), :]                           # (CHUNK, 2)
        phase = fe[:, 0:1]                                             # pre-scaled by PHASE_SCALE
        env = fe[:, 1:2]                                               # (CHUNK, 1)

        acc = jnp.zeros((CHUNK, N_TABLES), jnp.float32)
        for s in range(N_SLABS):                                       # static 4-way slab loop
            d = g_slabs[s] - phase                                     # (CHUNK, SLAB)
            sk = (INV_NORM * jnp.exp(-(d * d))).astype(SK_DTYPE)       # Gaussian sampling kernel
            # lane-aligned full-tile store of this slab of the sampling kernel
            sk_ref[0, pl.ds(off, CHUNK), pl.ds(s * SLAB, SLAB)] = sk
            # K=128 MXU contraction: sk_slab @ wt_slab.T, accumulated in f32
            acc = acc + lax.dot_general(
                sk, wt_slabs[s],
                dimension_numbers=(((1,), (1,)), ((), ())),
                preferred_element_type=jnp.float32)

        # final per-sample combine over the 4 tables + envelope
        sampled = jnp.sum(c * acc, axis=1, keepdims=True)              # (CHUNK, 1)
        out_ref[0, pl.ds(off, CHUNK), :] = sampled * env
        return carry

    # short fixed trip count -> unroll so the LLO scheduler sees the whole body
    # (cap unroll, e.g. unroll=4, if TS/CHUNK grows large at real n_samples)
    lax.fori_loop(0, TS // CHUNK, chunk_body, 0, unroll=True)


def _synth_pallas(wt, c_t, fe):
    batch = c_t.shape[0]
    n_tiles = N_SAMPLES // TS
    out_shapes = (
        jax.ShapeDtypeStruct((batch, N_SAMPLES, 1), jnp.float32),            # sampled (column)
        jax.ShapeDtypeStruct((batch, N_SAMPLES, TABLE_SIZE), SK_DTYPE),      # sampling_kernel
    )
    return pl.pallas_call(
        _synth_kernel,
        out_shape=out_shapes,
        grid_spec=pltpu.PrefetchScalarGridSpec(
            num_scalar_prefetch=0,
            grid=(batch, n_tiles),
            in_specs=[
                pl.BlockSpec((N_TABLES, TABLE_SIZE), lambda b, j: (0, 0)),   # wavetables (lane-dense)
                pl.BlockSpec((1, TS, N_TABLES), lambda b, j: (b, j, 0)),     # table choice
                pl.BlockSpec((1, TS, 2), lambda b, j: (b, j, 0)),            # [scaled phase, env]
            ],
            out_specs=[
                pl.BlockSpec((1, TS, 1), lambda b, j: (b, j, 0)),            # sampled
                pl.BlockSpec((1, TS, TABLE_SIZE), lambda b, j: (b, j, 0)),   # sampling_kernel
            ],
        ),
        compiler_params=pltpu.CompilerParams(
            dimension_semantics=("parallel", "parallel"),
            # sk block dominates: TS*TABLE_SIZE*4 B double-buffered.  32 MiB is plenty up to
            # TS=2048 f32; raise toward ~48 MiB only on v5e/v6e if sweeping TS=4096 in f32.
            vmem_limit_bytes=32 * 1024 * 1024,
        ),
    )(wt, c_t, fe)


# ----------------------------- plain-JAX glue -----------------------------
def torch_linear_interp(x, out_size):
    """F.interpolate(mode='linear', align_corners=False) along the last axis."""
    in_size = x.shape[-1]
    scale = in_size / out_size
    dst = jnp.arange(out_size, dtype=jnp.float32)
    src = (dst + 0.5) * scale - 0.5
    src = jnp.maximum(src, 0.0)
    i0 = jnp.floor(src).astype(jnp.int32)
    i0 = jnp.minimum(i0, in_size - 1)
    i1 = jnp.minimum(i0 + 1, in_size - 1)
    w = src - i0.astype(jnp.float32)
    return x[..., i0] * (1.0 - w) + x[..., i1] * w


def make_stack(key, in_ch, hidden, out_ch):
    # LinearOutputStack(model_dim, 1, ...) assumed: Linear -> leaky_relu(0.2) -> Linear
    k1, k2 = jax.random.split(key, 2)
    w1 = jax.random.uniform(k1, (in_ch, hidden), minval=-0.1, maxval=0.1, dtype=jnp.float32)
    b1 = jnp.zeros((hidden,), jnp.float32)
    w2 = jax.random.uniform(k2, (hidden, out_ch), minval=-0.1, maxval=0.1, dtype=jnp.float32)
    b2 = jnp.zeros((out_ch,), jnp.float32)
    return (w1, b1, w2, b2)


def apply_stack(params, x):
    w1, b1, w2, b2 = params
    h = jax.nn.leaky_relu(x @ w1 + b1, negative_slope=0.2)
    return h @ w2 + b2


@jax.jit
def wavetable_synth_forward(params, wavetables, x):
    x = x.reshape(-1, MODEL_DIM)
    batch = x.shape[0]

    # table choice: softmax over tables, interpolate 16 -> n_samples
    c = apply_stack(params["table_choice"], x).reshape(batch, N_TABLES, 16)
    c = jax.nn.softmax(c, axis=1)
    c = torch_linear_interp(c, N_SAMPLES)                       # (batch, n_tables, n_samples)
    c_t = jnp.transpose(c, (0, 2, 1))                           # (batch, n_samples, n_tables)

    # normalized wavetables (matches torch: divides by signed max, not abs max), lane-dense
    wt = wavetables / (jnp.max(wavetables, axis=-1, keepdims=True) + 1e-8)  # (n_tables, table_size)

    # envelope
    env = jnp.abs(apply_stack(params["to_env"], x)).reshape(batch, 1, N_FRAMES)
    env = torch_linear_interp(env, N_SAMPLES).reshape(batch, N_SAMPLES)

    # frequency / phase accumulation
    # TODO(synk): at the real n_samples=2**15 the f32 running phase loses ~table-grid precision
    #             late in the buffer (the torch original shares this); consider periodic wrapping.
    freq = apply_stack(params["to_frequency"], x).reshape(batch, 1, N_FRAMES)
    freq = jnp.cumsum(freq, axis=-1)
    freq = FREQ_BIAS + jax.nn.sigmoid(freq) * 0.2
    freq = torch_linear_interp(freq, N_SAMPLES)                 # (batch, 1, n_samples)
    phase = (jnp.cumsum(freq, axis=-1) % 1.0).reshape(batch, N_SAMPLES)

    # merged per-sample scalars: [:, :, 0] = phase pre-scaled by 1/(STD*sqrt(2)), [:, :, 1] = env
    fe = jnp.stack([phase * PHASE_SCALE, env], axis=-1).astype(jnp.float32)  # (batch, n_samples, 2)

    sampled_col, sampling_kernel = _synth_pallas(
        wt.astype(jnp.float32), c_t.astype(jnp.float32), fe)

    sampled = sampled_col.reshape(batch, 1, N_SAMPLES)          # (batch, 1, n_samples)
    return sampled, sampling_kernel                             # sk: (batch, n_samples, table_size)


# TODO(synk): self.embed_pos (LinearOutputStack, in_channels=33) is defined in __init__ but never
#             used in forward(), so it is intentionally not instantiated here.

if __name__ == "__main__":
    key = jax.random.PRNGKey(0)
    kx, kw, k1, k2, k3 = jax.random.split(key, 5)

    x = jax.random.normal(kx, (BATCH, MODEL_DIM), dtype=jnp.float32)
    wavetables = jax.random.uniform(kw, (N_TABLES, TABLE_SIZE),
                                    minval=-1.0, maxval=1.0, dtype=jnp.float32)
    params = {
        "table_choice": make_stack(k1, MODEL_DIM, MODEL_DIM, N_TABLES * 16),
        "to_env": make_stack(k2, MODEL_DIM, MODEL_DIM, N_FRAMES),
        "to_frequency": make_stack(k3, MODEL_DIM, MODEL_DIM, N_FRAMES),
    }

    sampled, sampling_kernel = wavetable_synth_forward(params, wavetables, x)
    jax.block_until_ready((sampled, sampling_kernel))

    assert sampled.shape == (BATCH, 1, N_SAMPLES), sampled.shape
    assert sampling_kernel.shape == (BATCH, N_SAMPLES, TABLE_SIZE), sampling_kernel.shape
    assert bool(jnp.all(jnp.isfinite(sampled))) and bool(jnp.all(jnp.isfinite(sampling_kernel)))
    print("KERNEL_OK")
</pallas_src>

<mosaic_0001>
module attributes {stable_mosaic.version = 11 : i64} {
  func.func @_synth_kernel(%arg0: i32, %arg1: i32, %arg2: memref<4x512xf32, #tpu.memory_space<vmem>>, %arg3: memref<1x512x4xf32, #tpu.memory_space<vmem>>, %arg4: memref<1x512x2xf32, #tpu.memory_space<vmem>>, %arg5: memref<1x512x1xf32, #tpu.memory_space<vmem>>, %arg6: memref<1x512x512xf32, #tpu.memory_space<vmem>>) attributes {dimension_semantics = [#tpu.dimension_semantics<parallel>, #tpu.dimension_semantics<parallel>], iteration_bounds = array<i64: 2, 1>, scalar_prefetch = 0 : i64, scratch_operands = 0 : i64, tpu.core_type = #tpu.core_type<tc>, window_params = [{pipeline_mode = #tpu.pipeline_mode<synchronous>, transform_indices = @transform_0, window_bounds = array<i64: 4, 512>}, {transform_indices = @transform_1, window_bounds = array<i64: 1, 512, 4>}, {transform_indices = @transform_2, window_bounds = array<i64: 1, 512, 2>}, {transform_indices = @transform_3, window_bounds = array<i64: 1, 512, 1>}, {transform_indices = @transform_4, window_bounds = array<i64: 1, 512, 512>}]} {
    %c0 = arith.constant 0 : index
    %c0_0 = arith.constant 0 : index
    %0 = vector.load %arg2[%c0, %c0_0] : memref<4x512xf32, #tpu.memory_space<vmem>>, vector<4x512xf32>
    %1 = vector.extract_strided_slice %0 {offsets = [0, 0], sizes = [4, 128], strides = [1, 1]} : vector<4x512xf32> to vector<4x128xf32>
    %2 = vector.extract_strided_slice %0 {offsets = [0, 128], sizes = [4, 128], strides = [1, 1]} : vector<4x512xf32> to vector<4x128xf32>
    %3 = vector.extract_strided_slice %0 {offsets = [0, 256], sizes = [4, 128], strides = [1, 1]} : vector<4x512xf32> to vector<4x128xf32>
    %4 = vector.extract_strided_slice %0 {offsets = [0, 384], sizes = [4, 128], strides = [1, 1]} : vector<4x512xf32> to vector<4x128xf32>
    %5 = tpu.iota {dimensions = array<i32: 1>} : vector<1x128xi32>
    %c0_i32 = arith.constant 0 : i32
    %6 = vector.broadcast %c0_i32 : i32 to vector<1x128xi32>
    %7 = arith.addi %5, %6 : vector<1x128xi32>
    %8 = arith.sitofp %7 : vector<1x128xi32> to vector<1x128xf32>
    %cst = arith.constant 0.138377056 : f32
    %9 = vector.broadcast %cst : f32 to vector<1x128xf32>
    %10 = arith.mulf %8, %9 : vector<1x128xf32>
    %11 = tpu.iota {dimensions = array<i32: 1>} : vector<1x128xi32>
    %c128_i32 = arith.constant 128 : i32
    %12 = vector.broadcast %c128_i32 : i32 to vector<1x128xi32>
    %13 = arith.addi %11, %12 : vector<1x128xi32>
    %14 = arith.sitofp %13 : vector<1x128xi32> to vector<1x128xf32>
    %cst_1 = arith.constant 0.138377056 : f32
    %15 = vector.broadcast %cst_1 : f32 to vector<1x128xf32>
    %16 = arith.mulf %14, %15 : vector<1x128xf32>
    %17 = tpu.iota {dimensions = array<i32: 1>} : vector<1x128xi32>
    %c256_i32 = arith.constant 256 : i32
    %18 = vector.broadcast %c256_i32 : i32 to vector<1x128xi32>
    %19 = arith.addi %17, %18 : vector<1x128xi32>
    %20 = arith.sitofp %19 : vector<1x128xi32> to vector<1x128xf32>
    %cst_2 = arith.constant 0.138377056 : f32
    %21 = vector.broadcast %cst_2 : f32 to vector<1x128xf32>
    %22 = arith.mulf %20, %21 : vector<1x128xf32>
    %23 = tpu.iota {dimensions = array<i32: 1>} : vector<1x128xi32>
    %c384_i32 = arith.constant 384 : i32
    %24 = vector.broadcast %c384_i32 : i32 to vector<1x128xi32>
    %25 = arith.addi %23, %24 : vector<1x128xi32>
    %26 = arith.sitofp %25 : vector<1x128xi32> to vector<1x128xf32>
    %cst_3 = arith.constant 0.138377056 : f32
    %27 = vector.broadcast %cst_3 : f32 to vector<1x128xf32>
    %28 = arith.mulf %26, %27 : vector<1x128xf32>
    %c0_i32_4 = arith.constant 0 : i32
    %c128_i32_5 = arith.constant 128 : i32
    %29 = arith.muli %c0_i32_4, %c128_i32_5 : i32
    %30 = tpu.assume_multiple %29, 128 : i32
    %c0_6 = arith.constant 0 : index
    %31 = arith.index_cast %30 : i32 to index
    %c0_7 = arith.constant 0 : index
    %32 = vector.load %arg3[%c0_6, %31, %c0_7] : memref<1x512x4xf32, #tpu.memory_space<vmem>>, vector<1x128x4xf32>
    %33 = vector.shape_cast %32 : vector<1x128x4xf32> to vector<128x4xf32>
    %c0_8 = arith.constant 0 : index
    %34 = arith.index_cast %30 : i32 to index
    %c0_9 = arith.constant 0 : index
    %35 = vector.load %arg4[%c0_8, %34, %c0_9] : memref<1x512x2xf32, #tpu.memory_space<vmem>>, vector<1x128x2xf32>
    %36 = vector.shape_cast %35 : vector<1x128x2xf32> to vector<128x2xf32>
    %37 = vector.extract_strided_slice %36 {offsets = [0, 0], sizes = [128, 1], strides = [1, 1]} : vector<128x2xf32> to vector<128x1xf32>
    %38 = vector.extract_strided_slice %36 {offsets = [0, 1], sizes = [128, 1], strides = [1, 1]} : vector<128x2xf32> to vector<128x1xf32>
    %cst_10 = arith.constant 0.000000e+00 : f32
    %39 = vector.broadcast %cst_10 : f32 to vector<128x4xf32>
    %40 = vector.broadcast %10 : vector<1x128xf32> to vector<128x128xf32>
    %41 = vector.broadcast %37 : vector<128x1xf32> to vector<128x128xf32>
    %42 = arith.subf %40, %41 : vector<128x128xf32>
    %43 = arith.mulf %42, %42 : vector<128x128xf32>
    %cst_11 = arith.constant 0.000000e+00 : f32
    %44 = vector.broadcast %cst_11 : f32 to vector<128x128xf32>
    %45 = arith.subf %44, %43 : vector<128x128xf32>
    %46 = math.exp %45 : vector<128x128xf32>
    %cst_12 = arith.constant 39.8942299 : f32
    %47 = vector.broadcast %cst_12 : f32 to vector<128x128xf32>
    %48 = arith.mulf %47, %46 : vector<128x128xf32>
    %c0_13 = arith.constant 0 : index
    %49 = arith.index_cast %30 : i32 to index
    %c0_14 = arith.constant 0 : index
    %50 = vector.load %arg6[%c0_13, %49, %c0_14] : memref<1x512x512xf32, #tpu.memory_space<vmem>>, vector<1x128x128xf32>
    %51 = vector.shape_cast %50 : vector<1x128x128xf32> to vector<128x128xf32>
    %52 = vector.shape_cast %48 : vector<128x128xf32> to vector<1x128x128xf32>
    tpu.vector_store %arg6[%c0_13, %49, %c0_14], %52 {strides = array<i32>} : memref<1x512x512xf32, #tpu.memory_space<vmem>>, vector<1x128x128xf32>,
    %cst_15 = arith.constant dense<0.000000e+00> : vector<128x4xf32>
    %53 = tpu.matmul %48, %1, %cst_15 {dimension_numbers = #tpu.dot_dimension_numbers<[1], [1], [0], [0], [0, 0, 1, 0], [], []>} : vector<128x128xf32>, vector<4x128xf32>, vector<128x4xf32> -> vector<128x4xf32>
    %54 = arith.addf %39, %53 : vector<128x4xf32>
    %55 = vector.broadcast %16 : vector<1x128xf32> to vector<128x128xf32>
    %56 = vector.broadcast %37 : vector<128x1xf32> to vector<128x128xf32>
    %57 = arith.subf %55, %56 : vector<128x128xf32>
    %58 = arith.mulf %57, %57 : vector<128x128xf32>
    %cst_16 = arith.constant 0.000000e+00 : f32
    %59 = vector.broadcast %cst_16 : f32 to vector<128x128xf32>
    %60 = arith.subf %59, %58 : vector<128x128xf32>
    %61 = math.exp %60 : vector<128x128xf32>
    %cst_17 = arith.constant 39.8942299 : f32
    %62 = vector.broadcast %cst_17 : f32 to vector<128x128xf32>
    %63 = arith.mulf %62, %61 : vector<128x128xf32>
    %c0_18 = arith.constant 0 : index
    %64 = arith.index_cast %30 : i32 to index
    %c128 = arith.constant 128 : index
    %65 = vector.load %arg6[%c0_18, %64, %c128] : memref<1x512x512xf32, #tpu.memory_space<vmem>>, vector<1x128x128xf32>
    %66 = vector.shape_cast %65 : vector<1x128x128xf32> to vector<128x128xf32>
    %67 = vector.shape_cast %63 : vector<128x128xf32> to vector<1x128x128xf32>
    tpu.vector_store %arg6[%c0_18, %64, %c128], %67 {strides = array<i32>} : memref<1x512x512xf32, #tpu.memory_space<vmem>>, vector<1x128x128xf32>,
    %cst_19 = arith.constant dense<0.000000e+00> : vector<128x4xf32>
    %68 = tpu.matmul %63, %2, %cst_19 {dimension_numbers = #tpu.dot_dimension_numbers<[1], [1], [0], [0], [0, 0, 1, 0], [], []>} : vector<128x128xf32>, vector<4x128xf32>, vector<128x4xf32> -> vector<128x4xf32>
    %69 = arith.addf %54, %68 : vector<128x4xf32>
    %70 = vector.broadcast %22 : vector<1x128xf32> to vector<128x128xf32>
    %71 = vector.broadcast %37 : vector<128x1xf32> to vector<128x128xf32>
    %72 = arith.subf %70, %71 : vector<128x128xf32>
    %73 = arith.mulf %72, %72 : vector<128x128xf32>
    %cst_20 = arith.constant 0.000000e+00 : f32
    %74 = vector.broadcast %cst_20 : f32 to vector<128x128xf32>
    %75 = arith.subf %74, %73 : vector<128x128xf32>
    %76 = math.exp %75 : vector<128x128xf32>
    %cst_21 = arith.constant 39.8942299 : f32
    %77 = vector.broadcast %cst_21 : f32 to vector<128x128xf32>
    %78 = arith.mulf %77, %76 : vector<128x128xf32>
    %c0_22 = arith.constant 0 : index
    %79 = arith.index_cast %30 : i32 to index
    %c256 = arith.constant 256 : index
    %80 = vector.load %arg6[%c0_22, %79, %c256] : memref<1x512x512xf32, #tpu.memory_space<vmem>>, vector<1x128x128xf32>
    %81 = vector.shape_cast %80 : vector<1x128x128xf32> to vector<128x128xf32>
    %82 = vector.shape_cast %78 : vector<128x128xf32> to vector<1x128x128xf32>
    tpu.vector_store %arg6[%c0_22, %79, %c256], %82 {strides = array<i32>} : memref<1x512x512xf32, #tpu.memory_space<vmem>>, vector<1x128x128xf32>,
    %cst_23 = arith.constant dense<0.000000e+00> : vector<128x4xf32>
    %83 = tpu.matmul %78, %3, %cst_23 {dimension_numbers = #tpu.dot_dimension_numbers<[1], [1], [0], [0], [0, 0, 1, 0], [], []>} : vector<128x128xf32>, vector<4x128xf32>, vector<128x4xf32> -> vector<128x4xf32>
    %84 = arith.addf %69, %83 : vector<128x4xf32>
    %85 = vector.broadcast %28 : vector<1x128xf32> to vector<128x128xf32>
    %86 = vector.broadcast %37 : vector<128x1xf32> to vector<128x128xf32>
    %87 = arith.subf %85, %86 : vector<128x128xf32>
    %88 = arith.mulf %87, %87 : vector<128x128xf32>
    %cst_24 = arith.constant 0.000000e+00 : f32
    %89 = vector.broadcast %cst_24 : f32 to vector<128x128xf32>
    %90 = arith.subf %89, %88 : vector<128x128xf32>
    %91 = math.exp %90 : vector<128x128xf32>
    %cst_25 = arith.constant 39.8942299 : f32
    %92 = vector.broadcast %cst_25 : f32 to vector<128x128xf32>
    %93 = arith.mulf %92, %91 : vector<128x128xf32>
    %c0_26 = arith.constant 0 : index
    %94 = arith.index_cast %30 : i32 to index
    %c384 = arith.constant 384 : index
    %95 = vector.load %arg6[%c0_26, %94, %c384] : memref<1x512x512xf32, #tpu.memory_space<vmem>>, vector<1x128x128xf32>
    %96 = vector.shape_cast %95 : vector<1x128x128xf32> to vector<128x128xf32>
    %97 = vector.shape_cast %93 : vector<128x128xf32> to vector<1x128x128xf32>
    tpu.vector_store %arg6[%c0_26, %94, %c384], %97 {strides = array<i32>} : memref<1x512x512xf32, #tpu.memory_space<vmem>>, vector<1x128x128xf32>,
    %cst_27 = arith.constant dense<0.000000e+00> : vector<128x4xf32>
    %98 = tpu.matmul %93, %4, %cst_27 {dimension_numbers = #tpu.dot_dimension_numbers<[1], [1], [0], [0], [0, 0, 1, 0], [], []>} : vector<128x128xf32>, vector<4x128xf32>, vector<128x4xf32> -> vector<128x4xf32>
    %99 = arith.addf %84, %98 : vector<128x4xf32>
    %100 = arith.mulf %33, %99 : vector<128x4xf32>
    %cst_28 = arith.constant dense<0.000000e+00> : vector<128xf32>
    %101 = vector.multi_reduction <add>, %100, %cst_28 [1] : vector<128x4xf32> to vector<128xf32>
    %102 = vector.shape_cast %101 : vector<128xf32> to vector<128x1xf32>
    %103 = arith.mulf %102, %38 : vector<128x1xf32>
    %c0_29 = arith.constant 0 : index
    %104 = arith.index_cast %30 : i32 to index
    %c0_30 = arith.constant 0 : index
    %105 = vector.load %arg5[%c0_29, %104, %c0_30] : memref<1x512x1xf32, #tpu.memory_space<vmem>>, vector<1x128x1xf32>
    %106 = vector.shape_cast %105 : vector<1x128x1xf32> to vector<128x1xf32>
    %107 = vector.shape_cast %103 : vector<128x1xf32> to vector<1x128x1xf32>
    tpu.vector_store %arg5[%c0_29, %104, %c0_30], %107 {strides = array<i32>} : memref<1x512x1xf32, #tpu.memory_space<vmem>>, vector<1x128x1xf32>,
    %c1_i32 = arith.constant 1 : i32
    %c128_i32_31 = arith.constant 128 : i32
    %108 = arith.muli %c1_i32, %c128_i32_31 : i32
    %109 = tpu.assume_multiple %108, 128 : i32
    %c0_32 = arith.constant 0 : index
    %110 = arith.index_cast %109 : i32 to index
    %c0_33 = arith.constant 0 : index
    %111 = vector.load %arg3[%c0_32, %110, %c0_33] : memref<1x512x4xf32, #tpu.memory_space<vmem>>, vector<1x128x4xf32>
    %112 = vector.shape_cast %111 : vector<1x128x4xf32> to vector<128x4xf32>
    %c0_34 = arith.constant 0 : index
    %113 = arith.index_cast %109 : i32 to index
    %c0_35 = arith.constant 0 : index
    %114 = vector.load %arg4[%c0_34, %113, %c0_35] : memref<1x512x2xf32, #tpu.memory_space<vmem>>, vector<1x128x2xf32>
    %115 = vector.shape_cast %114 : vector<1x128x2xf32> to vector<128x2xf32>
    %116 = vector.extract_strided_slice %115 {offsets = [0, 0], sizes = [128, 1], strides = [1, 1]} : vector<128x2xf32> to vector<128x1xf32>
    %117 = vector.extract_strided_slice %115 {offsets = [0, 1], sizes = [128, 1], strides = [1, 1]} : vector<128x2xf32> to vector<128x1xf32>
    %cst_36 = arith.constant 0.000000e+00 : f32
    %118 = vector.broadcast %cst_36 : f32 to vector<128x4xf32>
    %119 = vector.broadcast %10 : vector<1x128xf32> to vector<128x128xf32>
    %120 = vector.broadcast %116 : vector<128x1xf32> to vector<128x128xf32>
    %121 = arith.subf %119, %120 : vector<128x128xf32>
    %122 = arith.mulf %121, %121 : vector<128x128xf32>
    %cst_37 = arith.constant 0.000000e+00 : f32
    %123 = vector.broadcast %cst_37 : f32 to vector<128x128xf32>
    %124 = arith.subf %123, %122 : vector<128x128xf32>
    %125 = math.exp %124 : vector<128x128xf32>
    %cst_38 = arith.constant 39.8942299 : f32
    %126 = vector.broadcast %cst_38 : f32 to vector<128x128xf32>
    %127 = arith.mulf %126, %125 : vector<128x128xf32>
    %c0_39 = arith.constant 0 : index
    %128 = arith.index_cast %109 : i32 to index
    %c0_40 = arith.constant 0 : index
    %129 = vector.load %arg6[%c0_39, %128, %c0_40] : memref<1x512x512xf32, #tpu.memory_space<vmem>>, vector<1x128x128xf32>
    %130 = vector.shape_cast %129 : vector<1x128x128xf32> to vector<128x128xf32>
    %131 = vector.shape_cast %127 : vector<128x128xf32> to vector<1x128x128xf32>
    tpu.vector_store %arg6[%c0_39, %128, %c0_40], %131 {strides = array<i32>} : memref<1x512x512xf32, #tpu.memory_space<vmem>>, vector<1x128x128xf32>,
    %cst_41 = arith.constant dense<0.000000e+00> : vector<128x4xf32>
    %132 = tpu.matmul %127, %1, %cst_41 {dimension_numbers = #tpu.dot_dimension_numbers<[1], [1], [0], [0], [0, 0, 1, 0], [], []>} : vector<128x128xf32>, vector<4x128xf32>, vector<128x4xf32> -> vector<128x4xf32>
    %133 = arith.addf %118, %132 : vector<128x4xf32>
    %134 = vector.broadcast %16 : vector<1x128xf32> to vector<128x128xf32>
    %135 = vector.broadcast %116 : vector<128x1xf32> to vector<128x128xf32>
    %136 = arith.subf %134, %135 : vector<128x128xf32>
    %137 = arith.mulf %136, %136 : vector<128x128xf32>
    %cst_42 = arith.constant 0.000000e+00 : f32
    %138 = vector.broadcast %cst_42 : f32 to vector<128x128xf32>
    %139 = arith.subf %138, %137 : vector<128x128xf32>
    %140 = math.exp %139 : vector<128x128xf32>
    %cst_43 = arith.constant 39.8942299 : f32
    %141 = vector.broadcast %cst_43 : f32 to vector<128x128xf32>
    %142 = arith.mulf %141, %140 : vector<128x128xf32>
    %c0_44 = arith.constant 0 : index
    %143 = arith.index_cast %109 : i32 to index
    %c128_45 = arith.constant 128 : index
    %144 = vector.load %arg6[%c0_44, %143, %c128_45] : memref<1x512x512xf32, #tpu.memory_space<vmem>>, vector<1x128x128xf32>
    %145 = vector.shape_cast %144 : vector<1x128x128xf32> to vector<128x128xf32>
    %146 = vector.shape_cast %142 : vector<128x128xf32> to vector<1x128x128xf32>
    tpu.vector_store %arg6[%c0_44, %143, %c128_45], %146 {strides = array<i32>} : memref<1x512x512xf32, #tpu.memory_space<vmem>>, vector<1x128x128xf32>,
    %cst_46 = arith.constant dense<0.000000e+00> : vector<128x4xf32>
    %147 = tpu.matmul %142, %2, %cst_46 {dimension_numbers = #tpu.dot_dimension_numbers<[1], [1], [0], [0], [0, 0, 1, 0], [], []>} : vector<128x128xf32>, vector<4x128xf32>, vector<128x4xf32> -> vector<128x4xf32>
    %148 = arith.addf %133, %147 : vector<128x4xf32>
    %149 = vector.broadcast %22 : vector<1x128xf32> to vector<128x128xf32>
    %150 = vector.broadcast %116 : vector<128x1xf32> to vector<128x128xf32>
    %151 = arith.subf %149, %150 : vector<128x128xf32>
    %152 = arith.mulf %151, %151 : vector<128x128xf32>
    %cst_47 = arith.constant 0.000000e+00 : f32
    %153 = vector.broadcast %cst_47 : f32 to vector<128x128xf32>
    %154 = arith.subf %153, %152 : vector<128x128xf32>
    %155 = math.exp %154 : vector<128x128xf32>
    %cst_48 = arith.constant 39.8942299 : f32
    %156 = vector.broadcast %cst_48 : f32 to vector<128x128xf32>
    %157 = arith.mulf %156, %155 : vector<128x128xf32>
    %c0_49 = arith.constant 0 : index
    %158 = arith.index_cast %109 : i32 to index
    %c256_50 = arith.constant 256 : index
    %159 = vector.load %arg6[%c0_49, %158, %c256_50] : memref<1x512x512xf32, #tpu.memory_space<vmem>>, vector<1x128x128xf32>
    %160 = vector.shape_cast %159 : vector<1x128x128xf32> to vector<128x128xf32>
    %161 = vector.shape_cast %157 : vector<128x128xf32> to vector<1x128x128xf32>
    tpu.vector_store %arg6[%c0_49, %158, %c256_50], %161 {strides = array<i32>} : memref<1x512x512xf32, #tpu.memory_space<vmem>>, vector<1x128x128xf32>,
    %cst_51 = arith.constant dense<0.000000e+00> : vector<128x4xf32>
    %162 = tpu.matmul %157, %3, %cst_51 {dimension_numbers = #tpu.dot_dimension_numbers<[1], [1], [0], [0], [0, 0, 1, 0], [], []>} : vector<128x128xf32>, vector<4x128xf32>, vector<128x4xf32> -> vector<128x4xf32>
    %163 = arith.addf %148, %162 : vector<128x4xf32>
    %164 = vector.broadcast %28 : vector<1x128xf32> to vector<128x128xf32>
    %165 = vector.broadcast %116 : vector<128x1xf32> to vector<128x128xf32>
    %166 = arith.subf %164, %165 : vector<128x128xf32>
    %167 = arith.mulf %166, %166 : vector<128x128xf32>
    %cst_52 = arith.constant 0.000000e+00 : f32
    %168 = vector.broadcast %cst_52 : f32 to vector<128x128xf32>
    %169 = arith.subf %168, %167 : vector<128x128xf32>
    %170 = math.exp %169 : vector<128x128xf32>
    %cst_53 = arith.constant 39.8942299 : f32
    %171 = vector.broadcast %cst_53 : f32 to vector<128x128xf32>
    %172 = arith.mulf %171, %170 : vector<128x128xf32>
    %c0_54 = arith.constant 0 : index
    %173 = arith.index_cast %109 : i32 to index
    %c384_55 = arith.constant 384 : index
    %174 = vector.load %arg6[%c0_54, %173, %c384_55] : memref<1x512x512xf32, #tpu.memory_space<vmem>>, vector<1x128x128xf32>
    %175 = vector.shape_cast %174 : vector<1x128x128xf32> to vector<128x128xf32>
    %176 = vector.shape_cast %172 : vector<128x128xf32> to vector<1x128x128xf32>
    tpu.vector_store %arg6[%c0_54, %173, %c384_55], %176 {strides = array<i32>} : memref<1x512x512xf32, #tpu.memory_space<vmem>>, vector<1x128x128xf32>,
    %cst_56 = arith.constant dense<0.000000e+00> : vector<128x4xf32>
    %177 = tpu.matmul %172, %4, %cst_56 {dimension_numbers = #tpu.dot_dimension_numbers<[1], [1], [0], [0], [0, 0, 1, 0], [], []>} : vector<128x128xf32>, vector<4x128xf32>, vector<128x4xf32> -> vector<128x4xf32>
    %178 = arith.addf %163, %177 : vector<128x4xf32>
    %179 = arith.mulf %112, %178 : vector<128x4xf32>
    %cst_57 = arith.constant dense<0.000000e+00> : vector<128xf32>
    %180 = vector.multi_reduction <add>, %179, %cst_57 [1] : vector<128x4xf32> to vector<128xf32>
    %181 = vector.shape_cast %180 : vector<128xf32> to vector<128x1xf32>
    %182 = arith.mulf %181, %117 : vector<128x1xf32>
    %c0_58 = arith.constant 0 : index
    %183 = arith.index_cast %109 : i32 to index
    %c0_59 = arith.constant 0 : index
    %184 = vector.load %arg5[%c0_58, %183, %c0_59] : memref<1x512x1xf32, #tpu.memory_space<vmem>>, vector<1x128x1xf32>
    %185 = vector.shape_cast %184 : vector<1x128x1xf32> to vector<128x1xf32>
    %186 = vector.shape_cast %182 : vector<128x1xf32> to vector<1x128x1xf32>
    tpu.vector_store %arg5[%c0_58, %183, %c0_59], %186 {strides = array<i32>} : memref<1x512x1xf32, #tpu.memory_space<vmem>>, vector<1x128x1xf32>,
    %c2_i32 = arith.constant 2 : i32
    %c128_i32_60 = arith.constant 128 : i32
    %187 = arith.muli %c2_i32, %c128_i32_60 : i32
    %188 = tpu.assume_multiple %187, 128 : i32
    %c0_61 = arith.constant 0 : index
    %189 = arith.index_cast %188 : i32 to index
    %c0_62 = arith.constant 0 : index
    %190 = vector.load %arg3[%c0_61, %189, %c0_62] : memref<1x512x4xf32, #tpu.memory_space<vmem>>, vector<1x128x4xf32>
    %191 = vector.shape_cast %190 : vector<1x128x4xf32> to vector<128x4xf32>
    %c0_63 = arith.constant 0 : index
    %192 = arith.index_cast %188 : i32 to index
    %c0_64 = arith.constant 0 : index
    %193 = vector.load %arg4[%c0_63, %192, %c0_64] : memref<1x512x2xf32, #tpu.memory_space<vmem>>, vector<1x128x2xf32>
    %194 = vector.shape_cast %193 : vector<1x128x2xf32> to vector<128x2xf32>
    %195 = vector.extract_strided_slice %194 {offsets = [0, 0], sizes = [128, 1], strides = [1, 1]} : vector<128x2xf32> to vector<128x1xf32>
    %196 = vector.extract_strided_slice %194 {offsets = [0, 1], sizes = [128, 1], strides = [1, 1]} : vector<128x2xf32> to vector<128x1xf32>
    %cst_65 = arith.constant 0.000000e+00 : f32
    %197 = vector.broadcast %cst_65 : f32 to vector<128x4xf32>
    %198 = vector.broadcast %10 : vector<1x128xf32> to vector<128x128xf32>
    %199 = vector.broadcast %195 : vector<128x1xf32> to vector<128x128xf32>
    %200 = arith.subf %198, %199 : vector<128x128xf32>
    %201 = arith.mulf %200, %200 : vector<128x128xf32>
    %cst_66 = arith.constant 0.000000e+00 : f32
    %202 = vector.broadcast %cst_66 : f32 to vector<128x128xf32>
    %203 = arith.subf %202, %201 : vector<128x128xf32>
    %204 = math.exp %203 : vector<128x128xf32>
    %cst_67 = arith.constant 39.8942299 : f32
    %205 = vector.broadcast %cst_67 : f32 to vector<128x128xf32>
    %206 = arith.mulf %205, %204 : vector<128x128xf32>
    %c0_68 = arith.constant 0 : index
    %207 = arith.index_cast %188 : i32 to index
    %c0_69 = arith.constant 0 : index
    %208 = vector.load %arg6[%c0_68, %207, %c0_69] : memref<1x512x512xf32, #tpu.memory_space<vmem>>, vector<1x128x128xf32>
    %209 = vector.shape_cast %208 : vector<1x128x128xf32> to vector<128x128xf32>
    %210 = vector.shape_cast %206 : vector<128x128xf32> to vector<1x128x128xf32>
    tpu.vector_store %arg6[%c0_68, %207, %c0_69], %210 {strides = array<i32>} : memref<1x512x512xf32, #tpu.memory_space<vmem>>, vector<1x128x128xf32>,
    %cst_70 = arith.constant dense<0.000000e+00> : vector<128x4xf32>
    %211 = tpu.matmul %206, %1, %cst_70 {dimension_numbers = #tpu.dot_dimension_numbers<[1], [1], [0], [0], [0, 0, 1, 0], [], []>} : vector<128x128xf32>, vector<4x128xf32>, vector<128x4xf32> -> vector<128x4xf32>
    %212 = arith.addf %197, %211 : vector<128x4xf32>
    %213 = vector.broadcast %16 : vector<1x128xf32> to vector<128x128xf32>
    %214 = vector.broadcast %195 : vector<128x1xf32> to vector<128x128xf32>
    %215 = arith.subf %213, %214 : vector<128x128xf32>
    %216 = arith.mulf %215, %215 : vector<128x128xf32>
    %cst_71 = arith.constant 0.000000e+00 : f32
    %217 = vector.broadcast %cst_71 : f32 to vector<128x128xf32>
    %218 = arith.subf %217, %216 : vector<128x128xf32>
    %219 = math.exp %218 : vector<128x128xf32>
    %cst_72 = arith.constant 39.8942299 : f32
    %220 = vector.broadcast %cst_72 : f32 to vector<128x128xf32>
    %221 = arith.mulf %220, %219 : vector<128x128xf32>
    %c0_73 = arith.constant 0 : index
    %222 = arith.index_cast %188 : i32 to index
    %c128_74 = arith.constant 128 : index
    %223 = vector.load %arg6[%c0_73, %222, %c128_74] : memref<1x512x512xf32, #tpu.memory_space<vmem>>, vector<1x128x128xf32>
    %224 = vector.shape_cast %223 : vector<1x128x128xf32> to vector<128x128xf32>
    %225 = vector.shape_cast %221 : vector<128x128xf32> to vector<1x128x128xf32>
    tpu.vector_store %arg6[%c0_73, %222, %c128_74], %225 {strides = array<i32>} : memref<1x512x512xf32, #tpu.memory_space<vmem>>, vector<1x128x128xf32>,
    %cst_75 = arith.constant dense<0.000000e+00> : vector<128x4xf32>
    %226 = tpu.matmul %221, %2, %cst_75 {dimension_numbers = #tpu.dot_dimension_numbers<[1], [1], [0], [0], [0, 0, 1, 0], [], []>} : vector<128x128xf32>, vector<4x128xf32>, vector<128x4xf32> -> vector<128x4xf32>
    %227 = arith.addf %212, %226 : vector<128x4xf32>
    %228 = vector.broadcast %22 : vector<1x128xf32> to vector<128x128xf32>
    %229 = vector.broadcast %195 : vector<128x1xf32> to vector<128x128xf32>
    %230 = arith.subf %228, %229 : vector<128x128xf32>
    %231 = arith.mulf %230, %230 : vector<128x128xf32>
    %cst_76 = arith.constant 0.000000e+00 : f32
    %232 = vector.broadcast %cst_76 : f32 to vector<128x128xf32>
    %233 = arith.subf %232, %231 : vector<128x128xf32>
    %234 = math.exp %233 : vector<128x128xf32>
    %cst_77 = arith.constant 39.8942299 : f32
    %235 = vector.broadcast %cst_77 : f32 to vector<128x128xf32>
    %236 = arith.mulf %235, %234 : vector<128x128xf32>
    %c0_78 = arith.constant 0 : index
    %237 = arith.index_cast %188 : i32 to index
    %c256_79 = arith.constant 256 : index
    %238 = vector.load %arg6[%c0_78, %237, %c256_79] : memref<1x512x512xf32, #tpu.memory_space<vmem>>, vector<1x128x128xf32>
    %239 = vector.shape_cast %238 : vector<1x128x128xf32> to vector<128x128xf32>
    %240 = vector.shape_cast %236 : vector<128x128xf32> to vector<1x128x128xf32>
    tpu.vector_store %arg6[%c0_78, %237, %c256_79], %240 {strides = array<i32>} : memref<1x512x512xf32, #tpu.memory_space<vmem>>, vector<1x128x128xf32>,
    %cst_80 = arith.constant dense<0.000000e+00> : vector<128x4xf32>
    %241 = tpu.matmul %236, %3, %cst_80 {dimension_numbers = #tpu.dot_dimension_numbers<[1], [1], [0], [0], [0, 0, 1, 0], [], []>} : vector<128x128xf32>, vector<4x128xf32>, vector<128x4xf32> -> vector<128x4xf32>
    %242 = arith.addf %227, %241 : vector<128x4xf32>
    %243 = vector.broadcast %28 : vector<1x128xf32> to vector<128x128xf32>
    %244 = vector.broadcast %195 : vector<128x1xf32> to vector<128x128xf32>
    %245 = arith.subf %243, %244 : vector<128x128xf32>
    %246 = arith.mulf %245, %245 : vector<128x128xf32>
    %cst_81 = arith.constant 0.000000e+00 : f32
    %247 = vector.broadcast %cst_81 : f32 to vector<128x128xf32>
    %248 = arith.subf %247, %246 : vector<128x128xf32>
    %249 = math.exp %248 : vector<128x128xf32>
    %cst_82 = arith.constant 39.8942299 : f32
    %250 = vector.broadcast %cst_82 : f32 to vector<128x128xf32>
    %251 = arith.mulf %250, %249 : vector<128x128xf32>
    %c0_83 = arith.constant 0 : index
    %252 = arith.index_cast %188 : i32 to index
    %c384_84 = arith.constant 384 : index
    %253 = vector.load %arg6[%c0_83, %252, %c384_84] : memref<1x512x512xf32, #tpu.memory_space<vmem>>, vector<1x128x128xf32>
    %254 = vector.shape_cast %253 : vector<1x128x128xf32> to vector<128x128xf32>
    %255 = vector.shape_cast %251 : vector<128x128xf32> to vector<1x128x128xf32>
    tpu.vector_store %arg6[%c0_83, %252, %c384_84], %255 {strides = array<i32>} : memref<1x512x512xf32, #tpu.memory_space<vmem>>, vector<1x128x128xf32>,
    %cst_85 = arith.constant dense<0.000000e+00> : vector<128x4xf32>
    %256 = tpu.matmul %251, %4, %cst_85 {dimension_numbers = #tpu.dot_dimension_numbers<[1], [1], [0], [0], [0, 0, 1, 0], [], []>} : vector<128x128xf32>, vector<4x128xf32>, vector<128x4xf32> -> vector<128x4xf32>
    %257 = arith.addf %242, %256 : vector<128x4xf32>
    %258 = arith.mulf %191, %257 : vector<128x4xf32>
    %cst_86 = arith.constant dense<0.000000e+00> : vector<128xf32>
    %259 = vector.multi_reduction <add>, %258, %cst_86 [1] : vector<128x4xf32> to vector<128xf32>
    %260 = vector.shape_cast %259 : vector<128xf32> to vector<128x1xf32>
    %261 = arith.mulf %260, %196 : vector<128x1xf32>
    %c0_87 = arith.constant 0 : index
    %262 = arith.index_cast %188 : i32 to index
    %c0_88 = arith.constant 0 : index
    %263 = vector.load %arg5[%c0_87, %262, %c0_88] : memref<1x512x1xf32, #tpu.memory_space<vmem>>, vector<1x128x1xf32>
    %264 = vector.shape_cast %263 : vector<1x128x1xf32> to vector<128x1xf32>
    %265 = vector.shape_cast %261 : vector<128x1xf32> to vector<1x128x1xf32>
    tpu.vector_store %arg5[%c0_87, %262, %c0_88], %265 {strides = array<i32>} : memref<1x512x1xf32, #tpu.memory_space<vmem>>, vector<1x128x1xf32>,
    %c3_i32 = arith.constant 3 : i32
    %c128_i32_89 = arith.constant 128 : i32
    %266 = arith.muli %c3_i32, %c128_i32_89 : i32
    %267 = tpu.assume_multiple %266, 128 : i32
    %c0_90 = arith.constant 0 : index
    %268 = arith.index_cast %267 : i32 to index
    %c0_91 = arith.constant 0 : index
    %269 = vector.load %arg3[%c0_90, %268, %c0_91] : memref<1x512x4xf32, #tpu.memory_space<vmem>>, vector<1x128x4xf32>
    %270 = vector.shape_cast %269 : vector<1x128x4xf32> to vector<128x4xf32>
    %c0_92 = arith.constant 0 : index
    %271 = arith.index_cast %267 : i32 to index
    %c0_93 = arith.constant 0 : index
    %272 = vector.load %arg4[%c0_92, %271, %c0_93] : memref<1x512x2xf32, #tpu.memory_space<vmem>>, vector<1x128x2xf32>
    %273 = vector.shape_cast %272 : vector<1x128x2xf32> to vector<128x2xf32>
    %274 = vector.extract_strided_slice %273 {offsets = [0, 0], sizes = [128, 1], strides = [1, 1]} : vector<128x2xf32> to vector<128x1xf32>
    %275 = vector.extract_strided_slice %273 {offsets = [0, 1], sizes = [128, 1], strides = [1, 1]} : vector<128x2xf32> to vector<128x1xf32>
    %cst_94 = arith.constant 0.000000e+00 : f32
    %276 = vector.broadcast %cst_94 : f32 to vector<128x4xf32>
    %277 = vector.broadcast %10 : vector<1x128xf32> to vector<128x128xf32>
    %278 = vector.broadcast %274 : vector<128x1xf32> to vector<128x128xf32>
    %279 = arith.subf %277, %278 : vector<128x128xf32>
    %280 = arith.mulf %279, %279 : vector<128x128xf32>
    %cst_95 = arith.constant 0.000000e+00 : f32
    %281 = vector.broadcast %cst_95 : f32 to vector<128x128xf32>
    %282 = arith.subf %281, %280 : vector<128x128xf32>
    %283 = math.exp %282 : vector<128x128xf32>
    %cst_96 = arith.constant 39.8942299 : f32
    %284 = vector.broadcast %cst_96 : f32 to vector<128x128xf32>
    %285 = arith.mulf %284, %283 : vector<128x128xf32>
    %c0_97 = arith.constant 0 : index
    %286 = arith.index_cast %267 : i32 to index
    %c0_98 = arith.constant 0 : index
    %287 = vector.load %arg6[%c0_97, %286, %c0_98] : memref<1x512x512xf32, #tpu.memory_space<vmem>>, vector<1x128x128xf32>
    %288 = vector.shape_cast %287 : vector<1x128x128xf32> to vector<128x128xf32>
    %289 = vector.shape_cast %285 : vector<128x128xf32> to vector<1x128x128xf32>
    tpu.vector_store %arg6[%c0_97, %286, %c0_98], %289 {strides = array<i32>} : memref<1x512x512xf32, #tpu.memory_space<vmem>>, vector<1x128x128xf32>,
    %cst_99 = arith.constant dense<0.000000e+00> : vector<128x4xf32>
    %290 = tpu.matmul %285, %1, %cst_99 {dimension_numbers = #tpu.dot_dimension_numbers<[1], [1], [0], [0], [0, 0, 1, 0], [], []>} : vector<128x128xf32>, vector<4x128xf32>, vector<128x4xf32> -> vector<128x4xf32>
    %291 = arith.addf %276, %290 : vector<128x4xf32>
    %292 = vector.broadcast %16 : vector<1x128xf32> to vector<128x128xf32>
    %293 = vector.broadcast %274 : vector<128x1xf32> to vector<128x128xf32>
    %294 = arith.subf %292, %293 : vector<128x128xf32>
    %295 = arith.mulf %294, %294 : vector<128x128xf32>
    %cst_100 = arith.constant 0.000000e+00 : f32
    %296 = vector.broadcast %cst_100 : f32 to vector<128x128xf32>
    %297 = arith.subf %296, %295 : vector<128x128xf32>
    %298 = math.exp %297 : vector<128x128xf32>
    %cst_101 = arith.constant 39.8942299 : f32
    %299 = vector.broadcast %cst_101 : f32 to vector<128x128xf32>
    %300 = arith.mulf %299, %298 : vector<128x128xf32>
    %c0_102 = arith.constant 0 : index
    %301 = arith.index_cast %267 : i32 to index
    %c128_103 = arith.constant 128 : index
    %302 = vector.load %arg6[%c0_102, %301, %c128_103] : memref<1x512x512xf32, #tpu.memory_space<vmem>>, vector<1x128x128xf32>
    %303 = vector.shape_cast %302 : vector<1x128x128xf32> to vector<128x128xf32>
    %304 = vector.shape_cast %300 : vector<128x128xf32> to vector<1x128x128xf32>
    tpu.vector_store %arg6[%c0_102, %301, %c128_103], %304 {strides = array<i32>} : memref<1x512x512xf32, #tpu.memory_space<vmem>>, vector<1x128x128xf32>,
    %cst_104 = arith.constant dense<0.000000e+00> : vector<128x4xf32>
    %305 = tpu.matmul %300, %2, %cst_104 {dimension_numbers = #tpu.dot_dimension_numbers<[1], [1], [0], [0], [0, 0, 1, 0], [], []>} : vector<128x128xf32>, vector<4x128xf32>, vector<128x4xf32> -> vector<128x4xf32>
    %306 = arith.addf %291, %305 : vector<128x4xf32>
    %307 = vector.broadcast %22 : vector<1x128xf32> to vector<128x128xf32>
    %308 = vector.broadcast %274 : vector<128x1xf32> to vector<128x128xf32>
    %309 = arith.subf %307, %308 : vector<128x128xf32>
    %310 = arith.mulf %309, %309 : vector<128x128xf32>
    %cst_105 = arith.constant 0.000000e+00 : f32
    %311 = vector.broadcast %cst_105 : f32 to vector<128x128xf32>
    %312 = arith.subf %311, %310 : vector<128x128xf32>
    %313 = math.exp %312 : vector<128x128xf32>
    %cst_106 = arith.constant 39.8942299 : f32
    %314 = vector.broadcast %cst_106 : f32 to vector<128x128xf32>
    %315 = arith.mulf %314, %313 : vector<128x128xf32>
    %c0_107 = arith.constant 0 : index
    %316 = arith.index_cast %267 : i32 to index
    %c256_108 = arith.constant 256 : index
    %317 = vector.load %arg6[%c0_107, %316, %c256_108] : memref<1x512x512xf32, #tpu.memory_space<vmem>>, vector<1x128x128xf32>
    %318 = vector.shape_cast %317 : vector<1x128x128xf32> to vector<128x128xf32>
    %319 = vector.shape_cast %315 : vector<128x128xf32> to vector<1x128x128xf32>
    tpu.vector_store %arg6[%c0_107, %316, %c256_108], %319 {strides = array<i32>} : memref<1x512x512xf32, #tpu.memory_space<vmem>>, vector<1x128x128xf32>,
    %cst_109 = arith.constant dense<0.000000e+00> : vector<128x4xf32>
    %320 = tpu.matmul %315, %3, %cst_109 {dimension_numbers = #tpu.dot_dimension_numbers<[1], [1], [0], [0], [0, 0, 1, 0], [], []>} : vector<128x128xf32>, vector<4x128xf32>, vector<128x4xf32> -> vector<128x4xf32>
    %321 = arith.addf %306, %320 : vector<128x4xf32>
    %322 = vector.broadcast %28 : vector<1x128xf32> to vector<128x128xf32>
    %323 = vector.broadcast %274 : vector<128x1xf32> to vector<128x128xf32>
    %324 = arith.subf %322, %323 : vector<128x128xf32>
    %325 = arith.mulf %324, %324 : vector<128x128xf32>
    %cst_110 = arith.constant 0.000000e+00 : f32
    %326 = vector.broadcast %cst_110 : f32 to vector<128x128xf32>
    %327 = arith.subf %326, %325 : vector<128x128xf32>
    %328 = math.exp %327 : vector<128x128xf32>
    %cst_111 = arith.constant 39.8942299 : f32
    %329 = vector.broadcast %cst_111 : f32 to vector<128x128xf32>
    %330 = arith.mulf %329, %328 : vector<128x128xf32>
    %c0_112 = arith.constant 0 : index
    %331 = arith.index_cast %267 : i32 to index
    %c384_113 = arith.constant 384 : index
    %332 = vector.load %arg6[%c0_112, %331, %c384_113] : memref<1x512x512xf32, #tpu.memory_space<vmem>>, vector<1x128x128xf32>
    %333 = vector.shape_cast %332 : vector<1x128x128xf32> to vector<128x128xf32>
    %334 = vector.shape_cast %330 : vector<128x128xf32> to vector<1x128x128xf32>
    tpu.vector_store %arg6[%c0_112, %331, %c384_113], %334 {strides = array<i32>} : memref<1x512x512xf32, #tpu.memory_space<vmem>>, vector<1x128x128xf32>,
    %cst_114 = arith.constant dense<0.000000e+00> : vector<128x4xf32>
    %335 = tpu.matmul %330, %4, %cst_114 {dimension_numbers = #tpu.dot_dimension_numbers<[1], [1], [0], [0], [0, 0, 1, 0], [], []>} : vector<128x128xf32>, vector<4x128xf32>, vector<128x4xf32> -> vector<128x4xf32>
    %336 = arith.addf %321, %335 : vector<128x4xf32>
    %337 = arith.mulf %270, %336 : vector<128x4xf32>
    %cst_115 = arith.constant dense<0.000000e+00> : vector<128xf32>
    %338 = vector.multi_reduction <add>, %337, %cst_115 [1] : vector<128x4xf32> to vector<128xf32>
    %339 = vector.shape_cast %338 : vector<128xf32> to vector<128x1xf32>
    %340 = arith.mulf %339, %275 : vector<128x1xf32>
    %c0_116 = arith.constant 0 : index
    %341 = arith.index_cast %267 : i32 to index
    %c0_117 = arith.constant 0 : index
    %342 = vector.load %arg5[%c0_116, %341, %c0_117] : memref<1x512x1xf32, #tpu.memory_space<vmem>>, vector<1x128x1xf32>
    %343 = vector.shape_cast %342 : vector<1x128x1xf32> to vector<128x1xf32>
    %344 = vector.shape_cast %340 : vector<128x1xf32> to vector<1x128x1xf32>
    tpu.vector_store %arg5[%c0_116, %341, %c0_117], %344 {strides = array<i32>} : memref<1x512x1xf32, #tpu.memory_space<vmem>>, vector<1x128x1xf32>,
    %c4_i32 = arith.constant 4 : i32
    return
  }
  func.func @transform_0(%arg0: i32, %arg1: i32) -> (i32, i32) {
    %c0_i32 = arith.constant 0 : i32
    %c0_i32_0 = arith.constant 0 : i32
    %c0_i32_1 = arith.constant 0 : i32
    return %c0_i32, %c0_i32_0 : i32, i32
  }
  func.func @transform_1(%arg0: i32, %arg1: i32) -> (i32, i32, i32) {
    %c0_i32 = arith.constant 0 : i32
    %c0_i32_0 = arith.constant 0 : i32
    return %arg0, %arg1, %c0_i32 : i32, i32, i32
  }
  func.func @transform_2(%arg0: i32, %arg1: i32) -> (i32, i32, i32) {
    %c0_i32 = arith.constant 0 : i32
    %c0_i32_0 = arith.constant 0 : i32
    return %arg0, %arg1, %c0_i32 : i32, i32, i32
  }
  func.func @transform_3(%arg0: i32, %arg1: i32) -> (i32, i32, i32) {
    %c0_i32 = arith.constant 0 : i32
    %c0_i32_0 = arith.constant 0 : i32
    return %arg0, %arg1, %c0_i32 : i32, i32, i32
  }
  func.func @transform_4(%arg0: i32, %arg1: i32) -> (i32, i32, i32) {
    %c0_i32 = arith.constant 0 : i32
    %c0_i32_0 = arith.constant 0 : i32
    return %arg0, %arg1, %c0_i32 : i32, i32, i32
  }
}

</mosaic_0001>

<llo_original>
// kernel: wavetable_synth_forward.1
$region0: #{wavetable_synth_forward.1}
  #allocation0 [shape = 'u32[]', space=smem, size = 0x4, offset = 0x4, fixed_abs, tag = 'smem constant byte address 0x4 - core index']
  #allocation1 [shape = 'u32[144,128]{1,0:T(1,128)}', space=vmem, size = 0x12000, scoped, tag = 'internal scratch']
  %s0 = inlined_call_operand.vmem [shape: f32[4,512], index: 0, kind: input, shape index: {}]
  %s1 = inlined_call_operand.vmem [shape: f32[2,512,4], index: 1, kind: input, shape index: {}]
  %s2 = inlined_call_operand.vmem [shape: f32[2,512,2], index: 2, kind: input, shape index: {}]
  %s3 = inlined_call_operand.vmem [shape: f32[2,512,1], index: 3, kind: output, shape index: {0}]
  %s4 = inlined_call_operand.hbm [shape: f32[2,512,512], index: 4, kind: output, shape index: {1}]
  %5 = xla_tuple %s3, %s4
  %s6 = sld [smem:[#allocation0]]
  $region53: #{wavetable_synth_forward.1} parent=0
    _
  %s8 = ssub.s32 1, %s6
  %s9 = scalar_select 0, %s8, %s6
  $region1: #{wavetable_synth_forward.1} parent=0
    #allocation2 [shape = 'u8[2097152]{0}', space=vmem, size = 0x200000, scoped, tag = 'output window, operand 1']
    #allocation3 [shape = 's32[2]{0}', space=sflag, size = 0x8, scoped, tag = 'scoped memory for wavetable_synth_forward.1']
    %10 = vsyncpa [#allocation3], 0
    %s11 = scalar_lea.sflag [#allocation3], 1
    %12 = vsyncpa %s11, 0
    loop: start=0, step=1, limit=4
    $region2: #{wavetable_synth_forward.1} parent=1 // loop_pre_header
      _
    $region3: #{wavetable_synth_forward.1} parent=1 // loop_header
      %s14 = sphi 0, %s18
      %p15 = scmp.ge.s32.totalorder %s14, 4
      %s21 = sphi 0, %s33
      %s22 = sphi 0, %s29
      %s23 = sphi 0, %s21
      %s24 = sphi 0, %s22
      %s25 = sphi 0, %s23
      %s26 = sphi 0, %s24
      %s34 = sphi 0, %s34
      %s36 = sphi 0, %s34
      %s37 = sphi 0, %s36
      %s51 = sphi 0, %s37
      %s59 = sphi 0, %s61
      %s62 = sphi 0, %s59
      %s63 = sphi 0, %s62
      %s79 = sphi 0, %s63
      %s87 = sphi 0, %s89
      %s90 = sphi 0, %s87
      %s91 = sphi 0, %s90
      %s107 = sphi 0, %s91
      %s115 = sphi 0, %s117
      %s118 = sphi 0, %s115
      %s119 = sphi 0, %s118
      %s135 = sphi 0, %s119
      %s143 = sphi 0, %s145
      %s146 = sphi 0, %s143
      %s147 = sphi 0, %s146
      %s163 = sphi 0, %s147
    $region4: #{wavetable_synth_forward.1} parent=1 // loop_header_branch
      %17 = sbr.rel (%p15) target = $region8
    $region5: #{wavetable_synth_forward.1} parent=1 // loop_body
      %s19 = ssub.s32 %s14, 1
      %s20 = ssub.s32 %s14, 2
      %s27 = sadd.s32 1, %s22
      %p28 = scmp.ge.s32.totalorder %s27, 1
      %s29 = scalar_select %p28, 0, %s27
      %s30 = sadd.s32 1, %s21
      %s31 = scalar_select %p28, %s30, %s21
      %p32 = scmp.ge.s32.totalorder %s31, 2
      %s33 = scalar_select %p32, 0, %s31
      %s35 = sadd.s32 %s34, 1
      %p38 = scmp.eq.s32.totalorder %s14, 1
      %p39 = scmp.ne.s32.totalorder %s34, %s36
      %p40 = scmp.eq.s32.totalorder %s14, 0
      %p41 = por %p39, %p40
      %p42 = scmp.ne.s32.totalorder %s34, %s36
      %p43 = scmp.eq.s32.totalorder %s19, 1
      %p44 = por %p42, %p43
      %p45 = scmp.ne.s32.totalorder %s36, %s37
      %p46 = scmp.eq.s32.totalorder %s19, 0
      %p47 = por %p45, %p46
      %p48 = scmp.ne.s32.totalorder %s36, %s37
      %p49 = scmp.eq.s32.totalorder %s20, 1
      %p50 = por %p48, %p49
      %p52 = scmp.ne.s32.totalorder %s37, %s51
      %p53 = scmp.eq.s32.totalorder %s20, 0
      %p54 = por %p52, %p53
      %s55 = ssub.s32 %s21, %s33
      %s56 = ssub.s32 %s22, %s29
      %s57 = sor.u32 %s55, %s56
      %p58 = scmp.eq.s32.totalorder %s57, 0
      %s60 = sadd.s32 %s59, 1
      %s61 = scalar_select %p58, %s59, %s60
      %p64 = pneg %p58
      %p65 = scmp.eq.s32.totalorder %s14, 1
      %p66 = por %p64, %p65
      %p67 = scmp.ne.s32.totalorder %s59, %s62
      %p68 = scmp.eq.s32.totalorder %s14, 0
      %p69 = por %p67, %p68
      %p70 = scmp.ne.s32.totalorder %s59, %s62
      %p71 = scmp.eq.s32.totalorder %s19, 1
      %p72 = por %p70, %p71
      %p73 = scmp.ne.s32.totalorder %s62, %s63
      %p74 = scmp.eq.s32.totalorder %s19, 0
      %p75 = por %p73, %p74
      %p76 = scmp.ne.s32.totalorder %s62, %s63
      %p77 = scmp.eq.s32.totalorder %s20, 1
      %p78 = por %p76, %p77
      %p80 = scmp.ne.s32.totalorder %s63, %s79
      %p81 = scmp.eq.s32.totalorder %s20, 0
      %p82 = por %p80, %p81
      %s83 = ssub.s32 %s21, %s33
      %s84 = ssub.s32 %s22, %s29
      %s85 = sor.u32 %s83, %s84
      %p86 = scmp.eq.s32.totalorder %s85, 0
      %s88 = sadd.s32 %s87, 1
      %s89 = scalar_select %p86, %s87, %s88
      %p92 = pneg %p86
      %p93 = scmp.eq.s32.totalorder %s14, 1
      %p94 = por %p92, %p93
      %p95 = scmp.ne.s32.totalorder %s87, %s90
      %p96 = scmp.eq.s32.totalorder %s14, 0
      %p97 = por %p95, %p96
      %p98 = scmp.ne.s32.totalorder %s87, %s90
      %p99 = scmp.eq.s32.totalorder %s19, 1
      %p100 = por %p98, %p99
      %p101 = scmp.ne.s32.totalorder %s90, %s91
      %p102 = scmp.eq.s32.totalorder %s19, 0
      %p103 = por %p101, %p102
      %p104 = scmp.ne.s32.totalorder %s90, %s91
      %p105 = scmp.eq.s32.totalorder %s20, 1
      %p106 = por %p104, %p105
      %p108 = scmp.ne.s32.totalorder %s91, %s107
      %p109 = scmp.eq.s32.totalorder %s20, 0
      %p110 = por %p108, %p109
      %s111 = ssub.s32 %s21, %s33
      %s112 = ssub.s32 %s22, %s29
      %s113 = sor.u32 %s111, %s112
      %p114 = scmp.eq.s32.totalorder %s113, 0
      %s116 = sadd.s32 %s115, 1
      %s117 = scalar_select %p114, %s115, %s116
      %p120 = pneg %p114
      %p121 = scmp.eq.s32.totalorder %s14, 1
      %p122 = por %p120, %p121
      %p123 = scmp.ne.s32.totalorder %s115, %s118
      %p124 = scmp.eq.s32.totalorder %s14, 0
      %p125 = por %p123, %p124
      %p126 = scmp.ne.s32.totalorder %s115, %s118
      %p127 = scmp.eq.s32.totalorder %s19, 1
      %p128 = por %p126, %p127
      %p129 = scmp.ne.s32.totalorder %s118, %s119
      %p130 = scmp.eq.s32.totalorder %s19, 0
      %p131 = por %p129, %p130
      %p132 = scmp.ne.s32.totalorder %s118, %s119
      %p133 = scmp.eq.s32.totalorder %s20, 1
      %p134 = por %p132, %p133
      %p136 = scmp.ne.s32.totalorder %s119, %s135
      %p137 = scmp.eq.s32.totalorder %s20, 0
      %p138 = por %p136, %p137
      %s139 = ssub.s32 %s21, %s33
      %s140 = ssub.s32 %s22, %s29
      %s141 = sor.u32 %s139, %s140
      %p142 = scmp.eq.s32.totalorder %s141, 0
      %s144 = sadd.s32 %s143, 1
      %s145 = scalar_select %p142, %s143, %s144
      %p148 = pneg %p142
      %p149 = scmp.eq.s32.totalorder %s14, 1
      %p150 = por %p148, %p149
      %p151 = scmp.ne.s32.totalorder %s143, %s146
      %p152 = scmp.eq.s32.totalorder %s14, 0
      %p153 = por %p151, %p152
      %p154 = scmp.ne.s32.totalorder %s143, %s146
      %p155 = scmp.eq.s32.totalorder %s19, 1
      %p156 = por %p154, %p155
      %p157 = scmp.ne.s32.totalorder %s146, %s147
      %p158 = scmp.eq.s32.totalorder %s19, 0
      %p159 = por %p157, %p158
      %p160 = scmp.ne.s32.totalorder %s146, %s147
      %p161 = scmp.eq.s32.totalorder %s20, 1
      %p162 = por %p160, %p161
      %p164 = scmp.ne.s32.totalorder %s147, %s163
      %p165 = scmp.eq.s32.totalorder %s20, 0
      %p166 = por %p164, %p165
      %p167 = scmp.le.s32.totalorder 1, %s14
      %p168 = scmp.lt.s32.totalorder %s14, 3
      %p169 = pnand %p167, %p168
      %p170 = pneg %p169
      // Predicated region
      $region9: #{wavetable_synth_forward.1} parent=5 // pred_check
        _
      $region10: #{wavetable_synth_forward.1} parent=5 // pred_check_branch
        %172 = sbr.rel (%p169) target = $region12
      $region11: #{wavetable_synth_forward.1} parent=5 // pred_region
        %s173 = ssub.s32 %s14, 1
        // Predicated region
        $region13: #{wavetable_synth_forward.1} parent=11 // pred_check
          %p174 = pneg %p47
        $region14: #{wavetable_synth_forward.1} parent=11 // pred_check_branch
          %176 = sbr.rel (%p174) target = $region16
        $region15: #{wavetable_synth_forward.1} parent=11 // pred_region
          _
        $region16: #{wavetable_synth_forward.1} parent=11 // pred_fallthru
          _
      $region12: #{wavetable_synth_forward.1} parent=5 // pred_fallthru
        _
      %p177 = scmp.lt.s32.totalorder %s14, 2
      // Predicated region
      $region17: #{wavetable_synth_forward.1} parent=5 // pred_check
        %p178 = pneg %p177
      $region18: #{wavetable_synth_forward.1} parent=5 // pred_check_branch
        %180 = sbr.rel (%p178) target = $region20
      $region19: #{wavetable_synth_forward.1} parent=5 // pred_region
        // Predicated region
        $region21: #{wavetable_synth_forward.1} parent=19 // pred_check
          %p181 = pneg %p69
        $region22: #{wavetable_synth_forward.1} parent=19 // pred_check_branch
          %183 = sbr.rel (%p181) target = $region24
        $region23: #{wavetable_synth_forward.1} parent=19 // pred_region
          %s184 = smul.u32 64, %s22
          %p185 = scmp.lt.s32.totalorder %s21, 1
          %s186 = scalar_select %p185, %s21, 1
          %p187 = scmp.lt.s32.totalorder %s184, 63
          %s188 = scalar_select %p187, %s184, 63
          %s189 = smul.addr %s186, 64
          %s190 = sadd.s32 %s188, %s189
          %s191 = smul.addr %s190, 8
          %s192 = scalar_lea.vmem %s1, %s191
          %s193 = smul.u32 64, %s22
        $region24: #{wavetable_synth_forward.1} parent=19 // pred_fallthru
          _
        // Predicated region
        $region25: #{wavetable_synth_forward.1} parent=19 // pred_check
          %p194 = pneg %p97
        $region26: #{wavetable_synth_forward.1} parent=19 // pred_check_branch
          %196 = sbr.rel (%p194) target = $region28
        $region27: #{wavetable_synth_forward.1} parent=19 // pred_region
          %s197 = smul.u32 64, %s22
          %p198 = scmp.lt.s32.totalorder %s21, 1
          %s199 = scalar_select %p198, %s21, 1
          %p200 = scmp.lt.s32.totalorder %s197, 63
          %s201 = scalar_select %p200, %s197, 63
          %s202 = smul.addr %s199, 64
          %s203 = sadd.s32 %s201, %s202
          %s204 = smul.addr %s203, 8
          %s205 = scalar_lea.vmem %s2, %s204
          %s206 = smul.u32 64, %s22
        $region28: #{wavetable_synth_forward.1} parent=19 // pred_fallthru
          _
      $region20: #{wavetable_synth_forward.1} parent=5 // pred_fallthru
        _
      %p207 = scmp.le.s32.totalorder 1, %s14
      %p208 = scmp.lt.s32.totalorder %s14, 3
      %p209 = pnand %p207, %p208
      %p210 = pneg %p209
      // Predicated region
      $region29: #{wavetable_synth_forward.1} parent=5 // pred_check
        _
      $region30: #{wavetable_synth_forward.1} parent=5 // pred_check_branch
        %212 = sbr.rel (%p209) target = $region32
      $region31: #{wavetable_synth_forward.1} parent=5 // pred_region
        %s213 = ssub.s32 %s14, 1
        %p214 = pneg %p47
        %p215 = pneg %p44
        %s216 = smul.u32 64, %s24
        %p217 = scmp.lt.s32.totalorder %s23, 1
        %s218 = scalar_select %p217, %s23, 1
        %p219 = scmp.lt.s32.totalorder %s216, 63
        %s220 = scalar_select %p219, %s216, 63
        %s221 = smul.addr %s218, 64
        %s222 = sadd.s32 %s220, %s221
        %s223 = smul.addr %s222, 8
        %s224 = scalar_lea.vmem %s1, %s223
        %p225 = pneg %p75
        %p226 = pneg %p72
        %s227 = smul.u32 64, %s24
        %p228 = scmp.lt.s32.totalorder %s23, 1
        %s229 = scalar_select %p228, %s23, 1
        %p230 = scmp.lt.s32.totalorder %s227, 63
        %s231 = scalar_select %p230, %s227, 63
        %s232 = smul.addr %s229, 64
        %s233 = sadd.s32 %s231, %s232
        %s234 = smul.addr %s233, 8
        %s235 = scalar_lea.vmem %s2, %s234
        %p236 = pneg %p103
        %p237 = pneg %p100
        %p238 = pneg %p131
        %p239 = pneg %p128
        %s240 = smul.u32 64, %s24
        %p241 = scmp.lt.s32.totalorder %s23, 1
        %s242 = scalar_select %p241, %s23, 1
        %p243 = scmp.lt.s32.totalorder %s240, 63
        %s244 = scalar_select %p243, %s240, 63
        %s245 = smul.addr %s242, 64
        %s246 = sadd.s32 %s244, %s245
        %s247 = smul.addr %s246, 8
        %s248 = scalar_lea.vmem %s3, %s247
        %p249 = pneg %p159
        %p250 = pneg %p156
        %s251 = sand.u32 %s146, 1
        %s252 = scalar_lea.sflag [#allocation3], %s251
        %s253 = sand.u32 %s146, 1
        %s254 = smul.addr %s253, 2048
        %s255 = scalar_lea.vmem [#allocation2], %s254
        %s256 = smul.u32 64, %s24
        %p257 = scmp.lt.s32.totalorder %s23, 1
        %s258 = scalar_select %p257, %s23, 1
        %p259 = scmp.lt.s32.totalorder %s256, 63
        %s260 = scalar_select %p259, %s256, 63
        %s261 = smul.addr %s258, 64
        %s262 = sadd.s32 %s260, %s261
        %s263 = smul.addr %s262, 8
        %s264 = scalar_lea.vmem %s1, %s263
        %s265 = smul.u32 64, %s24
        %s266 = smul.u32 64, %s24
        %p267 = scmp.lt.s32.totalorder %s23, 1
        %s268 = scalar_select %p267, %s23, 1
        %p269 = scmp.lt.s32.totalorder %s266, 63
        %s270 = scalar_select %p269, %s266, 63
        %s271 = smul.addr %s268, 64
        %s272 = sadd.s32 %s270, %s271
        %s273 = smul.addr %s272, 8
        %s274 = scalar_lea.vmem %s2, %s273
        %s275 = smul.u32 64, %s24
        %s276 = smul.u32 64, %s24
        %p277 = scmp.lt.s32.totalorder %s23, 1
        %s278 = scalar_select %p277, %s23, 1
        %p279 = scmp.lt.s32.totalorder %s276, 63
        %s280 = scalar_select %p279, %s276, 63
        %s281 = smul.addr %s278, 64
        %s282 = sadd.s32 %s280, %s281
        %s283 = smul.addr %s282, 8
        %s284 = scalar_lea.vmem %s3, %s283
        %s285 = smul.u32 64, %s24
        %s286 = smul.u32 64, %s24
        %v287 = vld [vmem:[%s0] sm:$0xff]
        %v288 = vld [vmem:[%s0 + $0x8] sm:$0xff]
        %v289 = vlaneseq
        %v290 = vand.u32 %v289, 127
        %v291 = vcvt.s32.f32 %v290
        %v292 = vmul.f32 %v291, 0.13837706
        %v293 = vadd.s32 %v290, 128
        %v294 = vcvt.s32.f32 %v293
        %v295 = vmul.f32 %v294, 0.13837706
        %v296 = vadd.s32 %v290, 256
        %v297 = vcvt.s32.f32 %v296
        %v298 = vmul.f32 %v297, 0.13837706
        %v299 = vadd.s32 %v290, 384
        %v300 = vcvt.s32.f32 %v299
        %v301 = vmul.f32 %v300, 0.13837706
        %v302 = vld [vmem:[%s264] sm:$0xff]
        %v303 = vld [vmem:[%s264 + $0x8] sm:$0xff]
        %v304 = vld [vmem:[%s264 + $0x10] sm:$0xff]
        %v305 = vld [vmem:[%s264 + $0x18] sm:$0xff]
        %v306 = vld [vmem:[%s264 + $0x20] sm:$0xff]
        %v307 = vld [vmem:[%s264 + $0x28] sm:$0xff]
        %v308 = vld [vmem:[%s264 + $0x30] sm:$0xff]
        %v309 = vld [vmem:[%s264 + $0x38] sm:$0xff]
        %v310 = vld [vmem:[%s264 + $0x40] sm:$0xff]
        %v311 = vld [vmem:[%s264 + $0x48] sm:$0xff]
        %v312 = vld [vmem:[%s264 + $0x50] sm:$0xff]
        %v313 = vld [vmem:[%s264 + $0x58] sm:$0xff]
        %v314 = vld [vmem:[%s264 + $0x60] sm:$0xff]
        %v315 = vld [vmem:[%s264 + $0x68] sm:$0xff]
        %v316 = vld [vmem:[%s264 + $0x70] sm:$0xff]
        %v317 = vld [vmem:[%s264 + $0x78] sm:$0xff]
        %v318 = vld [vmem:[%s274] sm:$0xff]
        %v319 = vld [vmem:[%s274 + $0x8] sm:$0xff]
        %v320 = vld [vmem:[%s274 + $0x10] sm:$0xff]
        %v321 = vld [vmem:[%s274 + $0x18] sm:$0xff]
        %v322 = vld [vmem:[%s274 + $0x20] sm:$0xff]
        %v323 = vld [vmem:[%s274 + $0x28] sm:$0xff]
        %v324 = vld [vmem:[%s274 + $0x30] sm:$0xff]
        %v325 = vld [vmem:[%s274 + $0x38] sm:$0xff]
        %v326 = vld [vmem:[%s274 + $0x40] sm:$0xff]
        %v327 = vld [vmem:[%s274 + $0x48] sm:$0xff]
        %v328 = vld [vmem:[%s274 + $0x50] sm:$0xff]
        %v329 = vld [vmem:[%s274 + $0x58] sm:$0xff]
        %v330 = vld [vmem:[%s274 + $0x60] sm:$0xff]
        %v331 = vld [vmem:[%s274 + $0x68] sm:$0xff]
        %v332 = vld [vmem:[%s274 + $0x70] sm:$0xff]
        %v333 = vld [vmem:[%s274 + $0x78] sm:$0xff]
        %335 = vset.pattern.permute.xlu0 0
        %336 = vperm.xlu0 %335, %v318
        %v337 = vpop.permute.xlu0 %336
        %340 = vset.pattern.permute.xlu0 0
        %341 = vperm.xlu0 %340, %v319
        %v342 = vpop.permute.xlu0 %341
        %345 = vset.pattern.permute.xlu0 0
        %346 = vperm.xlu0 %345, %v320
        %v347 = vpop.permute.xlu0 %346
        %350 = vset.pattern.permute.xlu0 0
        %351 = vperm.xlu0 %350, %v321
        %v352 = vpop.permute.xlu0 %351
        %355 = vset.pattern.permute.xlu0 0
        %356 = vperm.xlu0 %355, %v322
        %v357 = vpop.permute.xlu0 %356
        %360 = vset.pattern.permute.xlu0 0
        %361 = vperm.xlu0 %360, %v323
        %v362 = vpop.permute.xlu0 %361
        %365 = vset.pattern.permute.xlu0 0
        %366 = vperm.xlu0 %365, %v324
        %v367 = vpop.permute.xlu0 %366
        %370 = vset.pattern.permute.xlu0 0
        %371 = vperm.xlu0 %370, %v325
        %v372 = vpop.permute.xlu0 %371
        %375 = vset.pattern.permute.xlu0 0
        %376 = vperm.xlu0 %375, %v326
        %v377 = vpop.permute.xlu0 %376
        %380 = vset.pattern.permute.xlu0 0
        %381 = vperm.xlu0 %380, %v327
        %v382 = vpop.permute.xlu0 %381
        %385 = vset.pattern.permute.xlu0 0
        %386 = vperm.xlu0 %385, %v328
        %v387 = vpop.permute.xlu0 %386
        %390 = vset.pattern.permute.xlu0 0
        %391 = vperm.xlu0 %390, %v329
        %v392 = vpop.permute.xlu0 %391
        %395 = vset.pattern.permute.xlu0 0
        %396 = vperm.xlu0 %395, %v330
        %v397 = vpop.permute.xlu0 %396
        %400 = vset.pattern.permute.xlu0 0
        %401 = vperm.xlu0 %400, %v331
        %v402 = vpop.permute.xlu0 %401
        %405 = vset.pattern.permute.xlu0 0
        %406 = vperm.xlu0 %405, %v332
        %v407 = vpop.permute.xlu0 %406
        %410 = vset.pattern.permute.xlu0 0
        %411 = vperm.xlu0 %410, %v333
        %v412 = vpop.permute.xlu0 %411
        %v414 = vsub.f32 %v292, %v337
        %v415 = vsub.f32 %v292, %v342
        %v416 = vsub.f32 %v292, %v347
        %v417 = vsub.f32 %v292, %v352
        %v418 = vsub.f32 %v292, %v357
        %v419 = vsub.f32 %v292, %v362
        %v420 = vsub.f32 %v292, %v367
        %v421 = vsub.f32 %v292, %v372
        %v422 = vsub.f32 %v292, %v377
        %v423 = vsub.f32 %v292, %v382
        %v424 = vsub.f32 %v292, %v387
        %v425 = vsub.f32 %v292, %v392
        %v426 = vsub.f32 %v292, %v397
        %v427 = vsub.f32 %v292, %v402
        %v428 = vsub.f32 %v292, %v407
        %v429 = vsub.f32 %v292, %v412
        %v430 = vmul.f32 %v414, %v414
        %v431 = vmul.f32 %v415, %v415
        %v432 = vmul.f32 %v416, %v416
        %v433 = vmul.f32 %v417, %v417
        %v434 = vmul.f32 %v418, %v418
        %v435 = vmul.f32 %v419, %v419
        %v436 = vmul.f32 %v420, %v420
        %v437 = vmul.f32 %v421, %v421
        %v438 = vmul.f32 %v422, %v422
        %v439 = vmul.f32 %v423, %v423
        %v440 = vmul.f32 %v424, %v424
        %v441 = vmul.f32 %v425, %v425
        %v442 = vmul.f32 %v426, %v426
        %v443 = vmul.f32 %v427, %v427
        %v444 = vmul.f32 %v428, %v428
        %v445 = vmul.f32 %v429, %v429
        %v446 = vsub.f32 0.0, %v430
        %v447 = vsub.f32 0.0, %v431
        %v448 = vsub.f32 0.0, %v432
        %v449 = vsub.f32 0.0, %v433
        %v450 = vsub.f32 0.0, %v434
        %v451 = vsub.f32 0.0, %v435
        %v452 = vsub.f32 0.0, %v436
        %v453 = vsub.f32 0.0, %v437
        %v454 = vsub.f32 0.0, %v438
        %v455 = vsub.f32 0.0, %v439
        %v456 = vsub.f32 0.0, %v440
        %v457 = vsub.f32 0.0, %v441
        %v458 = vsub.f32 0.0, %v442
        %v459 = vsub.f32 0.0, %v443
        %v460 = vsub.f32 0.0, %v444
        %v461 = vsub.f32 0.0, %v445
        %v462 = vmul.f32 %v446, 1.442695
        %v463 = vpow.pop %v462
        %v464 = vmul.f32 %v447, 1.442695
        %v465 = vpow.pop %v464
        %v466 = vmul.f32 %v448, 1.442695
        %v467 = vpow.pop %v466
        %v468 = vmul.f32 %v449, 1.442695
        %v469 = vpow.pop %v468
        %v470 = vmul.f32 %v450, 1.442695
        %v471 = vpow.pop %v470
        %v472 = vmul.f32 %v451, 1.442695
        %v473 = vpow.pop %v472
        %v474 = vmul.f32 %v452, 1.442695
        %v475 = vpow.pop %v474
        %v476 = vmul.f32 %v453, 1.442695
        %v477 = vpow.pop %v476
        %v478 = vmul.f32 %v454, 1.442695
        %v479 = vpow.pop %v478
        %v480 = vmul.f32 %v455, 1.442695
        %v481 = vpow.pop %v480
        %v482 = vmul.f32 %v456, 1.442695
        %v483 = vpow.pop %v482
        %v484 = vmul.f32 %v457, 1.442695
        %v485 = vpow.pop %v484
        %v486 = vmul.f32 %v458, 1.442695
        %v487 = vpow.pop %v486
        %v488 = vmul.f32 %v459, 1.442695
        %v489 = vpow.pop %v488
        %v490 = vmul.f32 %v460, 1.442695
        %v491 = vpow.pop %v490
        %v492 = vmul.f32 %v461, 1.442695
        %v493 = vpow.pop %v492
        %v494 = vmul.f32 %v463, 39.89423
        %v495 = vmul.f32 %v465, 39.89423
        %v496 = vmul.f32 %v467, 39.89423
        %v497 = vmul.f32 %v469, 39.89423
        %v498 = vmul.f32 %v471, 39.89423
        %v499 = vmul.f32 %v473, 39.89423
        %v500 = vmul.f32 %v475, 39.89423
        %v501 = vmul.f32 %v477, 39.89423
        %v502 = vmul.f32 %v479, 39.89423
        %v503 = vmul.f32 %v481, 39.89423
        %v504 = vmul.f32 %v483, 39.89423
        %v505 = vmul.f32 %v485, 39.89423
        %v506 = vmul.f32 %v487, 39.89423
        %v507 = vmul.f32 %v489, 39.89423
        %v508 = vmul.f32 %v491, 39.89423
        %v509 = vmul.f32 %v493, 39.89423
        %s510 = smul.u32 0, 4
        %s511 = smul.addr %s510, 8
        %s512 = scalar_lea.vmem %s255, %s511 [#allocation2]
        %513 = vst [vmem:[%s512] sm:$0xff] %v494
        %514 = vst [vmem:[%s512 + $0x20] sm:$0xff] %v495
        %515 = vst [vmem:[%s512 + $0x40] sm:$0xff] %v496
        %516 = vst [vmem:[%s512 + $0x60] sm:$0xff] %v497
        %517 = vst [vmem:[%s512 + $0x80] sm:$0xff] %v498
        %518 = vst [vmem:[%s512 + $0xa0] sm:$0xff] %v499
        %519 = vst [vmem:[%s512 + $0xc0] sm:$0xff] %v500
        %520 = vst [vmem:[%s512 + $0xe0] sm:$0xff] %v501
        %521 = vst [vmem:[%s512 + $0x100] sm:$0xff] %v502
        %522 = vst [vmem:[%s512 + $0x120] sm:$0xff] %v503
        %523 = vst [vmem:[%s512 + $0x140] sm:$0xff] %v504
        %524 = vst [vmem:[%s512 + $0x160] sm:$0xff] %v505
        %525 = vst [vmem:[%s512 + $0x180] sm:$0xff] %v506
        %526 = vst [vmem:[%s512 + $0x1a0] sm:$0xff] %v507
        %527 = vst [vmem:[%s512 + $0x1c0] sm:$0xff] %v508
        %528 = vst [vmem:[%s512 + $0x1e0] sm:$0xff] %v509
        %v529 = vsub.f32 %v295, %v337
        %v530 = vsub.f32 %v295, %v342
        %v531 = vsub.f32 %v295, %v347
        %v532 = vsub.f32 %v295, %v352
        %v533 = vsub.f32 %v295, %v357
        %v534 = vsub.f32 %v295, %v362
        %v535 = vsub.f32 %v295, %v367
        %v536 = vsub.f32 %v295, %v372
        %v537 = vsub.f32 %v295, %v377
        %v538 = vsub.f32 %v295, %v382
        %v539 = vsub.f32 %v295, %v387
        %v540 = vsub.f32 %v295, %v392
        %v541 = vsub.f32 %v295, %v397
        %v542 = vsub.f32 %v295, %v402
        %v543 = vsub.f32 %v295, %v407
        %v544 = vsub.f32 %v295, %v412
        %v545 = vmul.f32 %v529, %v529
        %v546 = vmul.f32 %v530, %v530
        %v547 = vmul.f32 %v531, %v531
        %v548 = vmul.f32 %v532, %v532
        %v549 = vmul.f32 %v533, %v533
        %v550 = vmul.f32 %v534, %v534
        %v551 = vmul.f32 %v535, %v535
        %v552 = vmul.f32 %v536, %v536
        %v553 = vmul.f32 %v537, %v537
        %v554 = vmul.f32 %v538, %v538
        %v555 = vmul.f32 %v539, %v539
        %v556 = vmul.f32 %v540, %v540
        %v557 = vmul.f32 %v541, %v541
        %v558 = vmul.f32 %v542, %v542
        %v559 = vmul.f32 %v543, %v543
        %v560 = vmul.f32 %v544, %v544
        %v561 = vsub.f32 0.0, %v545
        %v562 = vsub.f32 0.0, %v546
        %v563 = vsub.f32 0.0, %v547
        %v564 = vsub.f32 0.0, %v548
        %v565 = vsub.f32 0.0, %v549
        %v566 = vsub.f32 0.0, %v550
        %v567 = vsub.f32 0.0, %v551
        %v568 = vsub.f32 0.0, %v552
        %v569 = vsub.f32 0.0, %v553
        %v570 = vsub.f32 0.0, %v554
        %v571 = vsub.f32 0.0, %v555
        %v572 = vsub.f32 0.0, %v556
        %v573 = vsub.f32 0.0, %v557
        %v574 = vsub.f32 0.0, %v558
        %v575 = vsub.f32 0.0, %v559
        %v576 = vsub.f32 0.0, %v560
        %v577 = vmul.f32 %v561, 1.442695
        %v578 = vpow.pop %v577
        %v579 = vmul.f32 %v562, 1.442695
        %v580 = vpow.pop %v579
        %v581 = vmul.f32 %v563, 1.442695
        %v582 = vpow.pop %v581
        %v583 = vmul.f32 %v564, 1.442695
        %v584 = vpow.pop %v583
        %v585 = vmul.f32 %v565, 1.442695
        %v586 = vpow.pop %v585
        %v587 = vmul.f32 %v566, 1.442695
        %v588 = vpow.pop %v587
        %v589 = vmul.f32 %v567, 1.442695
        %v590 = vpow.pop %v589
        %v591 = vmul.f32 %v568, 1.442695
        %v592 = vpow.pop %v591
        %v593 = vmul.f32 %v569, 1.442695
        %v594 = vpow.pop %v593
        %v595 = vmul.f32 %v570, 1.442695
        %v596 = vpow.pop %v595
        %v597 = vmul.f32 %v571, 1.442695
        %v598 = vpow.pop %v597
        %v599 = vmul.f32 %v572, 1.442695
        %v600 = vpow.pop %v599
        %v601 = vmul.f32 %v573, 1.442695
        %v602 = vpow.pop %v601
        %v603 = vmul.f32 %v574, 1.442695
        %v604 = vpow.pop %v603
        %v605 = vmul.f32 %v575, 1.442695
        %v606 = vpow.pop %v605
        %v607 = vmul.f32 %v576, 1.442695
        %v608 = vpow.pop %v607
        %v609 = vmul.f32 %v578, 39.89423
        %v610 = vmul.f32 %v580, 39.89423
        %v611 = vmul.f32 %v582, 39.89423
        %v612 = vmul.f32 %v584, 39.89423
        %v613 = vmul.f32 %v586, 39.89423
        %v614 = vmul.f32 %v588, 39.89423
        %v615 = vmul.f32 %v590, 39.89423
        %v616 = vmul.f32 %v592, 39.89423
        %v617 = vmul.f32 %v594, 39.89423
        %v618 = vmul.f32 %v596, 39.89423
        %v619 = vmul.f32 %v598, 39.89423
        %v620 = vmul.f32 %v600, 39.89423
        %v621 = vmul.f32 %v602, 39.89423
        %v622 = vmul.f32 %v604, 39.89423
        %v623 = vmul.f32 %v606, 39.89423
        %v624 = vmul.f32 %v608, 39.89423
        %625 = vst [vmem:[%s512 + $0x8] sm:$0xff] %v609
        %626 = vst [vmem:[%s512 + $0x28] sm:$0xff] %v610
        %627 = vst [vmem:[%s512 + $0x48] sm:$0xff] %v611
        %628 = vst [vmem:[%s512 + $0x68] sm:$0xff] %v612
        %629 = vst [vmem:[%s512 + $0x88] sm:$0xff] %v613
        %630 = vst [vmem:[%s512 + $0xa8] sm:$0xff] %v614
        %631 = vst [vmem:[%s512 + $0xc8] sm:$0xff] %v615
        %632 = vst [vmem:[%s512 + $0xe8] sm:$0xff] %v616
        %633 = vst [vmem:[%s512 + $0x108] sm:$0xff] %v617
        %634 = vst [vmem:[%s512 + $0x128] sm:$0xff] %v618
        %635 = vst [vmem:[%s512 + $0x148] sm:$0xff] %v619
        %636 = vst [vmem:[%s512 + $0x168] sm:$0xff] %v620
        %637 = vst [vmem:[%s512 + $0x188] sm:$0xff] %v621
        %638 = vst [vmem:[%s512 + $0x1a8] sm:$0xff] %v622
        %639 = vst [vmem:[%s512 + $0x1c8] sm:$0xff] %v623
        %640 = vst [vmem:[%s512 + $0x1e8] sm:$0xff] %v624
        %v642 = vcombine.high %v287, %v287
        %644 = vmatprep.subr.mxu0 0.0
        %645 = vmatpush1.xpose.msra.mxu0 0.0
        %646 = vmatprep.subr.mxu0 0.0
        %647 = vmatpush1.xpose.msra.mxu0 0.0
        %648 = vmatprep.subr.mxu0 0.0
        %649 = vmatpush1.xpose.msra.mxu0 0.0
        %650 = vmatprep.subr.mxu0 0.0
        %651 = vmatpush1.xpose.msra.mxu0 0.0
        %652 = vmatprep.subr.mxu0 0.0
        %653 = vmatpush1.xpose.msra.mxu0 0.0
        %654 = vmatprep.subr.mxu0 0.0
        %655 = vmatpush1.xpose.msra.mxu0 0.0
        %656 = vmatprep.subr.mxu0 0.0
        %657 = vmatpush1.xpose.msra.mxu0 0.0
        %658 = vmatprep.subr.mxu0 0.0
        %659 = vmatpush1.xpose.msra.mxu0 0.0
        %660 = vmatprep.subr.mxu0 0.0
        %661 = vmatpush1.xpose.msra.mxu0 0.0
        %662 = vmatprep.subr.mxu0 0.0
        %663 = vmatpush1.xpose.msra.mxu0 0.0
        %664 = vmatprep.subr.mxu0 0.0
        %665 = vmatpush1.xpose.msra.mxu0 0.0
        %666 = vmatprep.subr.mxu0 0.0
        %667 = vmatpush1.xpose.msra.mxu0 0.0
        %668 = vmatprep.subr.mxu0 0.0
        %669 = vmatpush1.xpose.msra.mxu0 0.0
        %670 = vmatprep.subr.mxu0 0.0
        %671 = vmatpush1.xpose.msra.mxu0 0.0
        %672 = vmatprep.subr.mxu0 0.0
        %673 = vmatpush1.xpose.msra.mxu0 0.0
        %674 = vmatprep.subr.mxu0 0.0
        %675 = vmatpush1.xpose.msra.mxu0 %v642
        %676 = vmatprep.subr.mxu0 0.0
        %677 = vmatpush2.xpose.msra.mxu0 0.0
        %678 = vmatprep.subr.mxu0 0.0
        %679 = vmatpush2.xpose.msra.mxu0 0.0
        %680 = vmatprep.subr.mxu0 0.0
        %681 = vmatpush2.xpose.msra.mxu0 0.0
        %682 = vmatprep.subr.mxu0 0.0
        %683 = vmatpush2.xpose.msra.mxu0 0.0
        %684 = vmatprep.subr.mxu0 0.0
        %685 = vmatpush2.xpose.msra.mxu0 0.0
        %686 = vmatprep.subr.mxu0 0.0
        %687 = vmatpush2.xpose.msra.mxu0 0.0
        %688 = vmatprep.subr.mxu0 0.0
        %689 = vmatpush2.xpose.msra.mxu0 0.0
        %690 = vmatprep.subr.mxu0 0.0
        %691 = vmatpush2.xpose.msra.mxu0 0.0
        %692 = vmatprep.subr.mxu0 0.0
        %693 = vmatpush2.xpose.msra.mxu0 0.0
        %694 = vmatprep.subr.mxu0 0.0
        %695 = vmatpush2.xpose.msra.mxu0 0.0
        %696 = vmatprep.subr.mxu0 0.0
        %697 = vmatpush2.xpose.msra.mxu0 0.0
        %698 = vmatprep.subr.mxu0 0.0
        %699 = vmatpush2.xpose.msra.mxu0 0.0
        %700 = vmatprep.subr.mxu0 0.0
        %701 = vmatpush2.xpose.msra.mxu0 0.0
        %702 = vmatprep.subr.mxu0 0.0
        %703 = vmatpush2.xpose.msra.mxu0 0.0
        %704 = vmatprep.subr.mxu0 0.0
        %705 = vmatpush2.xpose.msra.mxu0 0.0
        %706 = vmatprep.subr.mxu0 0.0
        %707 = vmatpush2.xpose.msra.mxu0 0.0
        %708 = vmatprep.mubr.f32.mxu0 0.0
        %709 = vmatmul.mubr.f32.gmra.mxu0 %v609
        %v710 = vpop.f32.mrf.mxu0
        %v711 = vadd.f32 0.0, %v710
        %v712 = vpop.f32.mrf.mxu0
        %713 = vmatprep.mubr.f32.mxu0 0.0
        %714 = vmatmul.mubr.f32.gmra.mxu0 %v610
        %v715 = vpop.f32.mrf.mxu0
        %v716 = vadd.f32 0.0, %v715
        %v717 = vpop.f32.mrf.mxu0
        %718 = vmatprep.mubr.f32.mxu0 0.0
        %719 = vmatmul.mubr.f32.gmra.mxu0 %v611
        %v720 = vpop.f32.mrf.mxu0
        %v721 = vadd.f32 0.0, %v720
        %v722 = vpop.f32.mrf.mxu0
        %723 = vmatprep.mubr.f32.mxu0 0.0
        %724 = vmatmul.mubr.f32.gmra.mxu0 %v612
        %v725 = vpop.f32.mrf.mxu0
        %v726 = vadd.f32 0.0, %v725
        %v727 = vpop.f32.mrf.mxu0
        %728 = vmatprep.mubr.f32.mxu0 0.0
        %729 = vmatmul.mubr.f32.gmra.mxu0 %v613
        %v730 = vpop.f32.mrf.mxu0
        %v731 = vadd.f32 0.0, %v730
        %v732 = vpop.f32.mrf.mxu0
        %733 = vmatprep.mubr.f32.mxu0 0.0
        %734 = vmatmul.mubr.f32.gmra.mxu0 %v614
        %v735 = vpop.f32.mrf.mxu0
        %v736 = vadd.f32 0.0, %v735
        %v737 = vpop.f32.mrf.mxu0
        %738 = vmatprep.mubr.f32.mxu0 0.0
        %739 = vmatmul.mubr.f32.gmra.mxu0 %v615
        %v740 = vpop.f32.mrf.mxu0
        %v741 = vadd.f32 0.0, %v740
        %v742 = vpop.f32.mrf.mxu0
        %743 = vmatprep.mubr.f32.mxu0 0.0
        %744 = vmatmul.mubr.f32.gmra.mxu0 %v616
        %v745 = vpop.f32.mrf.mxu0
        %v746 = vadd.f32 0.0, %v745
        %v747 = vpop.f32.mrf.mxu0
        %748 = vmatprep.mubr.f32.mxu0 0.0
        %749 = vmatmul.mubr.f32.gmra.mxu0 %v617
        %v750 = vpop.f32.mrf.mxu0
        %v751 = vadd.f32 0.0, %v750
        %v752 = vpop.f32.mrf.mxu0
        %753 = vmatprep.mubr.f32.mxu0 0.0
        %754 = vmatmul.mubr.f32.gmra.mxu0 %v618
        %v755 = vpop.f32.mrf.mxu0
        %v756 = vadd.f32 0.0, %v755
        %v757 = vpop.f32.mrf.mxu0
        %758 = vmatprep.mubr.f32.mxu0 0.0
        %759 = vmatmul.mubr.f32.gmra.mxu0 %v619
        %v760 = vpop.f32.mrf.mxu0
        %v761 = vadd.f32 0.0, %v760
        %v762 = vpop.f32.mrf.mxu0
        %763 = vmatprep.mubr.f32.mxu0 0.0
        %764 = vmatmul.mubr.f32.gmra.mxu0 %v620
        %v765 = vpop.f32.mrf.mxu0
        %v766 = vadd.f32 0.0, %v765
        %v767 = vpop.f32.mrf.mxu0
        %768 = vmatprep.mubr.f32.mxu0 0.0
        %769 = vmatmul.mubr.f32.gmra.mxu0 %v621
        %v770 = vpop.f32.mrf.mxu0
        %v771 = vadd.f32 0.0, %v770
        %v772 = vpop.f32.mrf.mxu0
        %773 = vmatprep.mubr.f32.mxu0 0.0
        %774 = vmatmul.mubr.f32.gmra.mxu0 %v622
        %v775 = vpop.f32.mrf.mxu0
        %v776 = vadd.f32 0.0, %v775
        %v777 = vpop.f32.mrf.mxu0
        %778 = vmatprep.mubr.f32.mxu0 0.0
        %779 = vmatmul.mubr.f32.gmra.mxu0 %v623
        %v780 = vpop.f32.mrf.mxu0
        %v781 = vadd.f32 0.0, %v780
        %v782 = vpop.f32.mrf.mxu0
        %783 = vmatprep.mubr.f32.mxu0 0.0
        %784 = vmatmul.mubr.f32.gmra.mxu0 %v624
        %v785 = vpop.f32.mrf.mxu0
        %v786 = vadd.f32 0.0, %v785
        %v787 = vpop.f32.mrf.mxu0
        %788 = vdwg.mxu0
        %789 = vmatprep.subr.mxu0 0.0
        %790 = vmatpush1.xpose.msra.mxu0 0.0
        %791 = vmatprep.subr.mxu0 0.0
        %792 = vmatpush1.xpose.msra.mxu0 0.0
        %793 = vmatprep.subr.mxu0 0.0
        %794 = vmatpush1.xpose.msra.mxu0 0.0
        %795 = vmatprep.subr.mxu0 0.0
        %796 = vmatpush1.xpose.msra.mxu0 0.0
        %797 = vmatprep.subr.mxu0 0.0
        %798 = vmatpush1.xpose.msra.mxu0 0.0
        %799 = vmatprep.subr.mxu0 0.0
        %800 = vmatpush1.xpose.msra.mxu0 0.0
        %801 = vmatprep.subr.mxu0 0.0
        %802 = vmatpush1.xpose.msra.mxu0 0.0
        %803 = vmatprep.subr.mxu0 0.0
        %804 = vmatpush1.xpose.msra.mxu0 0.0
        %805 = vmatprep.subr.mxu0 0.0
        %806 = vmatpush1.xpose.msra.mxu0 0.0
        %807 = vmatprep.subr.mxu0 0.0
        %808 = vmatpush1.xpose.msra.mxu0 0.0
        %809 = vmatprep.subr.mxu0 0.0
        %810 = vmatpush1.xpose.msra.mxu0 0.0
        %811 = vmatprep.subr.mxu0 0.0
        %812 = vmatpush1.xpose.msra.mxu0 0.0
        %813 = vmatprep.subr.mxu0 0.0
        %814 = vmatpush1.xpose.msra.mxu0 0.0
        %815 = vmatprep.subr.mxu0 0.0
        %816 = vmatpush1.xpose.msra.mxu0 0.0
        %817 = vmatprep.subr.mxu0 0.0
        %818 = vmatpush1.xpose.msra.mxu0 0.0
        %819 = vmatprep.subr.mxu0 0.0
        %820 = vmatpush1.xpose.msra.mxu0 %v287
        %821 = vmatprep.subr.mxu0 0.0
        %822 = vmatpush2.xpose.msra.mxu0 0.0
        %823 = vmatprep.subr.mxu0 0.0
        %824 = vmatpush2.xpose.msra.mxu0 0.0
        %825 = vmatprep.subr.mxu0 0.0
        %826 = vmatpush2.xpose.msra.mxu0 0.0
        %827 = vmatprep.subr.mxu0 0.0
        %828 = vmatpush2.xpose.msra.mxu0 0.0
        %829 = vmatprep.subr.mxu0 0.0
        %830 = vmatpush2.xpose.msra.mxu0 0.0
        %831 = vmatprep.subr.mxu0 0.0
        %832 = vmatpush2.xpose.msra.mxu0 0.0
        %833 = vmatprep.subr.mxu0 0.0
        %834 = vmatpush2.xpose.msra.mxu0 0.0
        %835 = vmatprep.subr.mxu0 0.0
        %836 = vmatpush2.xpose.msra.mxu0 0.0
        %837 = vmatprep.subr.mxu0 0.0
        %838 = vmatpush2.xpose.msra.mxu0 0.0
        %839 = vmatprep.subr.mxu0 0.0
        %840 = vmatpush2.xpose.msra.mxu0 0.0
        %841 = vmatprep.subr.mxu0 0.0
        %842 = vmatpush2.xpose.msra.mxu0 0.0
        %843 = vmatprep.subr.mxu0 0.0
        %844 = vmatpush2.xpose.msra.mxu0 0.0
        %845 = vmatprep.subr.mxu0 0.0
        %846 = vmatpush2.xpose.msra.mxu0 0.0
        %847 = vmatprep.subr.mxu0 0.0
        %848 = vmatpush2.xpose.msra.mxu0 0.0
        %849 = vmatprep.subr.mxu0 0.0
        %850 = vmatpush2.xpose.msra.mxu0 0.0
        %851 = vmatprep.subr.mxu0 0.0
        %852 = vmatpush2.xpose.msra.mxu0 0.0
        %853 = vmatprep.mubr.f32.mxu0 0.0
        %854 = vmatmul.mubr.f32.gmra.mxu0 %v494
        %v855 = vpop.f32.mrf.mxu0
        %v856 = vadd.f32 %v711, %v855
        %v857 = vpop.f32.mrf.mxu0
        %858 = vmatprep.mubr.f32.mxu0 0.0
        %859 = vmatmul.mubr.f32.gmra.mxu0 %v495
        %v860 = vpop.f32.mrf.mxu0
        %v861 = vadd.f32 %v716, %v860
        %v862 = vpop.f32.mrf.mxu0
        %863 = vmatprep.mubr.f32.mxu0 0.0
        %864 = vmatmul.mubr.f32.gmra.mxu0 %v496
        %v865 = vpop.f32.mrf.mxu0
        %v866 = vadd.f32 %v721, %v865
        %v867 = vpop.f32.mrf.mxu0
        %868 = vmatprep.mubr.f32.mxu0 0.0
        %869 = vmatmul.mubr.f32.gmra.mxu0 %v497
        %v870 = vpop.f32.mrf.mxu0
        %v871 = vadd.f32 %v726, %v870
        %v872 = vpop.f32.mrf.mxu0
        %873 = vmatprep.mubr.f32.mxu0 0.0
        %874 = vmatmul.mubr.f32.gmra.mxu0 %v498
        %v875 = vpop.f32.mrf.mxu0
        %v876 = vadd.f32 %v731, %v875
        %v877 = vpop.f32.mrf.mxu0
        %878 = vmatprep.mubr.f32.mxu0 0.0
        %879 = vmatmul.mubr.f32.gmra.mxu0 %v499
        %v880 = vpop.f32.mrf.mxu0
        %v881 = vadd.f32 %v736, %v880
        %v882 = vpop.f32.mrf.mxu0
        %883 = vmatprep.mubr.f32.mxu0 0.0
        %884 = vmatmul.mubr.f32.gmra.mxu0 %v500
        %v885 = vpop.f32.mrf.mxu0
        %v886 = vadd.f32 %v741, %v885
        %v887 = vpop.f32.mrf.mxu0
        %888 = vmatprep.mubr.f32.mxu0 0.0
        %889 = vmatmul.mubr.f32.gmra.mxu0 %v501
        %v890 = vpop.f32.mrf.mxu0
        %v891 = vadd.f32 %v746, %v890
        %v892 = vpop.f32.mrf.mxu0
        %893 = vmatprep.mubr.f32.mxu0 0.0
        %894 = vmatmul.mubr.f32.gmra.mxu0 %v502
        %v895 = vpop.f32.mrf.mxu0
        %v896 = vadd.f32 %v751, %v895
        %v897 = vpop.f32.mrf.mxu0
        %898 = vmatprep.mubr.f32.mxu0 0.0
        %899 = vmatmul.mubr.f32.gmra.mxu0 %v503
        %v900 = vpop.f32.mrf.mxu0
        %v901 = vadd.f32 %v756, %v900
        %v902 = vpop.f32.mrf.mxu0
        %903 = vmatprep.mubr.f32.mxu0 0.0
        %904 = vmatmul.mubr.f32.gmra.mxu0 %v504
        %v905 = vpop.f32.mrf.mxu0
        %v906 = vadd.f32 %v761, %v905
        %v907 = vpop.f32.mrf.mxu0
        %908 = vmatprep.mubr.f32.mxu0 0.0
        %909 = vmatmul.mubr.f32.gmra.mxu0 %v505
        %v910 = vpop.f32.mrf.mxu0
        %v911 = vadd.f32 %v766, %v910
        %v912 = vpop.f32.mrf.mxu0
        %913 = vmatprep.mubr.f32.mxu0 0.0
        %914 = vmatmul.mubr.f32.gmra.mxu0 %v506
        %v915 = vpop.f32.mrf.mxu0
        %v916 = vadd.f32 %v771, %v915
        %v917 = vpop.f32.mrf.mxu0
        %918 = vmatprep.mubr.f32.mxu0 0.0
        %919 = vmatmul.mubr.f32.gmra.mxu0 %v507
        %v920 = vpop.f32.mrf.mxu0
        %v921 = vadd.f32 %v776, %v920
        %v922 = vpop.f32.mrf.mxu0
        %923 = vmatprep.mubr.f32.mxu0 0.0
        %924 = vmatmul.mubr.f32.gmra.mxu0 %v508
        %v925 = vpop.f32.mrf.mxu0
        %v926 = vadd.f32 %v781, %v925
        %v927 = vpop.f32.mrf.mxu0
        %928 = vmatprep.mubr.f32.mxu0 0.0
        %929 = vmatmul.mubr.f32.gmra.mxu0 %v509
        %v930 = vpop.f32.mrf.mxu0
        %v931 = vadd.f32 %v786, %v930
        %v932 = vpop.f32.mrf.mxu0
        %933 = vdwg.mxu0
        %v934 = vsub.f32 %v298, %v337
        %v935 = vsub.f32 %v298, %v342
        %v936 = vsub.f32 %v298, %v347
        %v937 = vsub.f32 %v298, %v352
        %v938 = vsub.f32 %v298, %v357
        %v939 = vsub.f32 %v298, %v362
        %v940 = vsub.f32 %v298, %v367
        %v941 = vsub.f32 %v298, %v372
        %v942 = vsub.f32 %v298, %v377
        %v943 = vsub.f32 %v298, %v382
        %v944 = vsub.f32 %v298, %v387
        %v945 = vsub.f32 %v298, %v392
        %v946 = vsub.f32 %v298, %v397
        %v947 = vsub.f32 %v298, %v402
        %v948 = vsub.f32 %v298, %v407
        %v949 = vsub.f32 %v298, %v412
        %v950 = vmul.f32 %v934, %v934
        %v951 = vmul.f32 %v935, %v935
        %v952 = vmul.f32 %v936, %v936
        %v953 = vmul.f32 %v937, %v937
        %v954 = vmul.f32 %v938, %v938
        %v955 = vmul.f32 %v939, %v939
        %v956 = vmul.f32 %v940, %v940
        %v957 = vmul.f32 %v941, %v941
        %v958 = vmul.f32 %v942, %v942
        %v959 = vmul.f32 %v943, %v943
        %v960 = vmul.f32 %v944, %v944
        %v961 = vmul.f32 %v945, %v945
        %v962 = vmul.f32 %v946, %v946
        %v963 = vmul.f32 %v947, %v947
        %v964 = vmul.f32 %v948, %v948
        %v965 = vmul.f32 %v949, %v949
        %v966 = vsub.f32 0.0, %v950
        %v967 = vsub.f32 0.0, %v951
        %v968 = vsub.f32 0.0, %v952
        %v969 = vsub.f32 0.0, %v953
        %v970 = vsub.f32 0.0, %v954
        %v971 = vsub.f32 0.0, %v955
        %v972 = vsub.f32 0.0, %v956
        %v973 = vsub.f32 0.0, %v957
        %v974 = vsub.f32 0.0, %v958
        %v975 = vsub.f32 0.0, %v959
        %v976 = vsub.f32 0.0, %v960
        %v977 = vsub.f32 0.0, %v961
        %v978 = vsub.f32 0.0, %v962
        %v979 = vsub.f32 0.0, %v963
        %v980 = vsub.f32 0.0, %v964
        %v981 = vsub.f32 0.0, %v965
        %v982 = vmul.f32 %v966, 1.442695
        %v983 = vpow.pop %v982
        %v984 = vmul.f32 %v967, 1.442695
        %v985 = vpow.pop %v984
        %v986 = vmul.f32 %v968, 1.442695
        %v987 = vpow.pop %v986
        %v988 = vmul.f32 %v969, 1.442695
        %v989 = vpow.pop %v988
        %v990 = vmul.f32 %v970, 1.442695
        %v991 = vpow.pop %v990
        %v992 = vmul.f32 %v971, 1.442695
        %v993 = vpow.pop %v992
        %v994 = vmul.f32 %v972, 1.442695
        %v995 = vpow.pop %v994
        %v996 = vmul.f32 %v973, 1.442695
        %v997 = vpow.pop %v996
        %v998 = vmul.f32 %v974, 1.442695
        %v999 = vpow.pop %v998
        %v1000 = vmul.f32 %v975, 1.442695
        %v1001 = vpow.pop %v1000
        %v1002 = vmul.f32 %v976, 1.442695
        %v1003 = vpow.pop %v1002
        %v1004 = vmul.f32 %v977, 1.442695
        %v1005 = vpow.pop %v1004
        %v1006 = vmul.f32 %v978, 1.442695
        %v1007 = vpow.pop %v1006
        %v1008 = vmul.f32 %v979, 1.442695
        %v1009 = vpow.pop %v1008
        %v1010 = vmul.f32 %v980, 1.442695
        %v1011 = vpow.pop %v1010
        %v1012 = vmul.f32 %v981, 1.442695
        %v1013 = vpow.pop %v1012
        %v1014 = vmul.f32 %v983, 39.89423
        %v1015 = vmul.f32 %v985, 39.89423
        %v1016 = vmul.f32 %v987, 39.89423
        %v1017 = vmul.f32 %v989, 39.89423
        %v1018 = vmul.f32 %v991, 39.89423
        %v1019 = vmul.f32 %v993, 39.89423
        %v1020 = vmul.f32 %v995, 39.89423
        %v1021 = vmul.f32 %v997, 39.89423
        %v1022 = vmul.f32 %v999, 39.89423
        %v1023 = vmul.f32 %v1001, 39.89423
        %v1024 = vmul.f32 %v1003, 39.89423
        %v1025 = vmul.f32 %v1005, 39.89423
        %v1026 = vmul.f32 %v1007, 39.89423
        %v1027 = vmul.f32 %v1009, 39.89423
        %v1028 = vmul.f32 %v1011, 39.89423
        %v1029 = vmul.f32 %v1013, 39.89423
        %1030 = vst [vmem:[%s512 + $0x10] sm:$0xff] %v1014
        %1031 = vst [vmem:[%s512 + $0x30] sm:$0xff] %v1015
        %1032 = vst [vmem:[%s512 + $0x50] sm:$0xff] %v1016
        %1033 = vst [vmem:[%s512 + $0x70] sm:$0xff] %v1017
        %1034 = vst [vmem:[%s512 + $0x90] sm:$0xff] %v1018
        %1035 = vst [vmem:[%s512 + $0xb0] sm:$0xff] %v1019
        %1036 = vst [vmem:[%s512 + $0xd0] sm:$0xff] %v1020
        %1037 = vst [vmem:[%s512 + $0xf0] sm:$0xff] %v1021
        %1038 = vst [vmem:[%s512 + $0x110] sm:$0xff] %v1022
        %1039 = vst [vmem:[%s512 + $0x130] sm:$0xff] %v1023
        %1040 = vst [vmem:[%s512 + $0x150] sm:$0xff] %v1024
        %1041 = vst [vmem:[%s512 + $0x170] sm:$0xff] %v1025
        %1042 = vst [vmem:[%s512 + $0x190] sm:$0xff] %v1026
        %1043 = vst [vmem:[%s512 + $0x1b0] sm:$0xff] %v1027
        %1044 = vst [vmem:[%s512 + $0x1d0] sm:$0xff] %v1028
        %1045 = vst [vmem:[%s512 + $0x1f0] sm:$0xff] %v1029
        %1046 = vmatprep.subr.mxu0 0.0
        %1047 = vmatpush1.xpose.msra.mxu0 0.0
        %1048 = vmatprep.subr.mxu0 0.0
        %1049 = vmatpush1.xpose.msra.mxu0 0.0
        %1050 = vmatprep.subr.mxu0 0.0
        %1051 = vmatpush1.xpose.msra.mxu0 0.0
        %1052 = vmatprep.subr.mxu0 0.0
        %1053 = vmatpush1.xpose.msra.mxu0 0.0
        %1054 = vmatprep.subr.mxu0 0.0
        %1055 = vmatpush1.xpose.msra.mxu0 0.0
        %1056 = vmatprep.subr.mxu0 0.0
        %1057 = vmatpush1.xpose.msra.mxu0 0.0
        %1058 = vmatprep.subr.mxu0 0.0
        %1059 = vmatpush1.xpose.msra.mxu0 0.0
        %1060 = vmatprep.subr.mxu0 0.0
        %1061 = vmatpush1.xpose.msra.mxu0 0.0
        %1062 = vmatprep.subr.mxu0 0.0
        %1063 = vmatpush1.xpose.msra.mxu0 0.0
        %1064 = vmatprep.subr.mxu0 0.0
        %1065 = vmatpush1.xpose.msra.mxu0 0.0
        %1066 = vmatprep.subr.mxu0 0.0
        %1067 = vmatpush1.xpose.msra.mxu0 0.0
        %1068 = vmatprep.subr.mxu0 0.0
        %1069 = vmatpush1.xpose.msra.mxu0 0.0
        %1070 = vmatprep.subr.mxu0 0.0
        %1071 = vmatpush1.xpose.msra.mxu0 0.0
        %1072 = vmatprep.subr.mxu0 0.0
        %1073 = vmatpush1.xpose.msra.mxu0 0.0
        %1074 = vmatprep.subr.mxu0 0.0
        %1075 = vmatpush1.xpose.msra.mxu0 0.0
        %1076 = vmatprep.subr.mxu0 0.0
        %1077 = vmatpush1.xpose.msra.mxu0 %v288
        %1078 = vmatprep.subr.mxu0 0.0
        %1079 = vmatpush2.xpose.msra.mxu0 0.0
        %1080 = vmatprep.subr.mxu0 0.0
        %1081 = vmatpush2.xpose.msra.mxu0 0.0
        %1082 = vmatprep.subr.mxu0 0.0
        %1083 = vmatpush2.xpose.msra.mxu0 0.0
        %1084 = vmatprep.subr.mxu0 0.0
        %1085 = vmatpush2.xpose.msra.mxu0 0.0
        %1086 = vmatprep.subr.mxu0 0.0
        %1087 = vmatpush2.xpose.msra.mxu0 0.0
        %1088 = vmatprep.subr.mxu0 0.0
        %1089 = vmatpush2.xpose.msra.mxu0 0.0
        %1090 = vmatprep.subr.mxu0 0.0
        %1091 = vmatpush2.xpose.msra.mxu0 0.0
        %1092 = vmatprep.subr.mxu0 0.0
        %1093 = vmatpush2.xpose.msra.mxu0 0.0
        %1094 = vmatprep.subr.mxu0 0.0
        %1095 = vmatpush2.xpose.msra.mxu0 0.0
        %1096 = vmatprep.subr.mxu0 0.0
        %1097 = vmatpush2.xpose.msra.mxu0 0.0
        %1098 = vmatprep.subr.mxu0 0.0
        %1099 = vmatpush2.xpose.msra.mxu0 0.0
        %1100 = vmatprep.subr.mxu0 0.0
        %1101 = vmatpush2.xpose.msra.mxu0 0.0
        %1102 = vmatprep.subr.mxu0 0.0
        %1103 = vmatpush2.xpose.msra.mxu0 0.0
        %1104 = vmatprep.subr.mxu0 0.0
        %1105 = vmatpush2.xpose.msra.mxu0 0.0
        %1106 = vmatprep.subr.mxu0 0.0
        %1107 = vmatpush2.xpose.msra.mxu0 0.0
        %1108 = vmatprep.subr.mxu0 0.0
        %1109 = vmatpush2.xpose.msra.mxu0 0.0
        %1110 = vmatprep.mubr.f32.mxu0 0.0
        %1111 = vmatmul.mubr.f32.gmra.mxu0 %v1014
        %v1112 = vpop.f32.mrf.mxu0
        %v1113 = vadd.f32 0.0, %v1112
        %v1114 = vpop.f32.mrf.mxu0
        %1115 = vmatprep.mubr.f32.mxu0 0.0
        %1116 = vmatmul.mubr.f32.gmra.mxu0 %v1015
        %v1117 = vpop.f32.mrf.mxu0
        %v1118 = vadd.f32 0.0, %v1117
        %v1119 = vpop.f32.mrf.mxu0
        %1120 = vmatprep.mubr.f32.mxu0 0.0
        %1121 = vmatmul.mubr.f32.gmra.mxu0 %v1016
        %v1122 = vpop.f32.mrf.mxu0
        %v1123 = vadd.f32 0.0, %v1122
        %v1124 = vpop.f32.mrf.mxu0
        %1125 = vmatprep.mubr.f32.mxu0 0.0
        %1126 = vmatmul.mubr.f32.gmra.mxu0 %v1017
        %v1127 = vpop.f32.mrf.mxu0
        %v1128 = vadd.f32 0.0, %v1127
        %v1129 = vpop.f32.mrf.mxu0
        %1130 = vmatprep.mubr.f32.mxu0 0.0
        %1131 = vmatmul.mubr.f32.gmra.mxu0 %v1018
        %v1132 = vpop.f32.mrf.mxu0
        %v1133 = vadd.f32 0.0, %v1132
        %v1134 = vpop.f32.mrf.mxu0
        %1135 = vmatprep.mubr.f32.mxu0 0.0
        %1136 = vmatmul.mubr.f32.gmra.mxu0 %v1019
        %v1137 = vpop.f32.mrf.mxu0
        %v1138 = vadd.f32 0.0, %v1137
        %v1139 = vpop.f32.mrf.mxu0
        %1140 = vmatprep.mubr.f32.mxu0 0.0
        %1141 = vmatmul.mubr.f32.gmra.mxu0 %v1020
        %v1142 = vpop.f32.mrf.mxu0
        %v1143 = vadd.f32 0.0, %v1142
        %v1144 = vpop.f32.mrf.mxu0
        %1145 = vmatprep.mubr.f32.mxu0 0.0
        %1146 = vmatmul.mubr.f32.gmra.mxu0 %v1021
        %v1147 = vpop.f32.mrf.mxu0
        %v1148 = vadd.f32 0.0, %v1147
        %v1149 = vpop.f32.mrf.mxu0
        %1150 = vmatprep.mubr.f32.mxu0 0.0
        %1151 = vmatmul.mubr.f32.gmra.mxu0 %v1022
        %v1152 = vpop.f32.mrf.mxu0
        %v1153 = vadd.f32 0.0, %v1152
        %v1154 = vpop.f32.mrf.mxu0
        %1155 = vmatprep.mubr.f32.mxu0 0.0
        %1156 = vmatmul.mubr.f32.gmra.mxu0 %v1023
        %v1157 = vpop.f32.mrf.mxu0
        %v1158 = vadd.f32 0.0, %v1157
        %v1159 = vpop.f32.mrf.mxu0
        %1160 = vmatprep.mubr.f32.mxu0 0.0
        %1161 = vmatmul.mubr.f32.gmra.mxu0 %v1024
        %v1162 = vpop.f32.mrf.mxu0
        %v1163 = vadd.f32 0.0, %v1162
        %v1164 = vpop.f32.mrf.mxu0
        %1165 = vmatprep.mubr.f32.mxu0 0.0
        %1166 = vmatmul.mubr.f32.gmra.mxu0 %v1025
        %v1167 = vpop.f32.mrf.mxu0
        %v1168 = vadd.f32 0.0, %v1167
        %v1169 = vpop.f32.mrf.mxu0
        %1170 = vmatprep.mubr.f32.mxu0 0.0
        %1171 = vmatmul.mubr.f32.gmra.mxu0 %v1026
        %v1172 = vpop.f32.mrf.mxu0
        %v1173 = vadd.f32 0.0, %v1172
        %v1174 = vpop.f32.mrf.mxu0
        %1175 = vmatprep.mubr.f32.mxu0 0.0
        %1176 = vmatmul.mubr.f32.gmra.mxu0 %v1027
        %v1177 = vpop.f32.mrf.mxu0
        %v1178 = vadd.f32 0.0, %v1177
        %v1179 = vpop.f32.mrf.mxu0
        %1180 = vmatprep.mubr.f32.mxu0 0.0
        %1181 = vmatmul.mubr.f32.gmra.mxu0 %v1028
        %v1182 = vpop.f32.mrf.mxu0
        %v1183 = vadd.f32 0.0, %v1182
        %v1184 = vpop.f32.mrf.mxu0
        %1185 = vmatprep.mubr.f32.mxu0 0.0
        %1186 = vmatmul.mubr.f32.gmra.mxu0 %v1029
        %v1187 = vpop.f32.mrf.mxu0
        %v1188 = vadd.f32 0.0, %v1187
        %v1189 = vpop.f32.mrf.mxu0
        %1190 = vdwg.mxu0
        %v1191 = vadd.f32 %v856, %v1113
        %v1192 = vadd.f32 %v861, %v1118
        %v1193 = vadd.f32 %v866, %v1123
        %v1194 = vadd.f32 %v871, %v1128
        %v1195 = vadd.f32 %v876, %v1133
        %v1196 = vadd.f32 %v881, %v1138
        %v1197 = vadd.f32 %v886, %v1143
        %v1198 = vadd.f32 %v891, %v1148
        %v1199 = vadd.f32 %v896, %v1153
        %v1200 = vadd.f32 %v901, %v1158
        %v1201 = vadd.f32 %v906, %v1163
        %v1202 = vadd.f32 %v911, %v1168
        %v1203 = vadd.f32 %v916, %v1173
        %v1204 = vadd.f32 %v921, %v1178
        %v1205 = vadd.f32 %v926, %v1183
        %v1206 = vadd.f32 %v931, %v1188
        %v1207 = vsub.f32 %v301, %v337
        %v1208 = vsub.f32 %v301, %v342
        %v1209 = vsub.f32 %v301, %v347
        %v1210 = vsub.f32 %v301, %v352
        %v1211 = vsub.f32 %v301, %v357
        %v1212 = vsub.f32 %v301, %v362
        %v1213 = vsub.f32 %v301, %v367
        %v1214 = vsub.f32 %v301, %v372
        %v1215 = vsub.f32 %v301, %v377
        %v1216 = vsub.f32 %v301, %v382
        %v1217 = vsub.f32 %v301, %v387
        %v1218 = vsub.f32 %v301, %v392
        %v1219 = vsub.f32 %v301, %v397
        %v1220 = vsub.f32 %v301, %v402
        %v1221 = vsub.f32 %v301, %v407
        %v1222 = vsub.f32 %v301, %v412
        %v1223 = vmul.f32 %v1207, %v1207
        %v1224 = vmul.f32 %v1208, %v1208
        %v1225 = vmul.f32 %v1209, %v1209
        %v1226 = vmul.f32 %v1210, %v1210
        %v1227 = vmul.f32 %v1211, %v1211
        %v1228 = vmul.f32 %v1212, %v1212
        %v1229 = vmul.f32 %v1213, %v1213
        %v1230 = vmul.f32 %v1214, %v1214
        %v1231 = vmul.f32 %v1215, %v1215
        %v1232 = vmul.f32 %v1216, %v1216
        %v1233 = vmul.f32 %v1217, %v1217
        %v1234 = vmul.f32 %v1218, %v1218
        %v1235 = vmul.f32 %v1219, %v1219
        %v1236 = vmul.f32 %v1220, %v1220
        %v1237 = vmul.f32 %v1221, %v1221
        %v1238 = vmul.f32 %v1222, %v1222
        %v1239 = vsub.f32 0.0, %v1223
        %v1240 = vsub.f32 0.0, %v1224
        %v1241 = vsub.f32 0.0, %v1225
        %v1242 = vsub.f32 0.0, %v1226
        %v1243 = vsub.f32 0.0, %v1227
        %v1244 = vsub.f32 0.0, %v1228
        %v1245 = vsub.f32 0.0, %v1229
        %v1246 = vsub.f32 0.0, %v1230
        %v1247 = vsub.f32 0.0, %v1231
        %v1248 = vsub.f32 0.0, %v1232
        %v1249 = vsub.f32 0.0, %v1233
        %v1250 = vsub.f32 0.0, %v1234
        %v1251 = vsub.f32 0.0, %v1235
        %v1252 = vsub.f32 0.0, %v1236
        %v1253 = vsub.f32 0.0, %v1237
        %v1254 = vsub.f32 0.0, %v1238
        %v1255 = vmul.f32 %v1239, 1.442695
        %v1256 = vpow.pop %v1255
        %v1257 = vmul.f32 %v1240, 1.442695
        %v1258 = vpow.pop %v1257
        %v1259 = vmul.f32 %v1241, 1.442695
        %v1260 = vpow.pop %v1259
        %v1261 = vmul.f32 %v1242, 1.442695
        %v1262 = vpow.pop %v1261
        %v1263 = vmul.f32 %v1243, 1.442695
        %v1264 = vpow.pop %v1263
        %v1265 = vmul.f32 %v1244, 1.442695
        %v1266 = vpow.pop %v1265
        %v1267 = vmul.f32 %v1245, 1.442695
        %v1268 = vpow.pop %v1267
        %v1269 = vmul.f32 %v1246, 1.442695
        %v1270 = vpow.pop %v1269
        %v1271 = vmul.f32 %v1247, 1.442695
        %v1272 = vpow.pop %v1271
        %v1273 = vmul.f32 %v1248, 1.442695
        %v1274 = vpow.pop %v1273
        %v1275 = vmul.f32 %v1249, 1.442695
        %v1276 = vpow.pop %v1275
        %v1277 = vmul.f32 %v1250, 1.442695
        %v1278 = vpow.pop %v1277
        %v1279 = vmul.f32 %v1251, 1.442695
        %v1280 = vpow.pop %v1279
        %v1281 = vmul.f32 %v1252, 1.442695
        %v1282 = vpow.pop %v1281
        %v1283 = vmul.f32 %v1253, 1.442695
        %v1284 = vpow.pop %v1283
        %v1285 = vmul.f32 %v1254, 1.442695
        %v1286 = vpow.pop %v1285
        %v1287 = vmul.f32 %v1256, 39.89423
        %v1288 = vmul.f32 %v1258, 39.89423
        %v1289 = vmul.f32 %v1260, 39.89423
        %v1290 = vmul.f32 %v1262, 39.89423
        %v1291 = vmul.f32 %v1264, 39.89423
        %v1292 = vmul.f32 %v1266, 39.89423
        %v1293 = vmul.f32 %v1268, 39.89423
        %v1294 = vmul.f32 %v1270, 39.89423
        %v1295 = vmul.f32 %v1272, 39.89423
        %v1296 = vmul.f32 %v1274, 39.89423
        %v1297 = vmul.f32 %v1276, 39.89423
        %v1298 = vmul.f32 %v1278, 39.89423
        %v1299 = vmul.f32 %v1280, 39.89423
        %v1300 = vmul.f32 %v1282, 39.89423
        %v1301 = vmul.f32 %v1284, 39.89423
        %v1302 = vmul.f32 %v1286, 39.89423
        %1303 = vst [vmem:[%s512 + $0x18] sm:$0xff] %v1287
        %1304 = vst [vmem:[%s512 + $0x38] sm:$0xff] %v1288
        %1305 = vst [vmem:[%s512 + $0x58] sm:$0xff] %v1289
        %1306 = vst [vmem:[%s512 + $0x78] sm:$0xff] %v1290
        %1307 = vst [vmem:[%s512 + $0x98] sm:$0xff] %v1291
        %1308 = vst [vmem:[%s512 + $0xb8] sm:$0xff] %v1292
        %1309 = vst [vmem:[%s512 + $0xd8] sm:$0xff] %v1293
        %1310 = vst [vmem:[%s512 + $0xf8] sm:$0xff] %v1294
        %1311 = vst [vmem:[%s512 + $0x118] sm:$0xff] %v1295
        %1312 = vst [vmem:[%s512 + $0x138] sm:$0xff] %v1296
        %1313 = vst [vmem:[%s512 + $0x158] sm:$0xff] %v1297
        %1314 = vst [vmem:[%s512 + $0x178] sm:$0xff] %v1298
        %1315 = vst [vmem:[%s512 + $0x198] sm:$0xff] %v1299
        %1316 = vst [vmem:[%s512 + $0x1b8] sm:$0xff] %v1300
        %1317 = vst [vmem:[%s512 + $0x1d8] sm:$0xff] %v1301
        %1318 = vst [vmem:[%s512 + $0x1f8] sm:$0xff] %v1302
        %v1320 = vcombine.high %v288, %v288
        %1322 = vmatprep.subr.mxu0 0.0
        %1323 = vmatpush1.xpose.msra.mxu0 0.0
        %1324 = vmatprep.subr.mxu0 0.0
        %1325 = vmatpush1.xpose.msra.mxu0 0.0
        %1326 = vmatprep.subr.mxu0 0.0
        %1327 = vmatpush1.xpose.msra.mxu0 0.0
        %1328 = vmatprep.subr.mxu0 0.0
        %1329 = vmatpush1.xpose.msra.mxu0 0.0
        %1330 = vmatprep.subr.mxu0 0.0
        %1331 = vmatpush1.xpose.msra.mxu0 0.0
        %1332 = vmatprep.subr.mxu0 0.0
        %1333 = vmatpush1.xpose.msra.mxu0 0.0
        %1334 = vmatprep.subr.mxu0 0.0
        %1335 = vmatpush1.xpose.msra.mxu0 0.0
        %1336 = vmatprep.subr.mxu0 0.0
        %1337 = vmatpush1.xpose.msra.mxu0 0.0
        %1338 = vmatprep.subr.mxu0 0.0
        %1339 = vmatpush1.xpose.msra.mxu0 0.0
        %1340 = vmatprep.subr.mxu0 0.0
        %1341 = vmatpush1.xpose.msra.mxu0 0.0
        %1342 = vmatprep.subr.mxu0 0.0
        %1343 = vmatpush1.xpose.msra.mxu0 0.0
        %1344 = vmatprep.subr.mxu0 0.0
        %1345 = vmatpush1.xpose.msra.mxu0 0.0
        %1346 = vmatprep.subr.mxu0 0.0
        %1347 = vmatpush1.xpose.msra.mxu0 0.0
        %1348 = vmatprep.subr.mxu0 0.0
        %1349 = vmatpush1.xpose.msra.mxu0 0.0
        %1350 = vmatprep.subr.mxu0 0.0
        %1351 = vmatpush1.xpose.msra.mxu0 0.0
        %1352 = vmatprep.subr.mxu0 0.0
        %1353 = vmatpush1.xpose.msra.mxu0 %v1320
        %1354 = vmatprep.subr.mxu0 0.0
        %1355 = vmatpush2.xpose.msra.mxu0 0.0
        %1356 = vmatprep.subr.mxu0 0.0
        %1357 = vmatpush2.xpose.msra.mxu0 0.0
        %1358 = vmatprep.subr.mxu0 0.0
        %1359 = vmatpush2.xpose.msra.mxu0 0.0
        %1360 = vmatprep.subr.mxu0 0.0
        %1361 = vmatpush2.xpose.msra.mxu0 0.0
        %1362 = vmatprep.subr.mxu0 0.0
        %1363 = vmatpush2.xpose.msra.mxu0 0.0
        %1364 = vmatprep.subr.mxu0 0.0
        %1365 = vmatpush2.xpose.msra.mxu0 0.0
        %1366 = vmatprep.subr.mxu0 0.0
        %1367 = vmatpush2.xpose.msra.mxu0 0.0
        %1368 = vmatprep.subr.mxu0 0.0
        %1369 = vmatpush2.xpose.msra.mxu0 0.0
        %1370 = vmatprep.subr.mxu0 0.0
        %1371 = vmatpush2.xpose.msra.mxu0 0.0
        %1372 = vmatprep.subr.mxu0 0.0
        %1373 = vmatpush2.xpose.msra.mxu0 0.0
        %1374 = vmatprep.subr.mxu0 0.0
        %1375 = vmatpush2.xpose.msra.mxu0 0.0
        %1376 = vmatprep.subr.mxu0 0.0
        %1377 = vmatpush2.xpose.msra.mxu0 0.0
        %1378 = vmatprep.subr.mxu0 0.0
        %1379 = vmatpush2.xpose.msra.mxu0 0.0
        %1380 = vmatprep.subr.mxu0 0.0
        %1381 = vmatpush2.xpose.msra.mxu0 0.0
        %1382 = vmatprep.subr.mxu0 0.0
        %1383 = vmatpush2.xpose.msra.mxu0 0.0
        %1384 = vmatprep.subr.mxu0 0.0
        %1385 = vmatpush2.xpose.msra.mxu0 0.0
        %1386 = vmatprep.mubr.f32.mxu0 0.0
        %1387 = vmatmul.mubr.f32.gmra.mxu0 %v1287
        %v1388 = vpop.f32.mrf.mxu0
        %v1389 = vadd.f32 0.0, %v1388
        %v1390 = vpop.f32.mrf.mxu0
        %1391 = vmatprep.mubr.f32.mxu0 0.0
        %1392 = vmatmul.mubr.f32.gmra.mxu0 %v1288
        %v1393 = vpop.f32.mrf.mxu0
        %v1394 = vadd.f32 0.0, %v1393
        %v1395 = vpop.f32.mrf.mxu0
        %1396 = vmatprep.mubr.f32.mxu0 0.0
        %1397 = vmatmul.mubr.f32.gmra.mxu0 %v1289
        %v1398 = vpop.f32.mrf.mxu0
        %v1399 = vadd.f32 0.0, %v1398
        %v1400 = vpop.f32.mrf.mxu0
        %1401 = vmatprep.mubr.f32.mxu0 0.0
        %1402 = vmatmul.mubr.f32.gmra.mxu0 %v1290
        %v1403 = vpop.f32.mrf.mxu0
        %v1404 = vadd.f32 0.0, %v1403
        %v1405 = vpop.f32.mrf.mxu0
        %1406 = vmatprep.mubr.f32.mxu0 0.0
        %1407 = vmatmul.mubr.f32.gmra.mxu0 %v1291
        %v1408 = vpop.f32.mrf.mxu0
        %v1409 = vadd.f32 0.0, %v1408
        %v1410 = vpop.f32.mrf.mxu0
        %1411 = vmatprep.mubr.f32.mxu0 0.0
        %1412 = vmatmul.mubr.f32.gmra.mxu0 %v1292
        %v1413 = vpop.f32.mrf.mxu0
        %v1414 = vadd.f32 0.0, %v1413
        %v1415 = vpop.f32.mrf.mxu0
        %1416 = vmatprep.mubr.f32.mxu0 0.0
        %1417 = vmatmul.mubr.f32.gmra.mxu0 %v1293
        %v1418 = vpop.f32.mrf.mxu0
        %v1419 = vadd.f32 0.0, %v1418
        %v1420 = vpop.f32.mrf.mxu0
        %1421 = vmatprep.mubr.f32.mxu0 0.0
        %1422 = vmatmul.mubr.f32.gmra.mxu0 %v1294
        %v1423 = vpop.f32.mrf.mxu0
        %v1424 = vadd.f32 0.0, %v1423
        %v1425 = vpop.f32.mrf.mxu0
        %1426 = vmatprep.mubr.f32.mxu0 0.0
        %1427 = vmatmul.mubr.f32.gmra.mxu0 %v1295
        %v1428 = vpop.f32.mrf.mxu0
        %v1429 = vadd.f32 0.0, %v1428
        %v1430 = vpop.f32.mrf.mxu0
        %1431 = vmatprep.mubr.f32.mxu0 0.0
        %1432 = vmatmul.mubr.f32.gmra.mxu0 %v1296
        %v1433 = vpop.f32.mrf.mxu0
        %v1434 = vadd.f32 0.0, %v1433
        %v1435 = vpop.f32.mrf.mxu0
        %1436 = vmatprep.mubr.f32.mxu0 0.0
        %1437 = vmatmul.mubr.f32.gmra.mxu0 %v1297
        %v1438 = vpop.f32.mrf.mxu0
        %v1439 = vadd.f32 0.0, %v1438
        %v1440 = vpop.f32.mrf.mxu0
        %1441 = vmatprep.mubr.f32.mxu0 0.0
        %1442 = vmatmul.mubr.f32.gmra.mxu0 %v1298
        %v1443 = vpop.f32.mrf.mxu0
        %v1444 = vadd.f32 0.0, %v1443
        %v1445 = vpop.f32.mrf.mxu0
        %1446 = vmatprep.mubr.f32.mxu0 0.0
        %1447 = vmatmul.mubr.f32.gmra.mxu0 %v1299
        %v1448 = vpop.f32.mrf.mxu0
        %v1449 = vadd.f32 0.0, %v1448
        %v1450 = vpop.f32.mrf.mxu0
        %1451 = vmatprep.mubr.f32.mxu0 0.0
        %1452 = vmatmul.mubr.f32.gmra.mxu0 %v1300
        %v1453 = vpop.f32.mrf.mxu0
        %v1454 = vadd.f32 0.0, %v1453
        %v1455 = vpop.f32.mrf.mxu0
        %1456 = vmatprep.mubr.f32.mxu0 0.0
        %1457 = vmatmul.mubr.f32.gmra.mxu0 %v1301
        %v1458 = vpop.f32.mrf.mxu0
        %v1459 = vadd.f32 0.0, %v1458
        %v1460 = vpop.f32.mrf.mxu0
        %1461 = vmatprep.mubr.f32.mxu0 0.0
        %1462 = vmatmul.mubr.f32.gmra.mxu0 %v1302
        %v1463 = vpop.f32.mrf.mxu0
        %v1464 = vadd.f32 0.0, %v1463
        %v1465 = vpop.f32.mrf.mxu0
        %1466 = vdwg.mxu0
        %v1467 = vadd.f32 %v1191, %v1389
        %v1468 = vadd.f32 %v1192, %v1394
        %v1469 = vadd.f32 %v1193, %v1399
        %v1470 = vadd.f32 %v1194, %v1404
        %v1471 = vadd.f32 %v1195, %v1409
        %v1472 = vadd.f32 %v1196, %v1414
        %v1473 = vadd.f32 %v1197, %v1419
        %v1474 = vadd.f32 %v1198, %v1424
        %v1475 = vadd.f32 %v1199, %v1429
        %v1476 = vadd.f32 %v1200, %v1434
        %v1477 = vadd.f32 %v1201, %v1439
        %v1478 = vadd.f32 %v1202, %v1444
        %v1479 = vadd.f32 %v1203, %v1449
        %v1480 = vadd.f32 %v1204, %v1454
        %v1481 = vadd.f32 %v1205, %v1459
        %v1482 = vadd.f32 %v1206, %v1464
        %v1483 = vmul.f32 %v302, %v1467
        %v1484 = vmul.f32 %v303, %v1468
        %v1485 = vmul.f32 %v304, %v1469
        %v1486 = vmul.f32 %v305, %v1470
        %v1487 = vmul.f32 %v306, %v1471
        %v1488 = vmul.f32 %v307, %v1472
        %v1489 = vmul.f32 %v308, %v1473
        %v1490 = vmul.f32 %v309, %v1474
        %v1491 = vmul.f32 %v310, %v1475
        %v1492 = vmul.f32 %v311, %v1476
        %v1493 = vmul.f32 %v312, %v1477
        %v1494 = vmul.f32 %v313, %v1478
        %v1495 = vmul.f32 %v314, %v1479
        %v1496 = vmul.f32 %v315, %v1480
        %v1497 = vmul.f32 %v316, %v1481
        %v1498 = vmul.f32 %v317, %v1482
        %vm1499 = vcmask 31744
        %v1500 = vsel %vm1499, %v1483, 0.0
        %1501 = vadd.xlane.f32.xlu0 %v1500
        %v1502 = vpop.xlane.xlu0 %1501
        %v1503 = vsel %vm1499, %v1484, 0.0
        %1504 = vadd.xlane.f32.xlu0 %v1503
        %v1505 = vpop.xlane.xlu0 %1504
        %v1506 = vsel %vm1499, %v1485, 0.0
        %1507 = vadd.xlane.f32.xlu0 %v1506
        %v1508 = vpop.xlane.xlu0 %1507
        %v1509 = vsel %vm1499, %v1486, 0.0
        %1510 = vadd.xlane.f32.xlu0 %v1509
        %v1511 = vpop.xlane.xlu0 %1510
        %v1512 = vsel %vm1499, %v1487, 0.0
        %1513 = vadd.xlane.f32.xlu0 %v1512
        %v1514 = vpop.xlane.xlu0 %1513
        %v1515 = vsel %vm1499, %v1488, 0.0
        %1516 = vadd.xlane.f32.xlu0 %v1515
        %v1517 = vpop.xlane.xlu0 %1516
        %v1518 = vsel %vm1499, %v1489, 0.0
        %1519 = vadd.xlane.f32.xlu0 %v1518
        %v1520 = vpop.xlane.xlu0 %1519
        %v1521 = vsel %vm1499, %v1490, 0.0
        %1522 = vadd.xlane.f32.xlu0 %v1521
        %v1523 = vpop.xlane.xlu0 %1522
        %v1524 = vsel %vm1499, %v1491, 0.0
        %1525 = vadd.xlane.f32.xlu0 %v1524
        %v1526 = vpop.xlane.xlu0 %1525
        %v1527 = vsel %vm1499, %v1492, 0.0
        %1528 = vadd.xlane.f32.xlu0 %v1527
        %v1529 = vpop.xlane.xlu0 %1528
        %v1530 = vsel %vm1499, %v1493, 0.0
        %1531 = vadd.xlane.f32.xlu0 %v1530
        %v1532 = vpop.xlane.xlu0 %1531
        %v1533 = vsel %vm1499, %v1494, 0.0
        %1534 = vadd.xlane.f32.xlu0 %v1533
        %v1535 = vpop.xlane.xlu0 %1534
        %v1536 = vsel %vm1499, %v1495, 0.0
        %1537 = vadd.xlane.f32.xlu0 %v1536
        %v1538 = vpop.xlane.xlu0 %1537
        %v1539 = vsel %vm1499, %v1496, 0.0
        %1540 = vadd.xlane.f32.xlu0 %v1539
        %v1541 = vpop.xlane.xlu0 %1540
        %v1542 = vsel %vm1499, %v1497, 0.0
        %1543 = vadd.xlane.f32.xlu0 %v1542
        %v1544 = vpop.xlane.xlu0 %1543
        %v1545 = vsel %vm1499, %v1498, 0.0
        %1546 = vadd.xlane.f32.xlu0 %v1545
        %v1547 = vpop.xlane.xlu0 %1546
        %v1548 = vmul.f32 %v1502, %v318
        %v1549 = vmul.f32 %v1505, %v319
        %v1550 = vmul.f32 %v1508, %v320
        %v1551 = vmul.f32 %v1511, %v321
        %v1552 = vmul.f32 %v1514, %v322
        %v1553 = vmul.f32 %v1517, %v323
        %v1554 = vmul.f32 %v1520, %v324
        %v1555 = vmul.f32 %v1523, %v325
        %v1556 = vmul.f32 %v1526, %v326
        %v1557 = vmul.f32 %v1529, %v327
        %v1558 = vmul.f32 %v1532, %v328
        %v1559 = vmul.f32 %v1535, %v329
        %v1560 = vmul.f32 %v1538, %v330
        %v1561 = vmul.f32 %v1541, %v331
        %v1562 = vmul.f32 %v1544, %v332
        %v1563 = vmul.f32 %v1547, %v333
        %1580 = vrot.lane.b32.xlu0 %v1548, 127
        %v1581 = vpop.permute.xlu0 %1580
        %1582 = vrot.lane.b32.xlu0 %v1549, 127
        %v1583 = vpop.permute.xlu0 %1582
        %1584 = vrot.lane.b32.xlu0 %v1550, 127
        %v1585 = vpop.permute.xlu0 %1584
        %1586 = vrot.lane.b32.xlu0 %v1551, 127
        %v1587 = vpop.permute.xlu0 %1586
        %1588 = vrot.lane.b32.xlu0 %v1552, 127
        %v1589 = vpop.permute.xlu0 %1588
        %1590 = vrot.lane.b32.xlu0 %v1553, 127
        %v1591 = vpop.permute.xlu0 %1590
        %1592 = vrot.lane.b32.xlu0 %v1554, 127
        %v1593 = vpop.permute.xlu0 %1592
        %1594 = vrot.lane.b32.xlu0 %v1555, 127
        %v1595 = vpop.permute.xlu0 %1594
        %1596 = vrot.lane.b32.xlu0 %v1556, 127
        %v1597 = vpop.permute.xlu0 %1596
        %1598 = vrot.lane.b32.xlu0 %v1557, 127
        %v1599 = vpop.permute.xlu0 %1598
        %1600 = vrot.lane.b32.xlu0 %v1558, 127
        %v1601 = vpop.permute.xlu0 %1600
        %1602 = vrot.lane.b32.xlu0 %v1559, 127
        %v1603 = vpop.permute.xlu0 %1602
        %1604 = vrot.lane.b32.xlu0 %v1560, 127
        %v1605 = vpop.permute.xlu0 %1604
        %1606 = vrot.lane.b32.xlu0 %v1561, 127
        %v1607 = vpop.permute.xlu0 %1606
        %1608 = vrot.lane.b32.xlu0 %v1562, 127
        %v1609 = vpop.permute.xlu0 %1608
        %1610 = vrot.lane.b32.xlu0 %v1563, 127
        %v1611 = vpop.permute.xlu0 %1610
        %vm1628 = vcmask 7168
        %1629 = vst.msk [vmem:[%s284] sm:$0xff] %vm1628, %v1581
        %1630 = vst.msk [vmem:[%s284 + $0x8] sm:$0xff] %vm1628, %v1583
        %1631 = vst.msk [vmem:[%s284 + $0x10] sm:$0xff] %vm1628, %v1585
        %1632 = vst.msk [vmem:[%s284 + $0x18] sm:$0xff] %vm1628, %v1587
        %1633 = vst.msk [vmem:[%s284 + $0x20] sm:$0xff] %vm1628, %v1589
        %1634 = vst.msk [vmem:[%s284 + $0x28] sm:$0xff] %vm1628, %v1591
        %1635 = vst.msk [vmem:[%s284 + $0x30] sm:$0xff] %vm1628, %v1593
        %1636 = vst.msk [vmem:[%s284 + $0x38] sm:$0xff] %vm1628, %v1595
        %1637 = vst.msk [vmem:[%s284 + $0x40] sm:$0xff] %vm1628, %v1597
        %1638 = vst.msk [vmem:[%s284 + $0x48] sm:$0xff] %vm1628, %v1599
        %1639 = vst.msk [vmem:[%s284 + $0x50] sm:$0xff] %vm1628, %v1601
        %1640 = vst.msk [vmem:[%s284 + $0x58] sm:$0xff] %vm1628, %v1603
        %1641 = vst.msk [vmem:[%s284 + $0x60] sm:$0xff] %vm1628, %v1605
        %1642 = vst.msk [vmem:[%s284 + $0x68] sm:$0xff] %vm1628, %v1607
        %1643 = vst.msk [vmem:[%s284 + $0x70] sm:$0xff] %vm1628, %v1609
        %1644 = vst.msk [vmem:[%s284 + $0x78] sm:$0xff] %vm1628, %v1611
        %s1645 = scalar_lea.vmem %s264, 128
        %v1646 = vld [vmem:[%s1645] sm:$0xff]
        %v1647 = vld [vmem:[%s1645 + $0x8] sm:$0xff]
        %v1648 = vld [vmem:[%s1645 + $0x10] sm:$0xff]
        %v1649 = vld [vmem:[%s1645 + $0x18] sm:$0xff]
        %v1650 = vld [vmem:[%s1645 + $0x20] sm:$0xff]
        %v1651 = vld [vmem:[%s1645 + $0x28] sm:$0xff]
        %v1652 = vld [vmem:[%s1645 + $0x30] sm:$0xff]
        %v1653 = vld [vmem:[%s1645 + $0x38] sm:$0xff]
        %v1654 = vld [vmem:[%s1645 + $0x40] sm:$0xff]
        %v1655 = vld [vmem:[%s1645 + $0x48] sm:$0xff]
        %v1656 = vld [vmem:[%s1645 + $0x50] sm:$0xff]
        %v1657 = vld [vmem:[%s1645 + $0x58] sm:$0xff]
        %v1658 = vld [vmem:[%s1645 + $0x60] sm:$0xff]
        %v1659 = vld [vmem:[%s1645 + $0x68] sm:$0xff]
        %v1660 = vld [vmem:[%s1645 + $0x70] sm:$0xff]
        %v1661 = vld [vmem:[%s1645 + $0x78] sm:$0xff]
        %s1662 = scalar_lea.vmem %s274, 128
        %v1663 = vld [vmem:[%s1662] sm:$0xff]
        %v1664 = vld [vmem:[%s1662 + $0x8] sm:$0xff]
        %v1665 = vld [vmem:[%s1662 + $0x10] sm:$0xff]
        %v1666 = vld [vmem:[%s1662 + $0x18] sm:$0xff]
        %v1667 = vld [vmem:[%s1662 + $0x20] sm:$0xff]
        %v1668 = vld [vmem:[%s1662 + $0x28] sm:$0xff]
        %v1669 = vld [vmem:[%s1662 + $0x30] sm:$0xff]
        %v1670 = vld [vmem:[%s1662 + $0x38] sm:$0xff]
        %v1671 = vld [vmem:[%s1662 + $0x40] sm:$0xff]
        %v1672 = vld [vmem:[%s1662 + $0x48] sm:$0xff]
        %v1673 = vld [vmem:[%s1662 + $0x50] sm:$0xff]
        %v1674 = vld [vmem:[%s1662 + $0x58] sm:$0xff]
        %v1675 = vld [vmem:[%s1662 + $0x60] sm:$0xff]
        %v1676 = vld [vmem:[%s1662 + $0x68] sm:$0xff]
        %v1677 = vld [vmem:[%s1662 + $0x70] sm:$0xff]
        %v1678 = vld [vmem:[%s1662 + $0x78] sm:$0xff]
        %1680 = vset.pattern.permute.xlu0 0
        %1681 = vperm.xlu0 %1680, %v1663
        %v1682 = vpop.permute.xlu0 %1681
        %1685 = vset.pattern.permute.xlu0 0
        %1686 = vperm.xlu0 %1685, %v1664
        %v1687 = vpop.permute.xlu0 %1686
        %1690 = vset.pattern.permute.xlu0 0
        %1691 = vperm.xlu0 %1690, %v1665
        %v1692 = vpop.permute.xlu0 %1691
        %1695 = vset.pattern.permute.xlu0 0
        %1696 = vperm.xlu0 %1695, %v1666
        %v1697 = vpop.permute.xlu0 %1696
        %1700 = vset.pattern.permute.xlu0 0
        %1701 = vperm.xlu0 %1700, %v1667
        %v1702 = vpop.permute.xlu0 %1701
        %1705 = vset.pattern.permute.xlu0 0
        %1706 = vperm.xlu0 %1705, %v1668
        %v1707 = vpop.permute.xlu0 %1706
        %1710 = vset.pattern.permute.xlu0 0
        %1711 = vperm.xlu0 %1710, %v1669
        %v1712 = vpop.permute.xlu0 %1711
        %1715 = vset.pattern.permute.xlu0 0
        %1716 = vperm.xlu0 %1715, %v1670
        %v1717 = vpop.permute.xlu0 %1716
        %1720 = vset.pattern.permute.xlu0 0
        %1721 = vperm.xlu0 %1720, %v1671
        %v1722 = vpop.permute.xlu0 %1721
        %1725 = vset.pattern.permute.xlu0 0
        %1726 = vperm.xlu0 %1725, %v1672
        %v1727 = vpop.permute.xlu0 %1726
        %1730 = vset.pattern.permute.xlu0 0
        %1731 = vperm.xlu0 %1730, %v1673
        %v1732 = vpop.permute.xlu0 %1731
        %1735 = vset.pattern.permute.xlu0 0
        %1736 = vperm.xlu0 %1735, %v1674
        %v1737 = vpop.permute.xlu0 %1736
        %1740 = vset.pattern.permute.xlu0 0
        %1741 = vperm.xlu0 %1740, %v1675
        %v1742 = vpop.permute.xlu0 %1741
        %1745 = vset.pattern.permute.xlu0 0
        %1746 = vperm.xlu0 %1745, %v1676
        %v1747 = vpop.permute.xlu0 %1746
        %1750 = vset.pattern.permute.xlu0 0
        %1751 = vperm.xlu0 %1750, %v1677
        %v1752 = vpop.permute.xlu0 %1751
        %1755 = vset.pattern.permute.xlu0 0
        %1756 = vperm.xlu0 %1755, %v1678
        %v1757 = vpop.permute.xlu0 %1756
        %v1759 = vsub.f32 %v292, %v1682
        %v1760 = vsub.f32 %v292, %v1687
        %v1761 = vsub.f32 %v292, %v1692
        %v1762 = vsub.f32 %v292, %v1697
        %v1763 = vsub.f32 %v292, %v1702
        %v1764 = vsub.f32 %v292, %v1707
        %v1765 = vsub.f32 %v292, %v1712
        %v1766 = vsub.f32 %v292, %v1717
        %v1767 = vsub.f32 %v292, %v1722
        %v1768 = vsub.f32 %v292, %v1727
        %v1769 = vsub.f32 %v292, %v1732
        %v1770 = vsub.f32 %v292, %v1737
        %v1771 = vsub.f32 %v292, %v1742
        %v1772 = vsub.f32 %v292, %v1747
        %v1773 = vsub.f32 %v292, %v1752
        %v1774 = vsub.f32 %v292, %v1757
        %v1775 = vmul.f32 %v1759, %v1759
        %v1776 = vmul.f32 %v1760, %v1760
        %v1777 = vmul.f32 %v1761, %v1761
        %v1778 = vmul.f32 %v1762, %v1762
        %v1779 = vmul.f32 %v1763, %v1763
        %v1780 = vmul.f32 %v1764, %v1764
        %v1781 = vmul.f32 %v1765, %v1765
        %v1782 = vmul.f32 %v1766, %v1766
        %v1783 = vmul.f32 %v1767, %v1767
        %v1784 = vmul.f32 %v1768, %v1768
        %v1785 = vmul.f32 %v1769, %v1769
        %v1786 = vmul.f32 %v1770, %v1770
        %v1787 = vmul.f32 %v1771, %v1771
        %v1788 = vmul.f32 %v1772, %v1772
        %v1789 = vmul.f32 %v1773, %v1773
        %v1790 = vmul.f32 %v1774, %v1774
        %v1791 = vsub.f32 0.0, %v1775
        %v1792 = vsub.f32 0.0, %v1776
        %v1793 = vsub.f32 0.0, %v1777
        %v1794 = vsub.f32 0.0, %v1778
        %v1795 = vsub.f32 0.0, %v1779
        %v1796 = vsub.f32 0.0, %v1780
        %v1797 = vsub.f32 0.0, %v1781
        %v1798 = vsub.f32 0.0, %v1782
        %v1799 = vsub.f32 0.0, %v1783
        %v1800 = vsub.f32 0.0, %v1784
        %v1801 = vsub.f32 0.0, %v1785
        %v1802 = vsub.f32 0.0, %v1786
        %v1803 = vsub.f32 0.0, %v1787
        %v1804 = vsub.f32 0.0, %v1788
        %v1805 = vsub.f32 0.0, %v1789
        %v1806 = vsub.f32 0.0, %v1790
        %v1807 = vmul.f32 %v1791, 1.442695
        %v1808 = vpow.pop %v1807
        %v1809 = vmul.f32 %v1792, 1.442695
        %v1810 = vpow.pop %v1809
        %v1811 = vmul.f32 %v1793, 1.442695
        %v1812 = vpow.pop %v1811
        %v1813 = vmul.f32 %v1794, 1.442695
        %v1814 = vpow.pop %v1813
        %v1815 = vmul.f32 %v1795, 1.442695
        %v1816 = vpow.pop %v1815
        %v1817 = vmul.f32 %v1796, 1.442695
        %v1818 = vpow.pop %v1817
        %v1819 = vmul.f32 %v1797, 1.442695
        %v1820 = vpow.pop %v1819
        %v1821 = vmul.f32 %v1798, 1.442695
        %v1822 = vpow.pop %v1821
        %v1823 = vmul.f32 %v1799, 1.442695
        %v1824 = vpow.pop %v1823
        %v1825 = vmul.f32 %v1800, 1.442695
        %v1826 = vpow.pop %v1825
        %v1827 = vmul.f32 %v1801, 1.442695
        %v1828 = vpow.pop %v1827
        %v1829 = vmul.f32 %v1802, 1.442695
        %v1830 = vpow.pop %v1829
        %v1831 = vmul.f32 %v1803, 1.442695
        %v1832 = vpow.pop %v1831
        %v1833 = vmul.f32 %v1804, 1.442695
        %v1834 = vpow.pop %v1833
        %v1835 = vmul.f32 %v1805, 1.442695
        %v1836 = vpow.pop %v1835
        %v1837 = vmul.f32 %v1806, 1.442695
        %v1838 = vpow.pop %v1837
        %v1839 = vmul.f32 %v1808, 39.89423
        %v1840 = vmul.f32 %v1810, 39.89423
        %v1841 = vmul.f32 %v1812, 39.89423
        %v1842 = vmul.f32 %v1814, 39.89423
        %v1843 = vmul.f32 %v1816, 39.89423
        %v1844 = vmul.f32 %v1818, 39.89423
        %v1845 = vmul.f32 %v1820, 39.89423
        %v1846 = vmul.f32 %v1822, 39.89423
        %v1847 = vmul.f32 %v1824, 39.89423
        %v1848 = vmul.f32 %v1826, 39.89423
        %v1849 = vmul.f32 %v1828, 39.89423
        %v1850 = vmul.f32 %v1830, 39.89423
        %v1851 = vmul.f32 %v1832, 39.89423
        %v1852 = vmul.f32 %v1834, 39.89423
        %v1853 = vmul.f32 %v1836, 39.89423
        %v1854 = vmul.f32 %v1838, 39.89423
        %s1855 = smul.u32 16, 4
        %s1856 = smul.addr %s1855, 8
        %s1857 = scalar_lea.vmem %s255, %s1856 [#allocation2]
        %1858 = vst [vmem:[%s1857] sm:$0xff] %v1839
        %1859 = vst [vmem:[%s1857 + $0x20] sm:$0xff] %v1840
        %1860 = vst [vmem:[%s1857 + $0x40] sm:$0xff] %v1841
        %1861 = vst [vmem:[%s1857 + $0x60] sm:$0xff] %v1842
        %1862 = vst [vmem:[%s1857 + $0x80] sm:$0xff] %v1843
        %1863 = vst [vmem:[%s1857 + $0xa0] sm:$0xff] %v1844
        %1864 = vst [vmem:[%s1857 + $0xc0] sm:$0xff] %v1845
        %1865 = vst [vmem:[%s1857 + $0xe0] sm:$0xff] %v1846
        %1866 = vst [vmem:[%s1857 + $0x100] sm:$0xff] %v1847
        %1867 = vst [vmem:[%s1857 + $0x120] sm:$0xff] %v1848
        %1868 = vst [vmem:[%s1857 + $0x140] sm:$0xff] %v1849
        %1869 = vst [vmem:[%s1857 + $0x160] sm:$0xff] %v1850
        %1870 = vst [vmem:[%s1857 + $0x180] sm:$0xff] %v1851
        %1871 = vst [vmem:[%s1857 + $0x1a0] sm:$0xff] %v1852
        %1872 = vst [vmem:[%s1857 + $0x1c0] sm:$0xff] %v1853
        %1873 = vst [vmem:[%s1857 + $0x1e0] sm:$0xff] %v1854
        %v1874 = vsub.f32 %v295, %v1682
        %v1875 = vsub.f32 %v295, %v1687
        %v1876 = vsub.f32 %v295, %v1692
        %v1877 = vsub.f32 %v295, %v1697
        %v1878 = vsub.f32 %v295, %v1702
        %v1879 = vsub.f32 %v295, %v1707
        %v1880 = vsub.f32 %v295, %v1712
        %v1881 = vsub.f32 %v295, %v1717
        %v1882 = vsub.f32 %v295, %v1722
        %v1883 = vsub.f32 %v295, %v1727
        %v1884 = vsub.f32 %v295, %v1732
        %v1885 = vsub.f32 %v295, %v1737
        %v1886 = vsub.f32 %v295, %v1742
        %v1887 = vsub.f32 %v295, %v1747
        %v1888 = vsub.f32 %v295, %v1752
        %v1889 = vsub.f32 %v295, %v1757
        %v1890 = vmul.f32 %v1874, %v1874
        %v1891 = vmul.f32 %v1875, %v1875
        %v1892 = vmul.f32 %v1876, %v1876
        %v1893 = vmul.f32 %v1877, %v1877
        %v1894 = vmul.f32 %v1878, %v1878
        %v1895 = vmul.f32 %v1879, %v1879
        %v1896 = vmul.f32 %v1880, %v1880
        %v1897 = vmul.f32 %v1881, %v1881
        %v1898 = vmul.f32 %v1882, %v1882
        %v1899 = vmul.f32 %v1883, %v1883
        %v1900 = vmul.f32 %v1884, %v1884
        %v1901 = vmul.f32 %v1885, %v1885
        %v1902 = vmul.f32 %v1886, %v1886
        %v1903 = vmul.f32 %v1887, %v1887
        %v1904 = vmul.f32 %v1888, %v1888
        %v1905 = vmul.f32 %v1889, %v1889
        %v1906 = vsub.f32 0.0, %v1890
        %v1907 = vsub.f32 0.0, %v1891
        %v1908 = vsub.f32 0.0, %v1892
        %v1909 = vsub.f32 0.0, %v1893
        %v1910 = vsub.f32 0.0, %v1894
        %v1911 = vsub.f32 0.0, %v1895
        %v1912 = vsub.f32 0.0, %v1896
        %v1913 = vsub.f32 0.0, %v1897
        %v1914 = vsub.f32 0.0, %v1898
        %v1915 = vsub.f32 0.0, %v1899
        %v1916 = vsub.f32 0.0, %v1900
        %v1917 = vsub.f32 0.0, %v1901
        %v1918 = vsub.f32 0.0, %v1902
        %v1919 = vsub.f32 0.0, %v1903
        %v1920 = vsub.f32 0.0, %v1904
        %v1921 = vsub.f32 0.0, %v1905
        %v1922 = vmul.f32 %v1906, 1.442695
        %v1923 = vpow.pop %v1922
        %v1924 = vmul.f32 %v1907, 1.442695
        %v1925 = vpow.pop %v1924
        %v1926 = vmul.f32 %v1908, 1.442695
        %v1927 = vpow.pop %v1926
        %v1928 = vmul.f32 %v1909, 1.442695
        %v1929 = vpow.pop %v1928
        %v1930 = vmul.f32 %v1910, 1.442695
        %v1931 = vpow.pop %v1930
        %v1932 = vmul.f32 %v1911, 1.442695
        %v1933 = vpow.pop %v1932
        %v1934 = vmul.f32 %v1912, 1.442695
        %v1935 = vpow.pop %v1934
        %v1936 = vmul.f32 %v1913, 1.442695
        %v1937 = vpow.pop %v1936
        %v1938 = vmul.f32 %v1914, 1.442695
        %v1939 = vpow.pop %v1938
        %v1940 = vmul.f32 %v1915, 1.442695
        %v1941 = vpow.pop %v1940
        %v1942 = vmul.f32 %v1916, 1.442695
        %v1943 = vpow.pop %v1942
        %v1944 = vmul.f32 %v1917, 1.442695
        %v1945 = vpow.pop %v1944
        %v1946 = vmul.f32 %v1918, 1.442695
        %v1947 = vpow.pop %v1946
        %v1948 = vmul.f32 %v1919, 1.442695
        %v1949 = vpow.pop %v1948
        %v1950 = vmul.f32 %v1920, 1.442695
        %v1951 = vpow.pop %v1950
        %v1952 = vmul.f32 %v1921, 1.442695
        %v1953 = vpow.pop %v1952
        %v1954 = vmul.f32 %v1923, 39.89423
        %v1955 = vmul.f32 %v1925, 39.89423
        %v1956 = vmul.f32 %v1927, 39.89423
        %v1957 = vmul.f32 %v1929, 39.89423
        %v1958 = vmul.f32 %v1931, 39.89423
        %v1959 = vmul.f32 %v1933, 39.89423
        %v1960 = vmul.f32 %v1935, 39.89423
        %v1961 = vmul.f32 %v1937, 39.89423
        %v1962 = vmul.f32 %v1939, 39.89423
        %v1963 = vmul.f32 %v1941, 39.89423
        %v1964 = vmul.f32 %v1943, 39.89423
        %v1965 = vmul.f32 %v1945, 39.89423
        %v1966 = vmul.f32 %v1947, 39.89423
        %v1967 = vmul.f32 %v1949, 39.89423
        %v1968 = vmul.f32 %v1951, 39.89423
        %v1969 = vmul.f32 %v1953, 39.89423
        %1970 = vst [vmem:[%s1857 + $0x8] sm:$0xff] %v1954
        %1971 = vst [vmem:[%s1857 + $0x28] sm:$0xff] %v1955
        %1972 = vst [vmem:[%s1857 + $0x48] sm:$0xff] %v1956
        %1973 = vst [vmem:[%s1857 + $0x68] sm:$0xff] %v1957
        %1974 = vst [vmem:[%s1857 + $0x88] sm:$0xff] %v1958
        %1975 = vst [vmem:[%s1857 + $0xa8] sm:$0xff] %v1959
        %1976 = vst [vmem:[%s1857 + $0xc8] sm:$0xff] %v1960
        %1977 = vst [vmem:[%s1857 + $0xe8] sm:$0xff] %v1961
        %1978 = vst [vmem:[%s1857 + $0x108] sm:$0xff] %v1962
        %1979 = vst [vmem:[%s1857 + $0x128] sm:$0xff] %v1963
        %1980 = vst [vmem:[%s1857 + $0x148] sm:$0xff] %v1964
        %1981 = vst [vmem:[%s1857 + $0x168] sm:$0xff] %v1965
        %1982 = vst [vmem:[%s1857 + $0x188] sm:$0xff] %v1966
        %1983 = vst [vmem:[%s1857 + $0x1a8] sm:$0xff] %v1967
        %1984 = vst [vmem:[%s1857 + $0x1c8] sm:$0xff] %v1968
        %1985 = vst [vmem:[%s1857 + $0x1e8] sm:$0xff] %v1969
        %1986 = vmatprep.subr.mxu0 0.0
        %1987 = vmatpush1.xpose.msra.mxu0 0.0
        %1988 = vmatprep.subr.mxu0 0.0
        %1989 = vmatpush1.xpose.msra.mxu0 0.0
        %1990 = vmatprep.subr.mxu0 0.0
        %1991 = vmatpush1.xpose.msra.mxu0 0.0
        %1992 = vmatprep.subr.mxu0 0.0
        %1993 = vmatpush1.xpose.msra.mxu0 0.0
        %1994 = vmatprep.subr.mxu0 0.0
        %1995 = vmatpush1.xpose.msra.mxu0 0.0
        %1996 = vmatprep.subr.mxu0 0.0
        %1997 = vmatpush1.xpose.msra.mxu0 0.0
        %1998 = vmatprep.subr.mxu0 0.0
        %1999 = vmatpush1.xpose.msra.mxu0 0.0
        %2000 = vmatprep.subr.mxu0 0.0
        %2001 = vmatpush1.xpose.msra.mxu0 0.0
        %2002 = vmatprep.subr.mxu0 0.0
        %2003 = vmatpush1.xpose.msra.mxu0 0.0
        %2004 = vmatprep.subr.mxu0 0.0
        %2005 = vmatpush1.xpose.msra.mxu0 0.0
        %2006 = vmatprep.subr.mxu0 0.0
        %2007 = vmatpush1.xpose.msra.mxu0 0.0
        %2008 = vmatprep.subr.mxu0 0.0
        %2009 = vmatpush1.xpose.msra.mxu0 0.0
        %2010 = vmatprep.subr.mxu0 0.0
        %2011 = vmatpush1.xpose.msra.mxu0 0.0
        %2012 = vmatprep.subr.mxu0 0.0
        %2013 = vmatpush1.xpose.msra.mxu0 0.0
        %2014 = vmatprep.subr.mxu0 0.0
        %2015 = vmatpush1.xpose.msra.mxu0 0.0
        %2016 = vmatprep.subr.mxu0 0.0
        %2017 = vmatpush1.xpose.msra.mxu0 %v642
        %2018 = vmatprep.subr.mxu0 0.0
        %2019 = vmatpush2.xpose.msra.mxu0 0.0
        %2020 = vmatprep.subr.mxu0 0.0
        %2021 = vmatpush2.xpose.msra.mxu0 0.0
        %2022 = vmatprep.subr.mxu0 0.0
        %2023 = vmatpush2.xpose.msra.mxu0 0.0
        %2024 = vmatprep.subr.mxu0 0.0
        %2025 = vmatpush2.xpose.msra.mxu0 0.0
        %2026 = vmatprep.subr.mxu0 0.0
        %2027 = vmatpush2.xpose.msra.mxu0 0.0
        %2028 = vmatprep.subr.mxu0 0.0
        %2029 = vmatpush2.xpose.msra.mxu0 0.0
        %2030 = vmatprep.subr.mxu0 0.0
        %2031 = vmatpush2.xpose.msra.mxu0 0.0
        %2032 = vmatprep.subr.mxu0 0.0
        %2033 = vmatpush2.xpose.msra.mxu0 0.0
        %2034 = vmatprep.subr.mxu0 0.0
        %2035 = vmatpush2.xpose.msra.mxu0 0.0
        %2036 = vmatprep.subr.mxu0 0.0
        %2037 = vmatpush2.xpose.msra.mxu0 0.0
        %2038 = vmatprep.subr.mxu0 0.0
        %2039 = vmatpush2.xpose.msra.mxu0 0.0
        %2040 = vmatprep.subr.mxu0 0.0
        %2041 = vmatpush2.xpose.msra.mxu0 0.0
        %2042 = vmatprep.subr.mxu0 0.0
        %2043 = vmatpush2.xpose.msra.mxu0 0.0
        %2044 = vmatprep.subr.mxu0 0.0
        %2045 = vmatpush2.xpose.msra.mxu0 0.0
        %2046 = vmatprep.subr.mxu0 0.0
        %2047 = vmatpush2.xpose.msra.mxu0 0.0
        %2048 = vmatprep.subr.mxu0 0.0
        %2049 = vmatpush2.xpose.msra.mxu0 0.0
        %2050 = vmatprep.mubr.f32.mxu0 0.0
        %2051 = vmatmul.mubr.f32.gmra.mxu0 %v1954
        %v2052 = vpop.f32.mrf.mxu0
        %v2053 = vadd.f32 0.0, %v2052
        %v2054 = vpop.f32.mrf.mxu0
        %2055 = vmatprep.mubr.f32.mxu0 0.0
        %2056 = vmatmul.mubr.f32.gmra.mxu0 %v1955
        %v2057 = vpop.f32.mrf.mxu0
        %v2058 = vadd.f32 0.0, %v2057
        %v2059 = vpop.f32.mrf.mxu0
        %2060 = vmatprep.mubr.f32.mxu0 0.0
        %2061 = vmatmul.mubr.f32.gmra.mxu0 %v1956
        %v2062 = vpop.f32.mrf.mxu0
        %v2063 = vadd.f32 0.0, %v2062
        %v2064 = vpop.f32.mrf.mxu0
        %2065 = vmatprep.mubr.f32.mxu0 0.0
        %2066 = vmatmul.mubr.f32.gmra.mxu0 %v1957
        %v2067 = vpop.f32.mrf.mxu0
        %v2068 = vadd.f32 0.0, %v2067
        %v2069 = vpop.f32.mrf.mxu0
        %2070 = vmatprep.mubr.f32.mxu0 0.0
        %2071 = vmatmul.mubr.f32.gmra.mxu0 %v1958
        %v2072 = vpop.f32.mrf.mxu0
        %v2073 = vadd.f32 0.0, %v2072
        %v2074 = vpop.f32.mrf.mxu0
        %2075 = vmatprep.mubr.f32.mxu0 0.0
        %2076 = vmatmul.mubr.f32.gmra.mxu0 %v1959
        %v2077 = vpop.f32.mrf.mxu0
        %v2078 = vadd.f32 0.0, %v2077
        %v2079 = vpop.f32.mrf.mxu0
        %2080 = vmatprep.mubr.f32.mxu0 0.0
        %2081 = vmatmul.mubr.f32.gmra.mxu0 %v1960
        %v2082 = vpop.f32.mrf.mxu0
        %v2083 = vadd.f32 0.0, %v2082
        %v2084 = vpop.f32.mrf.mxu0
        %2085 = vmatprep.mubr.f32.mxu0 0.0
        %2086 = vmatmul.mubr.f32.gmra.mxu0 %v1961
        %v2087 = vpop.f32.mrf.mxu0
        %v2088 = vadd.f32 0.0, %v2087
        %v2089 = vpop.f32.mrf.mxu0
        %2090 = vmatprep.mubr.f32.mxu0 0.0
        %2091 = vmatmul.mubr.f32.gmra.mxu0 %v1962
        %v2092 = vpop.f32.mrf.mxu0
        %v2093 = vadd.f32 0.0, %v2092
        %v2094 = vpop.f32.mrf.mxu0
        %2095 = vmatprep.mubr.f32.mxu0 0.0
        %2096 = vmatmul.mubr.f32.gmra.mxu0 %v1963
        %v2097 = vpop.f32.mrf.mxu0
        %v2098 = vadd.f32 0.0, %v2097
        %v2099 = vpop.f32.mrf.mxu0
        %2100 = vmatprep.mubr.f32.mxu0 0.0
        %2101 = vmatmul.mubr.f32.gmra.mxu0 %v1964
        %v2102 = vpop.f32.mrf.mxu0
        %v2103 = vadd.f32 0.0, %v2102
        %v2104 = vpop.f32.mrf.mxu0
        %2105 = vmatprep.mubr.f32.mxu0 0.0
        %2106 = vmatmul.mubr.f32.gmra.mxu0 %v1965
        %v2107 = vpop.f32.mrf.mxu0
        %v2108 = vadd.f32 0.0, %v2107
        %v2109 = vpop.f32.mrf.mxu0
        %2110 = vmatprep.mubr.f32.mxu0 0.0
        %2111 = vmatmul.mubr.f32.gmra.mxu0 %v1966
        %v2112 = vpop.f32.mrf.mxu0
        %v2113 = vadd.f32 0.0, %v2112
        %v2114 = vpop.f32.mrf.mxu0
        %2115 = vmatprep.mubr.f32.mxu0 0.0
        %2116 = vmatmul.mubr.f32.gmra.mxu0 %v1967
        %v2117 = vpop.f32.mrf.mxu0
        %v2118 = vadd.f32 0.0, %v2117
        %v2119 = vpop.f32.mrf.mxu0
        %2120 = vmatprep.mubr.f32.mxu0 0.0
        %2121 = vmatmul.mubr.f32.gmra.mxu0 %v1968
        %v2122 = vpop.f32.mrf.mxu0
        %v2123 = vadd.f32 0.0, %v2122
        %v2124 = vpop.f32.mrf.mxu0
        %2125 = vmatprep.mubr.f32.mxu0 0.0
        %2126 = vmatmul.mubr.f32.gmra.mxu0 %v1969
        %v2127 = vpop.f32.mrf.mxu0
        %v2128 = vadd.f32 0.0, %v2127
        %v2129 = vpop.f32.mrf.mxu0
        %2130 = vdwg.mxu0
        %2131 = vmatprep.subr.mxu0 0.0
        %2132 = vmatpush1.xpose.msra.mxu0 0.0
        %2133 = vmatprep.subr.mxu0 0.0
        %2134 = vmatpush1.xpose.msra.mxu0 0.0
        %2135 = vmatprep.subr.mxu0 0.0
        %2136 = vmatpush1.xpose.msra.mxu0 0.0
        %2137 = vmatprep.subr.mxu0 0.0
        %2138 = vmatpush1.xpose.msra.mxu0 0.0
        %2139 = vmatprep.subr.mxu0 0.0
        %2140 = vmatpush1.xpose.msra.mxu0 0.0
        %2141 = vmatprep.subr.mxu0 0.0
        %2142 = vmatpush1.xpose.msra.mxu0 0.0
        %2143 = vmatprep.subr.mxu0 0.0
        %2144 = vmatpush1.xpose.msra.mxu0 0.0
        %2145 = vmatprep.subr.mxu0 0.0
        %2146 = vmatpush1.xpose.msra.mxu0 0.0
        %2147 = vmatprep.subr.mxu0 0.0
        %2148 = vmatpush1.xpose.msra.mxu0 0.0
        %2149 = vmatprep.subr.mxu0 0.0
        %2150 = vmatpush1.xpose.msra.mxu0 0.0
        %2151 = vmatprep.subr.mxu0 0.0
        %2152 = vmatpush1.xpose.msra.mxu0 0.0
        %2153 = vmatprep.subr.mxu0 0.0
        %2154 = vmatpush1.xpose.msra.mxu0 0.0
        %2155 = vmatprep.subr.mxu0 0.0
        %2156 = vmatpush1.xpose.msra.mxu0 0.0
        %2157 = vmatprep.subr.mxu0 0.0
        %2158 = vmatpush1.xpose.msra.mxu0 0.0
        %2159 = vmatprep.subr.mxu0 0.0
        %2160 = vmatpush1.xpose.msra.mxu0 0.0
        %2161 = vmatprep.subr.mxu0 0.0
        %2162 = vmatpush1.xpose.msra.mxu0 %v287
        %2163 = vmatprep.subr.mxu0 0.0
        %2164 = vmatpush2.xpose.msra.mxu0 0.0
        %2165 = vmatprep.subr.mxu0 0.0
        %2166 = vmatpush2.xpose.msra.mxu0 0.0
        %2167 = vmatprep.subr.mxu0 0.0
        %2168 = vmatpush2.xpose.msra.mxu0 0.0
        %2169 = vmatprep.subr.mxu0 0.0
        %2170 = vmatpush2.xpose.msra.mxu0 0.0
        %2171 = vmatprep.subr.mxu0 0.0
        %2172 = vmatpush2.xpose.msra.mxu0 0.0
        %2173 = vmatprep.subr.mxu0 0.0
        %2174 = vmatpush2.xpose.msra.mxu0 0.0
        %2175 = vmatprep.subr.mxu0 0.0
        %2176 = vmatpush2.xpose.msra.mxu0 0.0
        %2177 = vmatprep.subr.mxu0 0.0
        %2178 = vmatpush2.xpose.msra.mxu0 0.0
        %2179 = vmatprep.subr.mxu0 0.0
        %2180 = vmatpush2.xpose.msra.mxu0 0.0
        %2181 = vmatprep.subr.mxu0 0.0
        %2182 = vmatpush2.xpose.msra.mxu0 0.0
        %2183 = vmatprep.subr.mxu0 0.0
        %2184 = vmatpush2.xpose.msra.mxu0 0.0
        %2185 = vmatprep.subr.mxu0 0.0
        %2186 = vmatpush2.xpose.msra.mxu0 0.0
        %2187 = vmatprep.subr.mxu0 0.0
        %2188 = vmatpush2.xpose.msra.mxu0 0.0
        %2189 = vmatprep.subr.mxu0 0.0
        %2190 = vmatpush2.xpose.msra.mxu0 0.0
        %2191 = vmatprep.subr.mxu0 0.0
        %2192 = vmatpush2.xpose.msra.mxu0 0.0
        %2193 = vmatprep.subr.mxu0 0.0
        %2194 = vmatpush2.xpose.msra.mxu0 0.0
        %2195 = vmatprep.mubr.f32.mxu0 0.0
        %2196 = vmatmul.mubr.f32.gmra.mxu0 %v1839
        %v2197 = vpop.f32.mrf.mxu0
        %v2198 = vadd.f32 %v2053, %v2197
        %v2199 = vpop.f32.mrf.mxu0
        %2200 = vmatprep.mubr.f32.mxu0 0.0
        %2201 = vmatmul.mubr.f32.gmra.mxu0 %v1840
        %v2202 = vpop.f32.mrf.mxu0
        %v2203 = vadd.f32 %v2058, %v2202
        %v2204 = vpop.f32.mrf.mxu0
        %2205 = vmatprep.mubr.f32.mxu0 0.0
        %2206 = vmatmul.mubr.f32.gmra.mxu0 %v1841
        %v2207 = vpop.f32.mrf.mxu0
        %v2208 = vadd.f32 %v2063, %v2207
        %v2209 = vpop.f32.mrf.mxu0
        %2210 = vmatprep.mubr.f32.mxu0 0.0
        %2211 = vmatmul.mubr.f32.gmra.mxu0 %v1842
        %v2212 = vpop.f32.mrf.mxu0
        %v2213 = vadd.f32 %v2068, %v2212
        %v2214 = vpop.f32.mrf.mxu0
        %2215 = vmatprep.mubr.f32.mxu0 0.0
        %2216 = vmatmul.mubr.f32.gmra.mxu0 %v1843
        %v2217 = vpop.f32.mrf.mxu0
        %v2218 = vadd.f32 %v2073, %v2217
        %v2219 = vpop.f32.mrf.mxu0
        %2220 = vmatprep.mubr.f32.mxu0 0.0
        %2221 = vmatmul.mubr.f32.gmra.mxu0 %v1844
        %v2222 = vpop.f32.mrf.mxu0
        %v2223 = vadd.f32 %v2078, %v2222
        %v2224 = vpop.f32.mrf.mxu0
        %2225 = vmatprep.mubr.f32.mxu0 0.0
        %2226 = vmatmul.mubr.f32.gmra.mxu0 %v1845
        %v2227 = vpop.f32.mrf.mxu0
        %v2228 = vadd.f32 %v2083, %v2227
        %v2229 = vpop.f32.mrf.mxu0
        %2230 = vmatprep.mubr.f32.mxu0 0.0
        %2231 = vmatmul.mubr.f32.gmra.mxu0 %v1846
        %v2232 = vpop.f32.mrf.mxu0
        %v2233 = vadd.f32 %v2088, %v2232
        %v2234 = vpop.f32.mrf.mxu0
        %2235 = vmatprep.mubr.f32.mxu0 0.0
        %2236 = vmatmul.mubr.f32.gmra.mxu0 %v1847
        %v2237 = vpop.f32.mrf.mxu0
        %v2238 = vadd.f32 %v2093, %v2237
        %v2239 = vpop.f32.mrf.mxu0
        %2240 = vmatprep.mubr.f32.mxu0 0.0
        %2241 = vmatmul.mubr.f32.gmra.mxu0 %v1848
        %v2242 = vpop.f32.mrf.mxu0
        %v2243 = vadd.f32 %v2098, %v2242
        %v2244 = vpop.f32.mrf.mxu0
        %2245 = vmatprep.mubr.f32.mxu0 0.0
        %2246 = vmatmul.mubr.f32.gmra.mxu0 %v1849
        %v2247 = vpop.f32.mrf.mxu0
        %v2248 = vadd.f32 %v2103, %v2247
        %v2249 = vpop.f32.mrf.mxu0
        %2250 = vmatprep.mubr.f32.mxu0 0.0
        %2251 = vmatmul.mubr.f32.gmra.mxu0 %v1850
        %v2252 = vpop.f32.mrf.mxu0
        %v2253 = vadd.f32 %v2108, %v2252
        %v2254 = vpop.f32.mrf.mxu0
        %2255 = vmatprep.mubr.f32.mxu0 0.0
        %2256 = vmatmul.mubr.f32.gmra.mxu0 %v1851
        %v2257 = vpop.f32.mrf.mxu0
        %v2258 = vadd.f32 %v2113, %v2257
        %v2259 = vpop.f32.mrf.mxu0
        %2260 = vmatprep.mubr.f32.mxu0 0.0
        %2261 = vmatmul.mubr.f32.gmra.mxu0 %v1852
        %v2262 = vpop.f32.mrf.mxu0
        %v2263 = vadd.f32 %v2118, %v2262
        %v2264 = vpop.f32.mrf.mxu0
        %2265 = vmatprep.mubr.f32.mxu0 0.0
        %2266 = vmatmul.mubr.f32.gmra.mxu0 %v1853
        %v2267 = vpop.f32.mrf.mxu0
        %v2268 = vadd.f32 %v2123, %v2267
        %v2269 = vpop.f32.mrf.mxu0
        %2270 = vmatprep.mubr.f32.mxu0 0.0
        %2271 = vmatmul.mubr.f32.gmra.mxu0 %v1854
        %v2272 = vpop.f32.mrf.mxu0
        %v2273 = vadd.f32 %v2128, %v2272
        %v2274 = vpop.f32.mrf.mxu0
        %2275 = vdwg.mxu0
        %v2276 = vsub.f32 %v298, %v1682
        %v2277 = vsub.f32 %v298, %v1687
        %v2278 = vsub.f32 %v298, %v1692
        %v2279 = vsub.f32 %v298, %v1697
        %v2280 = vsub.f32 %v298, %v1702
        %v2281 = vsub.f32 %v298, %v1707
        %v2282 = vsub.f32 %v298, %v1712
        %v2283 = vsub.f32 %v298, %v1717
        %v2284 = vsub.f32 %v298, %v1722
        %v2285 = vsub.f32 %v298, %v1727
        %v2286 = vsub.f32 %v298, %v1732
        %v2287 = vsub.f32 %v298, %v1737
        %v2288 = vsub.f32 %v298, %v1742
        %v2289 = vsub.f32 %v298, %v1747
        %v2290 = vsub.f32 %v298, %v1752
        %v2291 = vsub.f32 %v298, %v1757
        %v2292 = vmul.f32 %v2276, %v2276
        %v2293 = vmul.f32 %v2277, %v2277
        %v2294 = vmul.f32 %v2278, %v2278
        %v2295 = vmul.f32 %v2279, %v2279
        %v2296 = vmul.f32 %v2280, %v2280
        %v2297 = vmul.f32 %v2281, %v2281
        %v2298 = vmul.f32 %v2282, %v2282
        %v2299 = vmul.f32 %v2283, %v2283
        %v2300 = vmul.f32 %v2284, %v2284
        %v2301 = vmul.f32 %v2285, %v2285
        %v2302 = vmul.f32 %v2286, %v2286
        %v2303 = vmul.f32 %v2287, %v2287
        %v2304 = vmul.f32 %v2288, %v2288
        %v2305 = vmul.f32 %v2289, %v2289
        %v2306 = vmul.f32 %v2290, %v2290
        %v2307 = vmul.f32 %v2291, %v2291
        %v2308 = vsub.f32 0.0, %v2292
        %v2309 = vsub.f32 0.0, %v2293
        %v2310 = vsub.f32 0.0, %v2294
        %v2311 = vsub.f32 0.0, %v2295
        %v2312 = vsub.f32 0.0, %v2296
        %v2313 = vsub.f32 0.0, %v2297
        %v2314 = vsub.f32 0.0, %v2298
        %v2315 = vsub.f32 0.0, %v2299
        %v2316 = vsub.f32 0.0, %v2300
        %v2317 = vsub.f32 0.0, %v2301
        %v2318 = vsub.f32 0.0, %v2302
        %v2319 = vsub.f32 0.0, %v2303
        %v2320 = vsub.f32 0.0, %v2304
        %v2321 = vsub.f32 0.0, %v2305
        %v2322 = vsub.f32 0.0, %v2306
        %v2323 = vsub.f32 0.0, %v2307
        %v2324 = vmul.f32 %v2308, 1.442695
        %v2325 = vpow.pop %v2324
        %v2326 = vmul.f32 %v2309, 1.442695
        %v2327 = vpow.pop %v2326
        %v2328 = vmul.f32 %v2310, 1.442695
        %v2329 = vpow.pop %v2328
        %v2330 = vmul.f32 %v2311, 1.442695
        %v2331 = vpow.pop %v2330
        %v2332 = vmul.f32 %v2312, 1.442695
        %v2333 = vpow.pop %v2332
        %v2334 = vmul.f32 %v2313, 1.442695
        %v2335 = vpow.pop %v2334
        %v2336 = vmul.f32 %v2314, 1.442695
        %v2337 = vpow.pop %v2336
        %v2338 = vmul.f32 %v2315, 1.442695
        %v2339 = vpow.pop %v2338
        %v2340 = vmul.f32 %v2316, 1.442695
        %v2341 = vpow.pop %v2340
        %v2342 = vmul.f32 %v2317, 1.442695
        %v2343 = vpow.pop %v2342
        %v2344 = vmul.f32 %v2318, 1.442695
        %v2345 = vpow.pop %v2344
        %v2346 = vmul.f32 %v2319, 1.442695
        %v2347 = vpow.pop %v2346
        %v2348 = vmul.f32 %v2320, 1.442695
        %v2349 = vpow.pop %v2348
        %v2350 = vmul.f32 %v2321, 1.442695
        %v2351 = vpow.pop %v2350
        %v2352 = vmul.f32 %v2322, 1.442695
        %v2353 = vpow.pop %v2352
        %v2354 = vmul.f32 %v2323, 1.442695
        %v2355 = vpow.pop %v2354
        %v2356 = vmul.f32 %v2325, 39.89423
        %v2357 = vmul.f32 %v2327, 39.89423
        %v2358 = vmul.f32 %v2329, 39.89423
        %v2359 = vmul.f32 %v2331, 39.89423
        %v2360 = vmul.f32 %v2333, 39.89423
        %v2361 = vmul.f32 %v2335, 39.89423
        %v2362 = vmul.f32 %v2337, 39.89423
        %v2363 = vmul.f32 %v2339, 39.89423
        %v2364 = vmul.f32 %v2341, 39.89423
        %v2365 = vmul.f32 %v2343, 39.89423
        %v2366 = vmul.f32 %v2345, 39.89423
        %v2367 = vmul.f32 %v2347, 39.89423
        %v2368 = vmul.f32 %v2349, 39.89423
        %v2369 = vmul.f32 %v2351, 39.89423
        %v2370 = vmul.f32 %v2353, 39.89423
        %v2371 = vmul.f32 %v2355, 39.89423
        %2372 = vst [vmem:[%s1857 + $0x10] sm:$0xff] %v2356
        %2373 = vst [vmem:[%s1857 + $0x30] sm:$0xff] %v2357
        %2374 = vst [vmem:[%s1857 + $0x50] sm:$0xff] %v2358
        %2375 = vst [vmem:[%s1857 + $0x70] sm:$0xff] %v2359
        %2376 = vst [vmem:[%s1857 + $0x90] sm:$0xff] %v2360
        %2377 = vst [vmem:[%s1857 + $0xb0] sm:$0xff] %v2361
        %2378 = vst [vmem:[%s1857 + $0xd0] sm:$0xff] %v2362
        %2379 = vst [vmem:[%s1857 + $0xf0] sm:$0xff] %v2363
        %2380 = vst [vmem:[%s1857 + $0x110] sm:$0xff] %v2364
        %2381 = vst [vmem:[%s1857 + $0x130] sm:$0xff] %v2365
        %2382 = vst [vmem:[%s1857 + $0x150] sm:$0xff] %v2366
        %2383 = vst [vmem:[%s1857 + $0x170] sm:$0xff] %v2367
        %2384 = vst [vmem:[%s1857 + $0x190] sm:$0xff] %v2368
        %2385 = vst [vmem:[%s1857 + $0x1b0] sm:$0xff] %v2369
        %2386 = vst [vmem:[%s1857 + $0x1d0] sm:$0xff] %v2370
        %2387 = vst [vmem:[%s1857 + $0x1f0] sm:$0xff] %v2371
        %2388 = vmatprep.subr.mxu0 0.0
        %2389 = vmatpush1.xpose.msra.mxu0 0.0
        %2390 = vmatprep.subr.mxu0 0.0
        %2391 = vmatpush1.xpose.msra.mxu0 0.0
        %2392 = vmatprep.subr.mxu0 0.0
        %2393 = vmatpush1.xpose.msra.mxu0 0.0
        %2394 = vmatprep.subr.mxu0 0.0
        %2395 = vmatpush1.xpose.msra.mxu0 0.0
        %2396 = vmatprep.subr.mxu0 0.0
        %2397 = vmatpush1.xpose.msra.mxu0 0.0
        %2398 = vmatprep.subr.mxu0 0.0
        %2399 = vmatpush1.xpose.msra.mxu0 0.0
        %2400 = vmatprep.subr.mxu0 0.0
        %2401 = vmatpush1.xpose.msra.mxu0 0.0
        %2402 = vmatprep.subr.mxu0 0.0
        %2403 = vmatpush1.xpose.msra.mxu0 0.0
        %2404 = vmatprep.subr.mxu0 0.0
        %2405 = vmatpush1.xpose.msra.mxu0 0.0
        %2406 = vmatprep.subr.mxu0 0.0
        %2407 = vmatpush1.xpose.msra.mxu0 0.0
        %2408 = vmatprep.subr.mxu0 0.0
        %2409 = vmatpush1.xpose.msra.mxu0 0.0
        %2410 = vmatprep.subr.mxu0 0.0
        %2411 = vmatpush1.xpose.msra.mxu0 0.0
        %2412 = vmatprep.subr.mxu0 0.0
        %2413 = vmatpush1.xpose.msra.mxu0 0.0
        %2414 = vmatprep.subr.mxu0 0.0
        %2415 = vmatpush1.xpose.msra.mxu0 0.0
        %2416 = vmatprep.subr.mxu0 0.0
        %2417 = vmatpush1.xpose.msra.mxu0 0.0
        %2418 = vmatprep.subr.mxu0 0.0
        %2419 = vmatpush1.xpose.msra.mxu0 %v288
        %2420 = vmatprep.subr.mxu0 0.0
        %2421 = vmatpush2.xpose.msra.mxu0 0.0
        %2422 = vmatprep.subr.mxu0 0.0
        %2423 = vmatpush2.xpose.msra.mxu0 0.0
        %2424 = vmatprep.subr.mxu0 0.0
        %2425 = vmatpush2.xpose.msra.mxu0 0.0
        %2426 = vmatprep.subr.mxu0 0.0
        %2427 = vmatpush2.xpose.msra.mxu0 0.0
        %2428 = vmatprep.subr.mxu0 0.0
        %2429 = vmatpush2.xpose.msra.mxu0 0.0
        %2430 = vmatprep.subr.mxu0 0.0
        %2431 = vmatpush2.xpose.msra.mxu0 0.0
        %2432 = vmatprep.subr.mxu0 0.0
        %2433 = vmatpush2.xpose.msra.mxu0 0.0
        %2434 = vmatprep.subr.mxu0 0.0
        %2435 = vmatpush2.xpose.msra.mxu0 0.0
        %2436 = vmatprep.subr.mxu0 0.0
        %2437 = vmatpush2.xpose.msra.mxu0 0.0
        %2438 = vmatprep.subr.mxu0 0.0
        %2439 = vmatpush2.xpose.msra.mxu0 0.0
        %2440 = vmatprep.subr.mxu0 0.0
        %2441 = vmatpush2.xpose.msra.mxu0 0.0
        %2442 = vmatprep.subr.mxu0 0.0
        %2443 = vmatpush2.xpose.msra.mxu0 0.0
        %2444 = vmatprep.subr.mxu0 0.0
        %2445 = vmatpush2.xpose.msra.mxu0 0.0
        %2446 = vmatprep.subr.mxu0 0.0
        %2447 = vmatpush2.xpose.msra.mxu0 0.0
        %2448 = vmatprep.subr.mxu0 0.0
        %2449 = vmatpush2.xpose.msra.mxu0 0.0
        %2450 = vmatprep.subr.mxu0 0.0
        %2451 = vmatpush2.xpose.msra.mxu0 0.0
        %2452 = vmatprep.mubr.f32.mxu0 0.0
        %2453 = vmatmul.mubr.f32.gmra.mxu0 %v2356
        %v2454 = vpop.f32.mrf.mxu0
        %v2455 = vadd.f32 0.0, %v2454
        %v2456 = vpop.f32.mrf.mxu0
        %2457 = vmatprep.mubr.f32.mxu0 0.0
        %2458 = vmatmul.mubr.f32.gmra.mxu0 %v2357
        %v2459 = vpop.f32.mrf.mxu0
        %v2460 = vadd.f32 0.0, %v2459
        %v2461 = vpop.f32.mrf.mxu0
        %2462 = vmatprep.mubr.f32.mxu0 0.0
        %2463 = vmatmul.mubr.f32.gmra.mxu0 %v2358
        %v2464 = vpop.f32.mrf.mxu0
        %v2465 = vadd.f32 0.0, %v2464
        %v2466 = vpop.f32.mrf.mxu0
        %2467 = vmatprep.mubr.f32.mxu0 0.0
        %2468 = vmatmul.mubr.f32.gmra.mxu0 %v2359
        %v2469 = vpop.f32.mrf.mxu0
        %v2470 = vadd.f32 0.0, %v2469
        %v2471 = vpop.f32.mrf.mxu0
        %2472 = vmatprep.mubr.f32.mxu0 0.0
        %2473 = vmatmul.mubr.f32.gmra.mxu0 %v2360
        %v2474 = vpop.f32.mrf.mxu0
        %v2475 = vadd.f32 0.0, %v2474
        %v2476 = vpop.f32.mrf.mxu0
        %2477 = vmatprep.mubr.f32.mxu0 0.0
        %2478 = vmatmul.mubr.f32.gmra.mxu0 %v2361
        %v2479 = vpop.f32.mrf.mxu0
        %v2480 = vadd.f32 0.0, %v2479
        %v2481 = vpop.f32.mrf.mxu0
        %2482 = vmatprep.mubr.f32.mxu0 0.0
        %2483 = vmatmul.mubr.f32.gmra.mxu0 %v2362
        %v2484 = vpop.f32.mrf.mxu0
        %v2485 = vadd.f32 0.0, %v2484
        %v2486 = vpop.f32.mrf.mxu0
        %2487 = vmatprep.mubr.f32.mxu0 0.0
        %2488 = vmatmul.mubr.f32.gmra.mxu0 %v2363
        %v2489 = vpop.f32.mrf.mxu0
        %v2490 = vadd.f32 0.0, %v2489
        %v2491 = vpop.f32.mrf.mxu0
        %2492 = vmatprep.mubr.f32.mxu0 0.0
        %2493 = vmatmul.mubr.f32.gmra.mxu0 %v2364
        %v2494 = vpop.f32.mrf.mxu0
        %v2495 = vadd.f32 0.0, %v2494
        %v2496 = vpop.f32.mrf.mxu0
        %2497 = vmatprep.mubr.f32.mxu0 0.0
        %2498 = vmatmul.mubr.f32.gmra.mxu0 %v2365
        %v2499 = vpop.f32.mrf.mxu0
        %v2500 = vadd.f32 0.0, %v2499
        %v2501 = vpop.f32.mrf.mxu0
        %2502 = vmatprep.mubr.f32.mxu0 0.0
        %2503 = vmatmul.mubr.f32.gmra.mxu0 %v2366
        %v2504 = vpop.f32.mrf.mxu0
        %v2505 = vadd.f32 0.0, %v2504
        %v2506 = vpop.f32.mrf.mxu0
        %2507 = vmatprep.mubr.f32.mxu0 0.0
        %2508 = vmatmul.mubr.f32.gmra.mxu0 %v2367
        %v2509 = vpop.f32.mrf.mxu0
        %v2510 = vadd.f32 0.0, %v2509
        %v2511 = vpop.f32.mrf.mxu0
        %2512 = vmatprep.mubr.f32.mxu0 0.0
        %2513 = vmatmul.mubr.f32.gmra.mxu0 %v2368
        %v2514 = vpop.f32.mrf.mxu0
        %v2515 = vadd.f32 0.0, %v2514
        %v2516 = vpop.f32.mrf.mxu0
        %2517 = vmatprep.mubr.f32.mxu0 0.0
        %2518 = vmatmul.mubr.f32.gmra.mxu0 %v2369
        %v2519 = vpop.f32.mrf.mxu0
        %v2520 = vadd.f32 0.0, %v2519
        %v2521 = vpop.f32.mrf.mxu0
        %2522 = vmatprep.mubr.f32.mxu0 0.0
        %2523 = vmatmul.mubr.f32.gmra.mxu0 %v2370
        %v2524 = vpop.f32.mrf.mxu0
        %v2525 = vadd.f32 0.0, %v2524
        %v2526 = vpop.f32.mrf.mxu0
        %2527 = vmatprep.mubr.f32.mxu0 0.0
        %2528 = vmatmul.mubr.f32.gmra.mxu0 %v2371
        %v2529 = vpop.f32.mrf.mxu0
        %v2530 = vadd.f32 0.0, %v2529
        %v2531 = vpop.f32.mrf.mxu0
        %2532 = vdwg.mxu0
        %v2533 = vadd.f32 %v2198, %v2455
        %v2534 = vadd.f32 %v2203, %v2460
        %v2535 = vadd.f32 %v2208, %v2465
        %v2536 = vadd.f32 %v2213, %v2470
        %v2537 = vadd.f32 %v2218, %v2475
        %v2538 = vadd.f32 %v2223, %v2480
        %v2539 = vadd.f32 %v2228, %v2485
        %v2540 = vadd.f32 %v2233, %v2490
        %v2541 = vadd.f32 %v2238, %v2495
        %v2542 = vadd.f32 %v2243, %v2500
        %v2543 = vadd.f32 %v2248, %v2505
        %v2544 = vadd.f32 %v2253, %v2510
        %v2545 = vadd.f32 %v2258, %v2515
        %v2546 = vadd.f32 %v2263, %v2520
        %v2547 = vadd.f32 %v2268, %v2525
        %v2548 = vadd.f32 %v2273, %v2530
        %v2549 = vsub.f32 %v301, %v1682
        %v2550 = vsub.f32 %v301, %v1687
        %v2551 = vsub.f32 %v301, %v1692
        %v2552 = vsub.f32 %v301, %v1697
        %v2553 = vsub.f32 %v301, %v1702
        %v2554 = vsub.f32 %v301, %v1707
        %v2555 = vsub.f32 %v301, %v1712
        %v2556 = vsub.f32 %v301, %v1717
        %v2557 = vsub.f32 %v301, %v1722
        %v2558 = vsub.f32 %v301, %v1727
        %v2559 = vsub.f32 %v301, %v1732
        %v2560 = vsub.f32 %v301, %v1737
        %v2561 = vsub.f32 %v301, %v1742
        %v2562 = vsub.f32 %v301, %v1747
        %v2563 = vsub.f32 %v301, %v1752
        %v2564 = vsub.f32 %v301, %v1757
        %v2565 = vmul.f32 %v2549, %v2549
        %v2566 = vmul.f32 %v2550, %v2550
        %v2567 = vmul.f32 %v2551, %v2551
        %v2568 = vmul.f32 %v2552, %v2552
        %v2569 = vmul.f32 %v2553, %v2553
        %v2570 = vmul.f32 %v2554, %v2554
        %v2571 = vmul.f32 %v2555, %v2555
        %v2572 = vmul.f32 %v2556, %v2556
        %v2573 = vmul.f32 %v2557, %v2557
        %v2574 = vmul.f32 %v2558, %v2558
        %v2575 = vmul.f32 %v2559, %v2559
        %v2576 = vmul.f32 %v2560, %v2560
        %v2577 = vmul.f32 %v2561, %v2561
        %v2578 = vmul.f32 %v2562, %v2562
        %v2579 = vmul.f32 %v2563, %v2563
        %v2580 = vmul.f32 %v2564, %v2564
        %v2581 = vsub.f32 0.0, %v2565
        %v2582 = vsub.f32 0.0, %v2566
        %v2583 = vsub.f32 0.0, %v2567
        %v2584 = vsub.f32 0.0, %v2568
        %v2585 = vsub.f32 0.0, %v2569
        %v2586 = vsub.f32 0.0, %v2570
        %v2587 = vsub.f32 0.0, %v2571
        %v2588 = vsub.f32 0.0, %v2572
        %v2589 = vsub.f32 0.0, %v2573
        %v2590 = vsub.f32 0.0, %v2574
        %v2591 = vsub.f32 0.0, %v2575
        %v2592 = vsub.f32 0.0, %v2576
        %v2593 = vsub.f32 0.0, %v2577
        %v2594 = vsub.f32 0.0, %v2578
        %v2595 = vsub.f32 0.0, %v2579
        %v2596 = vsub.f32 0.0, %v2580
        %v2597 = vmul.f32 %v2581, 1.442695
        %v2598 = vpow.pop %v2597
        %v2599 = vmul.f32 %v2582, 1.442695
        %v2600 = vpow.pop %v2599
        %v2601 = vmul.f32 %v2583, 1.442695
        %v2602 = vpow.pop %v2601
        %v2603 = vmul.f32 %v2584, 1.442695
        %v2604 = vpow.pop %v2603
        %v2605 = vmul.f32 %v2585, 1.442695
        %v2606 = vpow.pop %v2605
        %v2607 = vmul.f32 %v2586, 1.442695
        %v2608 = vpow.pop %v2607
        %v2609 = vmul.f32 %v2587, 1.442695
        %v2610 = vpow.pop %v2609
        %v2611 = vmul.f32 %v2588, 1.442695
        %v2612 = vpow.pop %v2611
        %v2613 = vmul.f32 %v2589, 1.442695
        %v2614 = vpow.pop %v2613
        %v2615 = vmul.f32 %v2590, 1.442695
        %v2616 = vpow.pop %v2615
        %v2617 = vmul.f32 %v2591, 1.442695
        %v2618 = vpow.pop %v2617
        %v2619 = vmul.f32 %v2592, 1.442695
        %v2620 = vpow.pop %v2619
        %v2621 = vmul.f32 %v2593, 1.442695
        %v2622 = vpow.pop %v2621
        %v2623 = vmul.f32 %v2594, 1.442695
        %v2624 = vpow.pop %v2623
        %v2625 = vmul.f32 %v2595, 1.442695
        %v2626 = vpow.pop %v2625
        %v2627 = vmul.f32 %v2596, 1.442695
        %v2628 = vpow.pop %v2627
        %v2629 = vmul.f32 %v2598, 39.89423
        %v2630 = vmul.f32 %v2600, 39.89423
        %v2631 = vmul.f32 %v2602, 39.89423
        %v2632 = vmul.f32 %v2604, 39.89423
        %v2633 = vmul.f32 %v2606, 39.89423
        %v2634 = vmul.f32 %v2608, 39.89423
        %v2635 = vmul.f32 %v2610, 39.89423
        %v2636 = vmul.f32 %v2612, 39.89423
        %v2637 = vmul.f32 %v2614, 39.89423
        %v2638 = vmul.f32 %v2616, 39.89423
        %v2639 = vmul.f32 %v2618, 39.89423
        %v2640 = vmul.f32 %v2620, 39.89423
        %v2641 = vmul.f32 %v2622, 39.89423
        %v2642 = vmul.f32 %v2624, 39.89423
        %v2643 = vmul.f32 %v2626, 39.89423
        %v2644 = vmul.f32 %v2628, 39.89423
        %2645 = vst [vmem:[%s1857 + $0x18] sm:$0xff] %v2629
        %2646 = vst [vmem:[%s1857 + $0x38] sm:$0xff] %v2630
        %2647 = vst [vmem:[%s1857 + $0x58] sm:$0xff] %v2631
        %2648 = vst [vmem:[%s1857 + $0x78] sm:$0xff] %v2632
        %2649 = vst [vmem:[%s1857 + $0x98] sm:$0xff] %v2633
        %2650 = vst [vmem:[%s1857 + $0xb8] sm:$0xff] %v2634
        %2651 = vst [vmem:[%s1857 + $0xd8] sm:$0xff] %v2635
        %2652 = vst [vmem:[%s1857 + $0xf8] sm:$0xff] %v2636
        %2653 = vst [vmem:[%s1857 + $0x118] sm:$0xff] %v2637
        %2654 = vst [vmem:[%s1857 + $0x138] sm:$0xff] %v2638
        %2655 = vst [vmem:[%s1857 + $0x158] sm:$0xff] %v2639
        %2656 = vst [vmem:[%s1857 + $0x178] sm:$0xff] %v2640
        %2657 = vst [vmem:[%s1857 + $0x198] sm:$0xff] %v2641
        %2658 = vst [vmem:[%s1857 + $0x1b8] sm:$0xff] %v2642
        %2659 = vst [vmem:[%s1857 + $0x1d8] sm:$0xff] %v2643
        %2660 = vst [vmem:[%s1857 + $0x1f8] sm:$0xff] %v2644
        %2661 = vmatprep.subr.mxu0 0.0
        %2662 = vmatpush1.xpose.msra.mxu0 0.0
        %2663 = vmatprep.subr.mxu0 0.0
        %2664 = vmatpush1.xpose.msra.mxu0 0.0
        %2665 = vmatprep.subr.mxu0 0.0
        %2666 = vmatpush1.xpose.msra.mxu0 0.0
        %2667 = vmatprep.subr.mxu0 0.0
        %2668 = vmatpush1.xpose.msra.mxu0 0.0
        %2669 = vmatprep.subr.mxu0 0.0
        %2670 = vmatpush1.xpose.msra.mxu0 0.0
        %2671 = vmatprep.subr.mxu0 0.0
        %2672 = vmatpush1.xpose.msra.mxu0 0.0
        %2673 = vmatprep.subr.mxu0 0.0
        %2674 = vmatpush1.xpose.msra.mxu0 0.0
        %2675 = vmatprep.subr.mxu0 0.0
        %2676 = vmatpush1.xpose.msra.mxu0 0.0
        %2677 = vmatprep.subr.mxu0 0.0
        %2678 = vmatpush1.xpose.msra.mxu0 0.0
        %2679 = vmatprep.subr.mxu0 0.0
        %2680 = vmatpush1.xpose.msra.mxu0 0.0
        %2681 = vmatprep.subr.mxu0 0.0
        %2682 = vmatpush1.xpose.msra.mxu0 0.0
        %2683 = vmatprep.subr.mxu0 0.0
        %2684 = vmatpush1.xpose.msra.mxu0 0.0
        %2685 = vmatprep.subr.mxu0 0.0
        %2686 = vmatpush1.xpose.msra.mxu0 0.0
        %2687 = vmatprep.subr.mxu0 0.0
        %2688 = vmatpush1.xpose.msra.mxu0 0.0
        %2689 = vmatprep.subr.mxu0 0.0
        %2690 = vmatpush1.xpose.msra.mxu0 0.0
        %2691 = vmatprep.subr.mxu0 0.0
        %2692 = vmatpush1.xpose.msra.mxu0 %v1320
        %2693 = vmatprep.subr.mxu0 0.0
        %2694 = vmatpush2.xpose.msra.mxu0 0.0
        %2695 = vmatprep.subr.mxu0 0.0
        %2696 = vmatpush2.xpose.msra.mxu0 0.0
        %2697 = vmatprep.subr.mxu0 0.0
        %2698 = vmatpush2.xpose.msra.mxu0 0.0
        %2699 = vmatprep.subr.mxu0 0.0
        %2700 = vmatpush2.xpose.msra.mxu0 0.0
        %2701 = vmatprep.subr.mxu0 0.0
        %2702 = vmatpush2.xpose.msra.mxu0 0.0
        %2703 = vmatprep.subr.mxu0 0.0
        %2704 = vmatpush2.xpose.msra.mxu0 0.0
        %2705 = vmatprep.subr.mxu0 0.0
        %2706 = vmatpush2.xpose.msra.mxu0 0.0
        %2707 = vmatprep.subr.mxu0 0.0
        %2708 = vmatpush2.xpose.msra.mxu0 0.0
        %2709 = vmatprep.subr.mxu0 0.0
        %2710 = vmatpush2.xpose.msra.mxu0 0.0
        %2711 = vmatprep.subr.mxu0 0.0
        %2712 = vmatpush2.xpose.msra.mxu0 0.0
        %2713 = vmatprep.subr.mxu0 0.0
        %2714 = vmatpush2.xpose.msra.mxu0 0.0
        %2715 = vmatprep.subr.mxu0 0.0
        %2716 = vmatpush2.xpose.msra.mxu0 0.0
        %2717 = vmatprep.subr.mxu0 0.0
        %2718 = vmatpush2.xpose.msra.mxu0 0.0
        %2719 = vmatprep.subr.mxu0 0.0
        %2720 = vmatpush2.xpose.msra.mxu0 0.0
        %2721 = vmatprep.subr.mxu0 0.0
        %2722 = vmatpush2.xpose.msra.mxu0 0.0
        %2723 = vmatprep.subr.mxu0 0.0
        %2724 = vmatpush2.xpose.msra.mxu0 0.0
        %2725 = vmatprep.mubr.f32.mxu0 0.0
        %2726 = vmatmul.mubr.f32.gmra.mxu0 %v2629
        %v2727 = vpop.f32.mrf.mxu0
        %v2728 = vadd.f32 0.0, %v2727
        %v2729 = vpop.f32.mrf.mxu0
        %2730 = vmatprep.mubr.f32.mxu0 0.0
        %2731 = vmatmul.mubr.f32.gmra.mxu0 %v2630
        %v2732 = vpop.f32.mrf.mxu0
        %v2733 = vadd.f32 0.0, %v2732
        %v2734 = vpop.f32.mrf.mxu0
        %2735 = vmatprep.mubr.f32.mxu0 0.0
        %2736 = vmatmul.mubr.f32.gmra.mxu0 %v2631
        %v2737 = vpop.f32.mrf.mxu0
        %v2738 = vadd.f32 0.0, %v2737
        %v2739 = vpop.f32.mrf.mxu0
        %2740 = vmatprep.mubr.f32.mxu0 0.0
        %2741 = vmatmul.mubr.f32.gmra.mxu0 %v2632
        %v2742 = vpop.f32.mrf.mxu0
        %v2743 = vadd.f32 0.0, %v2742
        %v2744 = vpop.f32.mrf.mxu0
        %2745 = vmatprep.mubr.f32.mxu0 0.0
        %2746 = vmatmul.mubr.f32.gmra.mxu0 %v2633
        %v2747 = vpop.f32.mrf.mxu0
        %v2748 = vadd.f32 0.0, %v2747
        %v2749 = vpop.f32.mrf.mxu0
        %2750 = vmatprep.mubr.f32.mxu0 0.0
        %2751 = vmatmul.mubr.f32.gmra.mxu0 %v2634
        %v2752 = vpop.f32.mrf.mxu0
        %v2753 = vadd.f32 0.0, %v2752
        %v2754 = vpop.f32.mrf.mxu0
        %2755 = vmatprep.mubr.f32.mxu0 0.0
        %2756 = vmatmul.mubr.f32.gmra.mxu0 %v2635
        %v2757 = vpop.f32.mrf.mxu0
        %v2758 = vadd.f32 0.0, %v2757
        %v2759 = vpop.f32.mrf.mxu0
        %2760 = vmatprep.mubr.f32.mxu0 0.0
        %2761 = vmatmul.mubr.f32.gmra.mxu0 %v2636
        %v2762 = vpop.f32.mrf.mxu0
        %v2763 = vadd.f32 0.0, %v2762
        %v2764 = vpop.f32.mrf.mxu0
        %2765 = vmatprep.mubr.f32.mxu0 0.0
        %2766 = vmatmul.mubr.f32.gmra.mxu0 %v2637
        %v2767 = vpop.f32.mrf.mxu0
        %v2768 = vadd.f32 0.0, %v2767
        %v2769 = vpop.f32.mrf.mxu0
        %2770 = vmatprep.mubr.f32.mxu0 0.0
        %2771 = vmatmul.mubr.f32.gmra.mxu0 %v2638
        %v2772 = vpop.f32.mrf.mxu0
        %v2773 = vadd.f32 0.0, %v2772
        %v2774 = vpop.f32.mrf.mxu0
        %2775 = vmatprep.mubr.f32.mxu0 0.0
        %2776 = vmatmul.mubr.f32.gmra.mxu0 %v2639
        %v2777 = vpop.f32.mrf.mxu0
        %v2778 = vadd.f32 0.0, %v2777
        %v2779 = vpop.f32.mrf.mxu0
        %2780 = vmatprep.mubr.f32.mxu0 0.0
        %2781 = vmatmul.mubr.f32.gmra.mxu0 %v2640
        %v2782 = vpop.f32.mrf.mxu0
        %v2783 = vadd.f32 0.0, %v2782
        %v2784 = vpop.f32.mrf.mxu0
        %2785 = vmatprep.mubr.f32.mxu0 0.0
        %2786 = vmatmul.mubr.f32.gmra.mxu0 %v2641
        %v2787 = vpop.f32.mrf.mxu0
        %v2788 = vadd.f32 0.0, %v2787
        %v2789 = vpop.f32.mrf.mxu0
        %2790 = vmatprep.mubr.f32.mxu0 0.0
        %2791 = vmatmul.mubr.f32.gmra.mxu0 %v2642
        %v2792 = vpop.f32.mrf.mxu0
        %v2793 = vadd.f32 0.0, %v2792
        %v2794 = vpop.f32.mrf.mxu0
        %2795 = vmatprep.mubr.f32.mxu0 0.0
        %2796 = vmatmul.mubr.f32.gmra.mxu0 %v2643
        %v2797 = vpop.f32.mrf.mxu0
        %v2798 = vadd.f32 0.0, %v2797
        %v2799 = vpop.f32.mrf.mxu0
        %2800 = vmatprep.mubr.f32.mxu0 0.0
        %2801 = vmatmul.mubr.f32.gmra.mxu0 %v2644
        %v2802 = vpop.f32.mrf.mxu0
        %v2803 = vadd.f32 0.0, %v2802
        %v2804 = vpop.f32.mrf.mxu0
        %2805 = vdwg.mxu0
        %v2806 = vadd.f32 %v2533, %v2728
        %v2807 = vadd.f32 %v2534, %v2733
        %v2808 = vadd.f32 %v2535, %v2738
        %v2809 = vadd.f32 %v2536, %v2743
        %v2810 = vadd.f32 %v2537, %v2748
        %v2811 = vadd.f32 %v2538, %v2753
        %v2812 = vadd.f32 %v2539, %v2758
        %v2813 = vadd.f32 %v2540, %v2763
        %v2814 = vadd.f32 %v2541, %v2768
        %v2815 = vadd.f32 %v2542, %v2773
        %v2816 = vadd.f32 %v2543, %v2778
        %v2817 = vadd.f32 %v2544, %v2783
        %v2818 = vadd.f32 %v2545, %v2788
        %v2819 = vadd.f32 %v2546, %v2793
        %v2820 = vadd.f32 %v2547, %v2798
        %v2821 = vadd.f32 %v2548, %v2803
        %v2822 = vmul.f32 %v1646, %v2806
        %v2823 = vmul.f32 %v1647, %v2807
        %v2824 = vmul.f32 %v1648, %v2808
        %v2825 = vmul.f32 %v1649, %v2809
        %v2826 = vmul.f32 %v1650, %v2810
        %v2827 = vmul.f32 %v1651, %v2811
        %v2828 = vmul.f32 %v1652, %v2812
        %v2829 = vmul.f32 %v1653, %v2813
        %v2830 = vmul.f32 %v1654, %v2814
        %v2831 = vmul.f32 %v1655, %v2815
        %v2832 = vmul.f32 %v1656, %v2816
        %v2833 = vmul.f32 %v1657, %v2817
        %v2834 = vmul.f32 %v1658, %v2818
        %v2835 = vmul.f32 %v1659, %v2819
        %v2836 = vmul.f32 %v1660, %v2820
        %v2837 = vmul.f32 %v1661, %v2821
        %v2838 = vsel %vm1499, %v2822, 0.0
        %2839 = vadd.xlane.f32.xlu0 %v2838
        %v2840 = vpop.xlane.xlu0 %2839
        %v2841 = vsel %vm1499, %v2823, 0.0
        %2842 = vadd.xlane.f32.xlu0 %v2841
        %v2843 = vpop.xlane.xlu0 %2842
        %v2844 = vsel %vm1499, %v2824, 0.0
        %2845 = vadd.xlane.f32.xlu0 %v2844
        %v2846 = vpop.xlane.xlu0 %2845
        %v2847 = vsel %vm1499, %v2825, 0.0
        %2848 = vadd.xlane.f32.xlu0 %v2847
        %v2849 = vpop.xlane.xlu0 %2848
        %v2850 = vsel %vm1499, %v2826, 0.0
        %2851 = vadd.xlane.f32.xlu0 %v2850
        %v2852 = vpop.xlane.xlu0 %2851
        %v2853 = vsel %vm1499, %v2827, 0.0
        %2854 = vadd.xlane.f32.xlu0 %v2853
        %v2855 = vpop.xlane.xlu0 %2854
        %v2856 = vsel %vm1499, %v2828, 0.0
        %2857 = vadd.xlane.f32.xlu0 %v2856
        %v2858 = vpop.xlane.xlu0 %2857
        %v2859 = vsel %vm1499, %v2829, 0.0
        %2860 = vadd.xlane.f32.xlu0 %v2859
        %v2861 = vpop.xlane.xlu0 %2860
        %v2862 = vsel %vm1499, %v2830, 0.0
        %2863 = vadd.xlane.f32.xlu0 %v2862
        %v2864 = vpop.xlane.xlu0 %2863
        %v2865 = vsel %vm1499, %v2831, 0.0
        %2866 = vadd.xlane.f32.xlu0 %v2865
        %v2867 = vpop.xlane.xlu0 %2866
        %v2868 = vsel %vm1499, %v2832, 0.0
        %2869 = vadd.xlane.f32.xlu0 %v2868
        %v2870 = vpop.xlane.xlu0 %2869
        %v2871 = vsel %vm1499, %v2833, 0.0
        %2872 = vadd.xlane.f32.xlu0 %v2871
        %v2873 = vpop.xlane.xlu0 %2872
        %v2874 = vsel %vm1499, %v2834, 0.0
        %2875 = vadd.xlane.f32.xlu0 %v2874
        %v2876 = vpop.xlane.xlu0 %2875
        %v2877 = vsel %vm1499, %v2835, 0.0
        %2878 = vadd.xlane.f32.xlu0 %v2877
        %v2879 = vpop.xlane.xlu0 %2878
        %v2880 = vsel %vm1499, %v2836, 0.0
        %2881 = vadd.xlane.f32.xlu0 %v2880
        %v2882 = vpop.xlane.xlu0 %2881
        %v2883 = vsel %vm1499, %v2837, 0.0
        %2884 = vadd.xlane.f32.xlu0 %v2883
        %v2885 = vpop.xlane.xlu0 %2884
        %v2886 = vmul.f32 %v2840, %v1663
        %v2887 = vmul.f32 %v2843, %v1664
        %v2888 = vmul.f32 %v2846, %v1665
        %v2889 = vmul.f32 %v2849, %v1666
        %v2890 = vmul.f32 %v2852, %v1667
        %v2891 = vmul.f32 %v2855, %v1668
        %v2892 = vmul.f32 %v2858, %v1669
        %v2893 = vmul.f32 %v2861, %v1670
        %v2894 = vmul.f32 %v2864, %v1671
        %v2895 = vmul.f32 %v2867, %v1672
        %v2896 = vmul.f32 %v2870, %v1673
        %v2897 = vmul.f32 %v2873, %v1674
        %v2898 = vmul.f32 %v2876, %v1675
        %v2899 = vmul.f32 %v2879, %v1676
        %v2900 = vmul.f32 %v2882, %v1677
        %v2901 = vmul.f32 %v2885, %v1678
        %2918 = vrot.lane.b32.xlu0 %v2886, 127
        %v2919 = vpop.permute.xlu0 %2918
        %2920 = vrot.lane.b32.xlu0 %v2887, 127
        %v2921 = vpop.permute.xlu0 %2920
        %2922 = vrot.lane.b32.xlu0 %v2888, 127
        %v2923 = vpop.permute.xlu0 %2922
        %2924 = vrot.lane.b32.xlu0 %v2889, 127
        %v2925 = vpop.permute.xlu0 %2924
        %2926 = vrot.lane.b32.xlu0 %v2890, 127
        %v2927 = vpop.permute.xlu0 %2926
        %2928 = vrot.lane.b32.xlu0 %v2891, 127
        %v2929 = vpop.permute.xlu0 %2928
        %2930 = vrot.lane.b32.xlu0 %v2892, 127
        %v2931 = vpop.permute.xlu0 %2930
        %2932 = vrot.lane.b32.xlu0 %v2893, 127
        %v2933 = vpop.permute.xlu0 %2932
        %2934 = vrot.lane.b32.xlu0 %v2894, 127
        %v2935 = vpop.permute.xlu0 %2934
        %2936 = vrot.lane.b32.xlu0 %v2895, 127
        %v2937 = vpop.permute.xlu0 %2936
        %2938 = vrot.lane.b32.xlu0 %v2896, 127
        %v2939 = vpop.permute.xlu0 %2938
        %2940 = vrot.lane.b32.xlu0 %v2897, 127
        %v2941 = vpop.permute.xlu0 %2940
        %2942 = vrot.lane.b32.xlu0 %v2898, 127
        %v2943 = vpop.permute.xlu0 %2942
        %2944 = vrot.lane.b32.xlu0 %v2899, 127
        %v2945 = vpop.permute.xlu0 %2944
        %2946 = vrot.lane.b32.xlu0 %v2900, 127
        %v2947 = vpop.permute.xlu0 %2946
        %2948 = vrot.lane.b32.xlu0 %v2901, 127
        %v2949 = vpop.permute.xlu0 %2948
        %s2966 = scalar_lea.vmem %s284, 128
        %2967 = vst.msk [vmem:[%s2966] sm:$0xff] %vm1628, %v2919
        %2968 = vst.msk [vmem:[%s2966 + $0x8] sm:$0xff] %vm1628, %v2921
        %2969 = vst.msk [vmem:[%s2966 + $0x10] sm:$0xff] %vm1628, %v2923
        %2970 = vst.msk [vmem:[%s2966 + $0x18] sm:$0xff] %vm1628, %v2925
        %2971 = vst.msk [vmem:[%s2966 + $0x20] sm:$0xff] %vm1628, %v2927
        %2972 = vst.msk [vmem:[%s2966 + $0x28] sm:$0xff] %vm1628, %v2929
        %2973 = vst.msk [vmem:[%s2966 + $0x30] sm:$0xff] %vm1628, %v2931
        %2974 = vst.msk [vmem:[%s2966 + $0x38] sm:$0xff] %vm1628, %v2933
        %2975 = vst.msk [vmem:[%s2966 + $0x40] sm:$0xff] %vm1628, %v2935
        %2976 = vst.msk [vmem:[%s2966 + $0x48] sm:$0xff] %vm1628, %v2937
        %2977 = vst.msk [vmem:[%s2966 + $0x50] sm:$0xff] %vm1628, %v2939
        %2978 = vst.msk [vmem:[%s2966 + $0x58] sm:$0xff] %vm1628, %v2941
        %2979 = vst.msk [vmem:[%s2966 + $0x60] sm:$0xff] %vm1628, %v2943
        %2980 = vst.msk [vmem:[%s2966 + $0x68] sm:$0xff] %vm1628, %v2945
        %2981 = vst.msk [vmem:[%s2966 + $0x70] sm:$0xff] %vm1628, %v2947
        %2982 = vst.msk [vmem:[%s2966 + $0x78] sm:$0xff] %vm1628, %v2949
        %s2983 = scalar_lea.vmem %s264, 256
        %v2984 = vld [vmem:[%s2983] sm:$0xff]
        %v2985 = vld [vmem:[%s2983 + $0x8] sm:$0xff]
        %v2986 = vld [vmem:[%s2983 + $0x10] sm:$0xff]
        %v2987 = vld [vmem:[%s2983 + $0x18] sm:$0xff]
        %v2988 = vld [vmem:[%s2983 + $0x20] sm:$0xff]
        %v2989 = vld [vmem:[%s2983 + $0x28] sm:$0xff]
        %v2990 = vld [vmem:[%s2983 + $0x30] sm:$0xff]
        %v2991 = vld [vmem:[%s2983 + $0x38] sm:$0xff]
        %v2992 = vld [vmem:[%s2983 + $0x40] sm:$0xff]
        %v2993 = vld [vmem:[%s2983 + $0x48] sm:$0xff]
        %v2994 = vld [vmem:[%s2983 + $0x50] sm:$0xff]
        %v2995 = vld [vmem:[%s2983 + $0x58] sm:$0xff]
        %v2996 = vld [vmem:[%s2983 + $0x60] sm:$0xff]
        %v2997 = vld [vmem:[%s2983 + $0x68] sm:$0xff]
        %v2998 = vld [vmem:[%s2983 + $0x70] sm:$0xff]
        %v2999 = vld [vmem:[%s2983 + $0x78] sm:$0xff]
        %s3000 = scalar_lea.vmem %s274, 256
        %v3001 = vld [vmem:[%s3000] sm:$0xff]
        %v3002 = vld [vmem:[%s3000 + $0x8] sm:$0xff]
        %v3003 = vld [vmem:[%s3000 + $0x10] sm:$0xff]
        %v3004 = vld [vmem:[%s3000 + $0x18] sm:$0xff]
        %v3005 = vld [vmem:[%s3000 + $0x20] sm:$0xff]
        %v3006 = vld [vmem:[%s3000 + $0x28] sm:$0xff]
        %v3007 = vld [vmem:[%s3000 + $0x30] sm:$0xff]
        %v3008 = vld [vmem:[%s3000 + $0x38] sm:$0xff]
        %v3009 = vld [vmem:[%s3000 + $0x40] sm:$0xff]
        %v3010 = vld [vmem:[%s3000 + $0x48] sm:$0xff]
        %v3011 = vld [vmem:[%s3000 + $0x50] sm:$0xff]
        %v3012 = vld [vmem:[%s3000 + $0x58] sm:$0xff]
        %v3013 = vld [vmem:[%s3000 + $0x60] sm:$0xff]
        %v3014 = vld [vmem:[%s3000 + $0x68] sm:$0xff]
        %v3015 = vld [vmem:[%s3000 + $0x70] sm:$0xff]
        %v3016 = vld [vmem:[%s3000 + $0x78] sm:$0xff]
        %3018 = vset.pattern.permute.xlu0 0
        %3019 = vperm.xlu0 %3018, %v3001
        %v3020 = vpop.permute.xlu0 %3019
        %3023 = vset.pattern.permute.xlu0 0
        %3024 = vperm.xlu0 %3023, %v3002
        %v3025 = vpop.permute.xlu0 %3024
        %3028 = vset.pattern.permute.xlu0 0
        %3029 = vperm.xlu0 %3028, %v3003
        %v3030 = vpop.permute.xlu0 %3029
        %3033 = vset.pattern.permute.xlu0 0
        %3034 = vperm.xlu0 %3033, %v3004
        %v3035 = vpop.permute.xlu0 %3034
        %3038 = vset.pattern.permute.xlu0 0
        %3039 = vperm.xlu0 %3038, %v3005
        %v3040 = vpop.permute.xlu0 %3039
        %3043 = vset.pattern.permute.xlu0 0
        %3044 = vperm.xlu0 %3043, %v3006
        %v3045 = vpop.permute.xlu0 %3044
        %3048 = vset.pattern.permute.xlu0 0
        %3049 = vperm.xlu0 %3048, %v3007
        %v3050 = vpop.permute.xlu0 %3049
        %3053 = vset.pattern.permute.xlu0 0
        %3054 = vperm.xlu0 %3053, %v3008
        %v3055 = vpop.permute.xlu0 %3054
        %3058 = vset.pattern.permute.xlu0 0
        %3059 = vperm.xlu0 %3058, %v3009
        %v3060 = vpop.permute.xlu0 %3059
        %3063 = vset.pattern.permute.xlu0 0
        %3064 = vperm.xlu0 %3063, %v3010
        %v3065 = vpop.permute.xlu0 %3064
        %3068 = vset.pattern.permute.xlu0 0
        %3069 = vperm.xlu0 %3068, %v3011
        %v3070 = vpop.permute.xlu0 %3069
        %3073 = vset.pattern.permute.xlu0 0
        %3074 = vperm.xlu0 %3073, %v3012
        %v3075 = vpop.permute.xlu0 %3074
        %3078 = vset.pattern.permute.xlu0 0
        %3079 = vperm.xlu0 %3078, %v3013
        %v3080 = vpop.permute.xlu0 %3079
        %3083 = vset.pattern.permute.xlu0 0
        %3084 = vperm.xlu0 %3083, %v3014
        %v3085 = vpop.permute.xlu0 %3084
        %3088 = vset.pattern.permute.xlu0 0
        %3089 = vperm.xlu0 %3088, %v3015
        %v3090 = vpop.permute.xlu0 %3089
        %3093 = vset.pattern.permute.xlu0 0
        %3094 = vperm.xlu0 %3093, %v3016
        %v3095 = vpop.permute.xlu0 %3094
        %v3097 = vsub.f32 %v292, %v3020
        %v3098 = vsub.f32 %v292, %v3025
        %v3099 = vsub.f32 %v292, %v3030
        %v3100 = vsub.f32 %v292, %v3035
        %v3101 = vsub.f32 %v292, %v3040
        %v3102 = vsub.f32 %v292, %v3045
        %v3103 = vsub.f32 %v292, %v3050
        %v3104 = vsub.f32 %v292, %v3055
        %v3105 = vsub.f32 %v292, %v3060
        %v3106 = vsub.f32 %v292, %v3065
        %v3107 = vsub.f32 %v292, %v3070
        %v3108 = vsub.f32 %v292, %v3075
        %v3109 = vsub.f32 %v292, %v3080
        %v3110 = vsub.f32 %v292, %v3085
        %v3111 = vsub.f32 %v292, %v3090
        %v3112 = vsub.f32 %v292, %v3095
        %v3113 = vmul.f32 %v3097, %v3097
        %v3114 = vmul.f32 %v3098, %v3098
        %v3115 = vmul.f32 %v3099, %v3099
        %v3116 = vmul.f32 %v3100, %v3100
        %v3117 = vmul.f32 %v3101, %v3101
        %v3118 = vmul.f32 %v3102, %v3102
        %v3119 = vmul.f32 %v3103, %v3103
        %v3120 = vmul.f32 %v3104, %v3104
        %v3121 = vmul.f32 %v3105, %v3105
        %v3122 = vmul.f32 %v3106, %v3106
        %v3123 = vmul.f32 %v3107, %v3107
        %v3124 = vmul.f32 %v3108, %v3108
        %v3125 = vmul.f32 %v3109, %v3109
        %v3126 = vmul.f32 %v3110, %v3110
        %v3127 = vmul.f32 %v3111, %v3111
        %v3128 = vmul.f32 %v3112, %v3112
        %v3129 = vsub.f32 0.0, %v3113
        %v3130 = vsub.f32 0.0, %v3114
        %v3131 = vsub.f32 0.0, %v3115
        %v3132 = vsub.f32 0.0, %v3116
        %v3133 = vsub.f32 0.0, %v3117
        %v3134 = vsub.f32 0.0, %v3118
        %v3135 = vsub.f32 0.0, %v3119
        %v3136 = vsub.f32 0.0, %v3120
        %v3137 = vsub.f32 0.0, %v3121
        %v3138 = vsub.f32 0.0, %v3122
        %v3139 = vsub.f32 0.0, %v3123
        %v3140 = vsub.f32 0.0, %v3124
        %v3141 = vsub.f32 0.0, %v3125
        %v3142 = vsub.f32 0.0, %v3126
        %v3143 = vsub.f32 0.0, %v3127
        %v3144 = vsub.f32 0.0, %v3128
        %v3145 = vmul.f32 %v3129, 1.442695
        %v3146 = vpow.pop %v3145
        %v3147 = vmul.f32 %v3130, 1.442695
        %v3148 = vpow.pop %v3147
        %v3149 = vmul.f32 %v3131, 1.442695
        %v3150 = vpow.pop %v3149
        %v3151 = vmul.f32 %v3132, 1.442695
        %v3152 = vpow.pop %v3151
        %v3153 = vmul.f32 %v3133, 1.442695
        %v3154 = vpow.pop %v3153
        %v3155 = vmul.f32 %v3134, 1.442695
        %v3156 = vpow.pop %v3155
        %v3157 = vmul.f32 %v3135, 1.442695
        %v3158 = vpow.pop %v3157
        %v3159 = vmul.f32 %v3136, 1.442695
        %v3160 = vpow.pop %v3159
        %v3161 = vmul.f32 %v3137, 1.442695
        %v3162 = vpow.pop %v3161
        %v3163 = vmul.f32 %v3138, 1.442695
        %v3164 = vpow.pop %v3163
        %v3165 = vmul.f32 %v3139, 1.442695
        %v3166 = vpow.pop %v3165
        %v3167 = vmul.f32 %v3140, 1.442695
        %v3168 = vpow.pop %v3167
        %v3169 = vmul.f32 %v3141, 1.442695
        %v3170 = vpow.pop %v3169
        %v3171 = vmul.f32 %v3142, 1.442695
        %v3172 = vpow.pop %v3171
        %v3173 = vmul.f32 %v3143, 1.442695
        %v3174 = vpow.pop %v3173
        %v3175 = vmul.f32 %v3144, 1.442695
        %v3176 = vpow.pop %v3175
        %v3177 = vmul.f32 %v3146, 39.89423
        %v3178 = vmul.f32 %v3148, 39.89423
        %v3179 = vmul.f32 %v3150, 39.89423
        %v3180 = vmul.f32 %v3152, 39.89423
        %v3181 = vmul.f32 %v3154, 39.89423
        %v3182 = vmul.f32 %v3156, 39.89423
        %v3183 = vmul.f32 %v3158, 39.89423
        %v3184 = vmul.f32 %v3160, 39.89423
        %v3185 = vmul.f32 %v3162, 39.89423
        %v3186 = vmul.f32 %v3164, 39.89423
        %v3187 = vmul.f32 %v3166, 39.89423
        %v3188 = vmul.f32 %v3168, 39.89423
        %v3189 = vmul.f32 %v3170, 39.89423
        %v3190 = vmul.f32 %v3172, 39.89423
        %v3191 = vmul.f32 %v3174, 39.89423
        %v3192 = vmul.f32 %v3176, 39.89423
        %s3193 = smul.u32 32, 4
        %s3194 = smul.addr %s3193, 8
        %s3195 = scalar_lea.vmem %s255, %s3194 [#allocation2]
        %3196 = vst [vmem:[%s3195] sm:$0xff] %v3177
        %3197 = vst [vmem:[%s3195 + $0x20] sm:$0xff] %v3178
        %3198 = vst [vmem:[%s3195 + $0x40] sm:$0xff] %v3179
        %3199 = vst [vmem:[%s3195 + $0x60] sm:$0xff] %v3180
        %3200 = vst [vmem:[%s3195 + $0x80] sm:$0xff] %v3181
        %3201 = vst [vmem:[%s3195 + $0xa0] sm:$0xff] %v3182
        %3202 = vst [vmem:[%s3195 + $0xc0] sm:$0xff] %v3183
        %3203 = vst [vmem:[%s3195 + $0xe0] sm:$0xff] %v3184
        %3204 = vst [vmem:[%s3195 + $0x100] sm:$0xff] %v3185
        %3205 = vst [vmem:[%s3195 + $0x120] sm:$0xff] %v3186
        %3206 = vst [vmem:[%s3195 + $0x140] sm:$0xff] %v3187
        %3207 = vst [vmem:[%s3195 + $0x160] sm:$0xff] %v3188
        %3208 = vst [vmem:[%s3195 + $0x180] sm:$0xff] %v3189
        %3209 = vst [vmem:[%s3195 + $0x1a0] sm:$0xff] %v3190
        %3210 = vst [vmem:[%s3195 + $0x1c0] sm:$0xff] %v3191
        %3211 = vst [vmem:[%s3195 + $0x1e0] sm:$0xff] %v3192
        %v3212 = vsub.f32 %v295, %v3020
        %v3213 = vsub.f32 %v295, %v3025
        %v3214 = vsub.f32 %v295, %v3030
        %v3215 = vsub.f32 %v295, %v3035
        %v3216 = vsub.f32 %v295, %v3040
        %v3217 = vsub.f32 %v295, %v3045
        %v3218 = vsub.f32 %v295, %v3050
        %v3219 = vsub.f32 %v295, %v3055
        %v3220 = vsub.f32 %v295, %v3060
        %v3221 = vsub.f32 %v295, %v3065
        %v3222 = vsub.f32 %v295, %v3070
        %v3223 = vsub.f32 %v295, %v3075
        %v3224 = vsub.f32 %v295, %v3080
        %v3225 = vsub.f32 %v295, %v3085
        %v3226 = vsub.f32 %v295, %v3090
        %v3227 = vsub.f32 %v295, %v3095
        %v3228 = vmul.f32 %v3212, %v3212
        %v3229 = vmul.f32 %v3213, %v3213
        %v3230 = vmul.f32 %v3214, %v3214
        %v3231 = vmul.f32 %v3215, %v3215
        %v3232 = vmul.f32 %v3216, %v3216
        %v3233 = vmul.f32 %v3217, %v3217
        %v3234 = vmul.f32 %v3218, %v3218
        %v3235 = vmul.f32 %v3219, %v3219
        %v3236 = vmul.f32 %v3220, %v3220
        %v3237 = vmul.f32 %v3221, %v3221
        %v3238 = vmul.f32 %v3222, %v3222
        %v3239 = vmul.f32 %v3223, %v3223
        %v3240 = vmul.f32 %v3224, %v3224
        %v3241 = vmul.f32 %v3225, %v3225
        %v3242 = vmul.f32 %v3226, %v3226
        %v3243 = vmul.f32 %v3227, %v3227
        %v3244 = vsub.f32 0.0, %v3228
        %v3245 = vsub.f32 0.0, %v3229
        %v3246 = vsub.f32 0.0, %v3230
        %v3247 = vsub.f32 0.0, %v3231
        %v3248 = vsub.f32 0.0, %v3232
        %v3249 = vsub.f32 0.0, %v3233
        %v3250 = vsub.f32 0.0, %v3234
        %v3251 = vsub.f32 0.0, %v3235
        %v3252 = vsub.f32 0.0, %v3236
        %v3253 = vsub.f32 0.0, %v3237
        %v3254 = vsub.f32 0.0, %v3238
        %v3255 = vsub.f32 0.0, %v3239
        %v3256 = vsub.f32 0.0, %v3240
        %v3257 = vsub.f32 0.0, %v3241
        %v3258 = vsub.f32 0.0, %v3242
        %v3259 = vsub.f32 0.0, %v3243
        %v3260 = vmul.f32 %v3244, 1.442695
        %v3261 = vpow.pop %v3260
        %v3262 = vmul.f32 %v3245, 1.442695
        %v3263 = vpow.pop %v3262
        %v3264 = vmul.f32 %v3246, 1.442695
        %v3265 = vpow.pop %v3264
        %v3266 = vmul.f32 %v3247, 1.442695
        %v3267 = vpow.pop %v3266
        %v3268 = vmul.f32 %v3248, 1.442695
        %v3269 = vpow.pop %v3268
        %v3270 = vmul.f32 %v3249, 1.442695
        %v3271 = vpow.pop %v3270
        %v3272 = vmul.f32 %v3250, 1.442695
        %v3273 = vpow.pop %v3272
        %v3274 = vmul.f32 %v3251, 1.442695
        %v3275 = vpow.pop %v3274
        %v3276 = vmul.f32 %v3252, 1.442695
        %v3277 = vpow.pop %v3276
        %v3278 = vmul.f32 %v3253, 1.442695
        %v3279 = vpow.pop %v3278
        %v3280 = vmul.f32 %v3254, 1.442695
        %v3281 = vpow.pop %v3280
        %v3282 = vmul.f32 %v3255, 1.442695
        %v3283 = vpow.pop %v3282
        %v3284 = vmul.f32 %v3256, 1.442695
        %v3285 = vpow.pop %v3284
        %v3286 = vmul.f32 %v3257, 1.442695
        %v3287 = vpow.pop %v3286
        %v3288 = vmul.f32 %v3258, 1.442695
        %v3289 = vpow.pop %v3288
        %v3290 = vmul.f32 %v3259, 1.442695
        %v3291 = vpow.pop %v3290
        %v3292 = vmul.f32 %v3261, 39.89423
        %v3293 = vmul.f32 %v3263, 39.89423
        %v3294 = vmul.f32 %v3265, 39.89423
        %v3295 = vmul.f32 %v3267, 39.89423
        %v3296 = vmul.f32 %v3269, 39.89423
        %v3297 = vmul.f32 %v3271, 39.89423
        %v3298 = vmul.f32 %v3273, 39.89423
        %v3299 = vmul.f32 %v3275, 39.89423
        %v3300 = vmul.f32 %v3277, 39.89423
        %v3301 = vmul.f32 %v3279, 39.89423
        %v3302 = vmul.f32 %v3281, 39.89423
        %v3303 = vmul.f32 %v3283, 39.89423
        %v3304 = vmul.f32 %v3285, 39.89423
        %v3305 = vmul.f32 %v3287, 39.89423
        %v3306 = vmul.f32 %v3289, 39.89423
        %v3307 = vmul.f32 %v3291, 39.89423
        %3308 = vst [vmem:[%s3195 + $0x8] sm:$0xff] %v3292
        %3309 = vst [vmem:[%s3195 + $0x28] sm:$0xff] %v3293
        %3310 = vst [vmem:[%s3195 + $0x48] sm:$0xff] %v3294
        %3311 = vst [vmem:[%s3195 + $0x68] sm:$0xff] %v3295
        %3312 = vst [vmem:[%s3195 + $0x88] sm:$0xff] %v3296
        %3313 = vst [vmem:[%s3195 + $0xa8] sm:$0xff] %v3297
        %3314 = vst [vmem:[%s3195 + $0xc8] sm:$0xff] %v3298
        %3315 = vst [vmem:[%s3195 + $0xe8] sm:$0xff] %v3299
        %3316 = vst [vmem:[%s3195 + $0x108] sm:$0xff] %v3300
        %3317 = vst [vmem:[%s3195 + $0x128] sm:$0xff] %v3301
        %3318 = vst [vmem:[%s3195 + $0x148] sm:$0xff] %v3302
        %3319 = vst [vmem:[%s3195 + $0x168] sm:$0xff] %v3303
        %3320 = vst [vmem:[%s3195 + $0x188] sm:$0xff] %v3304
        %3321 = vst [vmem:[%s3195 + $0x1a8] sm:$0xff] %v3305
        %3322 = vst [vmem:[%s3195 + $0x1c8] sm:$0xff] %v3306
        %3323 = vst [vmem:[%s3195 + $0x1e8] sm:$0xff] %v3307
        %3324 = vmatprep.subr.mxu0 0.0
        %3325 = vmatpush1.xpose.msra.mxu0 0.0
        %3326 = vmatprep.subr.mxu0 0.0
        %3327 = vmatpush1.xpose.msra.mxu0 0.0
        %3328 = vmatprep.subr.mxu0 0.0
        %3329 = vmatpush1.xpose.msra.mxu0 0.0
        %3330 = vmatprep.subr.mxu0 0.0
        %3331 = vmatpush1.xpose.msra.mxu0 0.0
        %3332 = vmatprep.subr.mxu0 0.0
        %3333 = vmatpush1.xpose.msra.mxu0 0.0
        %3334 = vmatprep.subr.mxu0 0.0
        %3335 = vmatpush1.xpose.msra.mxu0 0.0
        %3336 = vmatprep.subr.mxu0 0.0
        %3337 = vmatpush1.xpose.msra.mxu0 0.0
        %3338 = vmatprep.subr.mxu0 0.0
        %3339 = vmatpush1.xpose.msra.mxu0 0.0
        %3340 = vmatprep.subr.mxu0 0.0
        %3341 = vmatpush1.xpose.msra.mxu0 0.0
        %3342 = vmatprep.subr.mxu0 0.0
        %3343 = vmatpush1.xpose.msra.mxu0 0.0
        %3344 = vmatprep.subr.mxu0 0.0
        %3345 = vmatpush1.xpose.msra.mxu0 0.0
        %3346 = vmatprep.subr.mxu0 0.0
        %3347 = vmatpush1.xpose.msra.mxu0 0.0
        %3348 = vmatprep.subr.mxu0 0.0
        %3349 = vmatpush1.xpose.msra.mxu0 0.0
        %3350 = vmatprep.subr.mxu0 0.0
        %3351 = vmatpush1.xpose.msra.mxu0 0.0
        %3352 = vmatprep.subr.mxu0 0.0
        %3353 = vmatpush1.xpose.msra.mxu0 0.0
        %3354 = vmatprep.subr.mxu0 0.0
        %3355 = vmatpush1.xpose.msra.mxu0 %v642
        %3356 = vmatprep.subr.mxu0 0.0
        %3357 = vmatpush2.xpose.msra.mxu0 0.0
        %3358 = vmatprep.subr.mxu0 0.0
        %3359 = vmatpush2.xpose.msra.mxu0 0.0
        %3360 = vmatprep.subr.mxu0 0.0
        %3361 = vmatpush2.xpose.msra.mxu0 0.0
        %3362 = vmatprep.subr.mxu0 0.0
        %3363 = vmatpush2.xpose.msra.mxu0 0.0
        %3364 = vmatprep.subr.mxu0 0.0
        %3365 = vmatpush2.xpose.msra.mxu0 0.0
        %3366 = vmatprep.subr.mxu0 0.0
        %3367 = vmatpush2.xpose.msra.mxu0 0.0
        %3368 = vmatprep.subr.mxu0 0.0
        %3369 = vmatpush2.xpose.msra.mxu0 0.0
        %3370 = vmatprep.subr.mxu0 0.0
        %3371 = vmatpush2.xpose.msra.mxu0 0.0
        %3372 = vmatprep.subr.mxu0 0.0
        %3373 = vmatpush2.xpose.msra.mxu0 0.0
        %3374 = vmatprep.subr.mxu0 0.0
        %3375 = vmatpush2.xpose.msra.mxu0 0.0
        %3376 = vmatprep.subr.mxu0 0.0
        %3377 = vmatpush2.xpose.msra.mxu0 0.0
        %3378 = vmatprep.subr.mxu0 0.0
        %3379 = vmatpush2.xpose.msra.mxu0 0.0
        %3380 = vmatprep.subr.mxu0 0.0
        %3381 = vmatpush2.xpose.msra.mxu0 0.0
        %3382 = vmatprep.subr.mxu0 0.0
        %3383 = vmatpush2.xpose.msra.mxu0 0.0
        %3384 = vmatprep.subr.mxu0 0.0
        %3385 = vmatpush2.xpose.msra.mxu0 0.0
        %3386 = vmatprep.subr.mxu0 0.0
        %3387 = vmatpush2.xpose.msra.mxu0 0.0
        %3388 = vmatprep.mubr.f32.mxu0 0.0
        %3389 = vmatmul.mubr.f32.gmra.mxu0 %v3292
        %v3390 = vpop.f32.mrf.mxu0
        %v3391 = vadd.f32 0.0, %v3390
        %v3392 = vpop.f32.mrf.mxu0
        %3393 = vmatprep.mubr.f32.mxu0 0.0
        %3394 = vmatmul.mubr.f32.gmra.mxu0 %v3293
        %v3395 = vpop.f32.mrf.mxu0
        %v3396 = vadd.f32 0.0, %v3395
        %v3397 = vpop.f32.mrf.mxu0
        %3398 = vmatprep.mubr.f32.mxu0 0.0
        %3399 = vmatmul.mubr.f32.gmra.mxu0 %v3294
        %v3400 = vpop.f32.mrf.mxu0
        %v3401 = vadd.f32 0.0, %v3400
        %v3402 = vpop.f32.mrf.mxu0
        %3403 = vmatprep.mubr.f32.mxu0 0.0
        %3404 = vmatmul.mubr.f32.gmra.mxu0 %v3295
        %v3405 = vpop.f32.mrf.mxu0
        %v3406 = vadd.f32 0.0, %v3405
        %v3407 = vpop.f32.mrf.mxu0
        %3408 = vmatprep.mubr.f32.mxu0 0.0
        %3409 = vmatmul.mubr.f32.gmra.mxu0 %v3296
        %v3410 = vpop.f32.mrf.mxu0
        %v3411 = vadd.f32 0.0, %v3410
        %v3412 = vpop.f32.mrf.mxu0
        %3413 = vmatprep.mubr.f32.mxu0 0.0
        %3414 = vmatmul.mubr.f32.gmra.mxu0 %v3297
        %v3415 = vpop.f32.mrf.mxu0
        %v3416 = vadd.f32 0.0, %v3415
        %v3417 = vpop.f32.mrf.mxu0
        %3418 = vmatprep.mubr.f32.mxu0 0.0
        %3419 = vmatmul.mubr.f32.gmra.mxu0 %v3298
        %v3420 = vpop.f32.mrf.mxu0
        %v3421 = vadd.f32 0.0, %v3420
        %v3422 = vpop.f32.mrf.mxu0
        %3423 = vmatprep.mubr.f32.mxu0 0.0
        %3424 = vmatmul.mubr.f32.gmra.mxu0 %v3299
        %v3425 = vpop.f32.mrf.mxu0
        %v3426 = vadd.f32 0.0, %v3425
        %v3427 = vpop.f32.mrf.mxu0
        %3428 = vmatprep.mubr.f32.mxu0 0.0
        %3429 = vmatmul.mubr.f32.gmra.mxu0 %v3300
        %v3430 = vpop.f32.mrf.mxu0
        %v3431 = vadd.f32 0.0, %v3430
        %v3432 = vpop.f32.mrf.mxu0
        %3433 = vmatprep.mubr.f32.mxu0 0.0
        %3434 = vmatmul.mubr.f32.gmra.mxu0 %v3301
        %v3435 = vpop.f32.mrf.mxu0
        %v3436 = vadd.f32 0.0, %v3435
        %v3437 = vpop.f32.mrf.mxu0
        %3438 = vmatprep.mubr.f32.mxu0 0.0
        %3439 = vmatmul.mubr.f32.gmra.mxu0 %v3302
        %v3440 = vpop.f32.mrf.mxu0
        %v3441 = vadd.f32 0.0, %v3440
        %v3442 = vpop.f32.mrf.mxu0
        %3443 = vmatprep.mubr.f32.mxu0 0.0
        %3444 = vmatmul.mubr.f32.gmra.mxu0 %v3303
        %v3445 = vpop.f32.mrf.mxu0
        %v3446 = vadd.f32 0.0, %v3445
        %v3447 = vpop.f32.mrf.mxu0
        %3448 = vmatprep.mubr.f32.mxu0 0.0
        %3449 = vmatmul.mubr.f32.gmra.mxu0 %v3304
        %v3450 = vpop.f32.mrf.mxu0
        %v3451 = vadd.f32 0.0, %v3450
        %v3452 = vpop.f32.mrf.mxu0
        %3453 = vmatprep.mubr.f32.mxu0 0.0
        %3454 = vmatmul.mubr.f32.gmra.mxu0 %v3305
        %v3455 = vpop.f32.mrf.mxu0
        %v3456 = vadd.f32 0.0, %v3455
        %v3457 = vpop.f32.mrf.mxu0
        %3458 = vmatprep.mubr.f32.mxu0 0.0
        %3459 = vmatmul.mubr.f32.gmra.mxu0 %v3306
        %v3460 = vpop.f32.mrf.mxu0
        %v3461 = vadd.f32 0.0, %v3460
        %v3462 = vpop.f32.mrf.mxu0
        %3463 = vmatprep.mubr.f32.mxu0 0.0
        %3464 = vmatmul.mubr.f32.gmra.mxu0 %v3307
        %v3465 = vpop.f32.mrf.mxu0
        %v3466 = vadd.f32 0.0, %v3465
        %v3467 = vpop.f32.mrf.mxu0
        %3468 = vdwg.mxu0
        %3469 = vmatprep.subr.mxu0 0.0
        %3470 = vmatpush1.xpose.msra.mxu0 0.0
        %3471 = vmatprep.subr.mxu0 0.0
        %3472 = vmatpush1.xpose.msra.mxu0 0.0
        %3473 = vmatprep.subr.mxu0 0.0
        %3474 = vmatpush1.xpose.msra.mxu0 0.0
        %3475 = vmatprep.subr.mxu0 0.0
        %3476 = vmatpush1.xpose.msra.mxu0 0.0
        %3477 = vmatprep.subr.mxu0 0.0
        %3478 = vmatpush1.xpose.msra.mxu0 0.0
        %3479 = vmatprep.subr.mxu0 0.0
        %3480 = vmatpush1.xpose.msra.mxu0 0.0
        %3481 = vmatprep.subr.mxu0 0.0
        %3482 = vmatpush1.xpose.msra.mxu0 0.0
        %3483 = vmatprep.subr.mxu0 0.0
        %3484 = vmatpush1.xpose.msra.mxu0 0.0
        %3485 = vmatprep.subr.mxu0 0.0
        %3486 = vmatpush1.xpose.msra.mxu0 0.0
        %3487 = vmatprep.subr.mxu0 0.0
        %3488 = vmatpush1.xpose.msra.mxu0 0.0
        %3489 = vmatprep.subr.mxu0 0.0
        %3490 = vmatpush1.xpose.msra.mxu0 0.0
        %3491 = vmatprep.subr.mxu0 0.0
        %3492 = vmatpush1.xpose.msra.mxu0 0.0
        %3493 = vmatprep.subr.mxu0 0.0
        %3494 = vmatpush1.xpose.msra.mxu0 0.0
        %3495 = vmatprep.subr.mxu0 0.0
        %3496 = vmatpush1.xpose.msra.mxu0 0.0
        %3497 = vmatprep.subr.mxu0 0.0
        %3498 = vmatpush1.xpose.msra.mxu0 0.0
        %3499 = vmatprep.subr.mxu0 0.0
        %3500 = vmatpush1.xpose.msra.mxu0 %v287
        %3501 = vmatprep.subr.mxu0 0.0
        %3502 = vmatpush2.xpose.msra.mxu0 0.0
        %3503 = vmatprep.subr.mxu0 0.0
        %3504 = vmatpush2.xpose.msra.mxu0 0.0
        %3505 = vmatprep.subr.mxu0 0.0
        %3506 = vmatpush2.xpose.msra.mxu0 0.0
        %3507 = vmatprep.subr.mxu0 0.0
        %3508 = vmatpush2.xpose.msra.mxu0 0.0
        %3509 = vmatprep.subr.mxu0 0.0
        %3510 = vmatpush2.xpose.msra.mxu0 0.0
        %3511 = vmatprep.subr.mxu0 0.0
        %3512 = vmatpush2.xpose.msra.mxu0 0.0
        %3513 = vmatprep.subr.mxu0 0.0
        %3514 = vmatpush2.xpose.msra.mxu0 0.0
        %3515 = vmatprep.subr.mxu0 0.0
        %3516 = vmatpush2.xpose.msra.mxu0 0.0
        %3517 = vmatprep.subr.mxu0 0.0
        %3518 = vmatpush2.xpose.msra.mxu0 0.0
        %3519 = vmatprep.subr.mxu0 0.0
        %3520 = vmatpush2.xpose.msra.mxu0 0.0
        %3521 = vmatprep.subr.mxu0 0.0
        %3522 = vmatpush2.xpose.msra.mxu0 0.0
        %3523 = vmatprep.subr.mxu0 0.0
        %3524 = vmatpush2.xpose.msra.mxu0 0.0
        %3525 = vmatprep.subr.mxu0 0.0
        %3526 = vmatpush2.xpose.msra.mxu0 0.0
        %3527 = vmatprep.subr.mxu0 0.0
        %3528 = vmatpush2.xpose.msra.mxu0 0.0
        %3529 = vmatprep.subr.mxu0 0.0
        %3530 = vmatpush2.xpose.msra.mxu0 0.0
        %3531 = vmatprep.subr.mxu0 0.0
        %3532 = vmatpush2.xpose.msra.mxu0 0.0
        %3533 = vmatprep.mubr.f32.mxu0 0.0
        %3534 = vmatmul.mubr.f32.gmra.mxu0 %v3177
        %v3535 = vpop.f32.mrf.mxu0
        %v3536 = vadd.f32 %v3391, %v3535
        %v3537 = vpop.f32.mrf.mxu0
        %3538 = vmatprep.mubr.f32.mxu0 0.0
        %3539 = vmatmul.mubr.f32.gmra.mxu0 %v3178
        %v3540 = vpop.f32.mrf.mxu0
        %v3541 = vadd.f32 %v3396, %v3540
        %v3542 = vpop.f32.mrf.mxu0
        %3543 = vmatprep.mubr.f32.mxu0 0.0
        %3544 = vmatmul.mubr.f32.gmra.mxu0 %v3179
        %v3545 = vpop.f32.mrf.mxu0
        %v3546 = vadd.f32 %v3401, %v3545
        %v3547 = vpop.f32.mrf.mxu0
        %3548 = vmatprep.mubr.f32.mxu0 0.0
        %3549 = vmatmul.mubr.f32.gmra.mxu0 %v3180
        %v3550 = vpop.f32.mrf.mxu0
        %v3551 = vadd.f32 %v3406, %v3550
        %v3552 = vpop.f32.mrf.mxu0
        %3553 = vmatprep.mubr.f32.mxu0 0.0
        %3554 = vmatmul.mubr.f32.gmra.mxu0 %v3181
        %v3555 = vpop.f32.mrf.mxu0
        %v3556 = vadd.f32 %v3411, %v3555
        %v3557 = vpop.f32.mrf.mxu0
        %3558 = vmatprep.mubr.f32.mxu0 0.0
        %3559 = vmatmul.mubr.f32.gmra.mxu0 %v3182
        %v3560 = vpop.f32.mrf.mxu0
        %v3561 = vadd.f32 %v3416, %v3560
        %v3562 = vpop.f32.mrf.mxu0
        %3563 = vmatprep.mubr.f32.mxu0 0.0
        %3564 = vmatmul.mubr.f32.gmra.mxu0 %v3183
        %v3565 = vpop.f32.mrf.mxu0
        %v3566 = vadd.f32 %v3421, %v3565
        %v3567 = vpop.f32.mrf.mxu0
        %3568 = vmatprep.mubr.f32.mxu0 0.0
        %3569 = vmatmul.mubr.f32.gmra.mxu0 %v3184
        %v3570 = vpop.f32.mrf.mxu0
        %v3571 = vadd.f32 %v3426, %v3570
        %v3572 = vpop.f32.mrf.mxu0
        %3573 = vmatprep.mubr.f32.mxu0 0.0
        %3574 = vmatmul.mubr.f32.gmra.mxu0 %v3185
        %v3575 = vpop.f32.mrf.mxu0
        %v3576 = vadd.f32 %v3431, %v3575
        %v3577 = vpop.f32.mrf.mxu0
        %3578 = vmatprep.mubr.f32.mxu0 0.0
        %3579 = vmatmul.mubr.f32.gmra.mxu0 %v3186
        %v3580 = vpop.f32.mrf.mxu0
        %v3581 = vadd.f32 %v3436, %v3580
        %v3582 = vpop.f32.mrf.mxu0
        %3583 = vmatprep.mubr.f32.mxu0 0.0
        %3584 = vmatmul.mubr.f32.gmra.mxu0 %v3187
        %v3585 = vpop.f32.mrf.mxu0
        %v3586 = vadd.f32 %v3441, %v3585
        %v3587 = vpop.f32.mrf.mxu0
        %3588 = vmatprep.mubr.f32.mxu0 0.0
        %3589 = vmatmul.mubr.f32.gmra.mxu0 %v3188
        %v3590 = vpop.f32.mrf.mxu0
        %v3591 = vadd.f32 %v3446, %v3590
        %v3592 = vpop.f32.mrf.mxu0
        %3593 = vmatprep.mubr.f32.mxu0 0.0
        %3594 = vmatmul.mubr.f32.gmra.mxu0 %v3189
        %v3595 = vpop.f32.mrf.mxu0
        %v3596 = vadd.f32 %v3451, %v3595
        %v3597 = vpop.f32.mrf.mxu0
        %3598 = vmatprep.mubr.f32.mxu0 0.0
        %3599 = vmatmul.mubr.f32.gmra.mxu0 %v3190
        %v3600 = vpop.f32.mrf.mxu0
        %v3601 = vadd.f32 %v3456, %v3600
        %v3602 = vpop.f32.mrf.mxu0
        %3603 = vmatprep.mubr.f32.mxu0 0.0
        %3604 = vmatmul.mubr.f32.gmra.mxu0 %v3191
        %v3605 = vpop.f32.mrf.mxu0
        %v3606 = vadd.f32 %v3461, %v3605
        %v3607 = vpop.f32.mrf.mxu0
        %3608 = vmatprep.mubr.f32.mxu0 0.0
        %3609 = vmatmul.mubr.f32.gmra.mxu0 %v3192
        %v3610 = vpop.f32.mrf.mxu0
        %v3611 = vadd.f32 %v3466, %v3610
        %v3612 = vpop.f32.mrf.mxu0
        %3613 = vdwg.mxu0
        %v3614 = vsub.f32 %v298, %v3020
        %v3615 = vsub.f32 %v298, %v3025
        %v3616 = vsub.f32 %v298, %v3030
        %v3617 = vsub.f32 %v298, %v3035
        %v3618 = vsub.f32 %v298, %v3040
        %v3619 = vsub.f32 %v298, %v3045
        %v3620 = vsub.f32 %v298, %v3050
        %v3621 = vsub.f32 %v298, %v3055
        %v3622 = vsub.f32 %v298, %v3060
        %v3623 = vsub.f32 %v298, %v3065
        %v3624 = vsub.f32 %v298, %v3070
        %v3625 = vsub.f32 %v298, %v3075
        %v3626 = vsub.f32 %v298, %v3080
        %v3627 = vsub.f32 %v298, %v3085
        %v3628 = vsub.f32 %v298, %v3090
        %v3629 = vsub.f32 %v298, %v3095
        %v3630 = vmul.f32 %v3614, %v3614
        %v3631 = vmul.f32 %v3615, %v3615
        %v3632 = vmul.f32 %v3616, %v3616
        %v3633 = vmul.f32 %v3617, %v3617
        %v3634 = vmul.f32 %v3618, %v3618
        %v3635 = vmul.f32 %v3619, %v3619
        %v3636 = vmul.f32 %v3620, %v3620
        %v3637 = vmul.f32 %v3621, %v3621
        %v3638 = vmul.f32 %v3622, %v3622
        %v3639 = vmul.f32 %v3623, %v3623
        %v3640 = vmul.f32 %v3624, %v3624
        %v3641 = vmul.f32 %v3625, %v3625
        %v3642 = vmul.f32 %v3626, %v3626
        %v3643 = vmul.f32 %v3627, %v3627
        %v3644 = vmul.f32 %v3628, %v3628
        %v3645 = vmul.f32 %v3629, %v3629
        %v3646 = vsub.f32 0.0, %v3630
        %v3647 = vsub.f32 0.0, %v3631
        %v3648 = vsub.f32 0.0, %v3632
        %v3649 = vsub.f32 0.0, %v3633
        %v3650 = vsub.f32 0.0, %v3634
        %v3651 = vsub.f32 0.0, %v3635
        %v3652 = vsub.f32 0.0, %v3636
        %v3653 = vsub.f32 0.0, %v3637
        %v3654 = vsub.f32 0.0, %v3638
        %v3655 = vsub.f32 0.0, %v3639
        %v3656 = vsub.f32 0.0, %v3640
        %v3657 = vsub.f32 0.0, %v3641
        %v3658 = vsub.f32 0.0, %v3642
        %v3659 = vsub.f32 0.0, %v3643
        %v3660 = vsub.f32 0.0, %v3644
        %v3661 = vsub.f32 0.0, %v3645
        %v3662 = vmul.f32 %v3646, 1.442695
        %v3663 = vpow.pop %v3662
        %v3664 = vmul.f32 %v3647, 1.442695
        %v3665 = vpow.pop %v3664
        %v3666 = vmul.f32 %v3648, 1.442695
        %v3667 = vpow.pop %v3666
        %v3668 = vmul.f32 %v3649, 1.442695
        %v3669 = vpow.pop %v3668
        %v3670 = vmul.f32 %v3650, 1.442695
        %v3671 = vpow.pop %v3670
        %v3672 = vmul.f32 %v3651, 1.442695
        %v3673 = vpow.pop %v3672
        %v3674 = vmul.f32 %v3652, 1.442695
        %v3675 = vpow.pop %v3674
        %v3676 = vmul.f32 %v3653, 1.442695
        %v3677 = vpow.pop %v3676
        %v3678 = vmul.f32 %v3654, 1.442695
        %v3679 = vpow.pop %v3678
        %v3680 = vmul.f32 %v3655, 1.442695
        %v3681 = vpow.pop %v3680
        %v3682 = vmul.f32 %v3656, 1.442695
        %v3683 = vpow.pop %v3682
        %v3684 = vmul.f32 %v3657, 1.442695
        %v3685 = vpow.pop %v3684
        %v3686 = vmul.f32 %v3658, 1.442695
        %v3687 = vpow.pop %v3686
        %v3688 = vmul.f32 %v3659, 1.442695
        %v3689 = vpow.pop %v3688
        %v3690 = vmul.f32 %v3660, 1.442695
        %v3691 = vpow.pop %v3690
        %v3692 = vmul.f32 %v3661, 1.442695
        %v3693 = vpow.pop %v3692
        %v3694 = vmul.f32 %v3663, 39.89423
        %v3695 = vmul.f32 %v3665, 39.89423
        %v3696 = vmul.f32 %v3667, 39.89423
        %v3697 = vmul.f32 %v3669, 39.89423
        %v3698 = vmul.f32 %v3671, 39.89423
        %v3699 = vmul.f32 %v3673, 39.89423
        %v3700 = vmul.f32 %v3675, 39.89423
        %v3701 = vmul.f32 %v3677, 39.89423
        %v3702 = vmul.f32 %v3679, 39.89423
        %v3703 = vmul.f32 %v3681, 39.89423
        %v3704 = vmul.f32 %v3683, 39.89423
        %v3705 = vmul.f32 %v3685, 39.89423
        %v3706 = vmul.f32 %v3687, 39.89423
        %v3707 = vmul.f32 %v3689, 39.89423
        %v3708 = vmul.f32 %v3691, 39.89423
        %v3709 = vmul.f32 %v3693, 39.89423
        %3710 = vst [vmem:[%s3195 + $0x10] sm:$0xff] %v3694
        %3711 = vst [vmem:[%s3195 + $0x30] sm:$0xff] %v3695
        %3712 = vst [vmem:[%s3195 + $0x50] sm:$0xff] %v3696
        %3713 = vst [vmem:[%s3195 + $0x70] sm:$0xff] %v3697
        %3714 = vst [vmem:[%s3195 + $0x90] sm:$0xff] %v3698
        %3715 = vst [vmem:[%s3195 + $0xb0] sm:$0xff] %v3699
        %3716 = vst [vmem:[%s3195 + $0xd0] sm:$0xff] %v3700
        %3717 = vst [vmem:[%s3195 + $0xf0] sm:$0xff] %v3701
        %3718 = vst [vmem:[%s3195 + $0x110] sm:$0xff] %v3702
        %3719 = vst [vmem:[%s3195 + $0x130] sm:$0xff] %v3703
        %3720 = vst [vmem:[%s3195 + $0x150] sm:$0xff] %v3704
        %3721 = vst [vmem:[%s3195 + $0x170] sm:$0xff] %v3705
        %3722 = vst [vmem:[%s3195 + $0x190] sm:$0xff] %v3706
        %3723 = vst [vmem:[%s3195 + $0x1b0] sm:$0xff] %v3707
        %3724 = vst [vmem:[%s3195 + $0x1d0] sm:$0xff] %v3708
        %3725 = vst [vmem:[%s3195 + $0x1f0] sm:$0xff] %v3709
        %3726 = vmatprep.subr.mxu0 0.0
        %3727 = vmatpush1.xpose.msra.mxu0 0.0
        %3728 = vmatprep.subr.mxu0 0.0
        %3729 = vmatpush1.xpose.msra.mxu0 0.0
        %3730 = vmatprep.subr.mxu0 0.0
        %3731 = vmatpush1.xpose.msra.mxu0 0.0
        %3732 = vmatprep.subr.mxu0 0.0
        %3733 = vmatpush1.xpose.msra.mxu0 0.0
        %3734 = vmatprep.subr.mxu0 0.0
        %3735 = vmatpush1.xpose.msra.mxu0 0.0
        %3736 = vmatprep.subr.mxu0 0.0
        %3737 = vmatpush1.xpose.msra.mxu0 0.0
        %3738 = vmatprep.subr.mxu0 0.0
        %3739 = vmatpush1.xpose.msra.mxu0 0.0
        %3740 = vmatprep.subr.mxu0 0.0
        %3741 = vmatpush1.xpose.msra.mxu0 0.0
        %3742 = vmatprep.subr.mxu0 0.0
        %3743 = vmatpush1.xpose.msra.mxu0 0.0
        %3744 = vmatprep.subr.mxu0 0.0
        %3745 = vmatpush1.xpose.msra.mxu0 0.0
        %3746 = vmatprep.subr.mxu0 0.0
        %3747 = vmatpush1.xpose.msra.mxu0 0.0
        %3748 = vmatprep.subr.mxu0 0.0
        %3749 = vmatpush1.xpose.msra.mxu0 0.0
        %3750 = vmatprep.subr.mxu0 0.0
        %3751 = vmatpush1.xpose.msra.mxu0 0.0
        %3752 = vmatprep.subr.mxu0 0.0
        %3753 = vmatpush1.xpose.msra.mxu0 0.0
        %3754 = vmatprep.subr.mxu0 0.0
        %3755 = vmatpush1.xpose.msra.mxu0 0.0
        %3756 = vmatprep.subr.mxu0 0.0
        %3757 = vmatpush1.xpose.msra.mxu0 %v288
        %3758 = vmatprep.subr.mxu0 0.0
        %3759 = vmatpush2.xpose.msra.mxu0 0.0
        %3760 = vmatprep.subr.mxu0 0.0
        %3761 = vmatpush2.xpose.msra.mxu0 0.0
        %3762 = vmatprep.subr.mxu0 0.0
        %3763 = vmatpush2.xpose.msra.mxu0 0.0
        %3764 = vmatprep.subr.mxu0 0.0
        %3765 = vmatpush2.xpose.msra.mxu0 0.0
        %3766 = vmatprep.subr.mxu0 0.0
        %3767 = vmatpush2.xpose.msra.mxu0 0.0
        %3768 = vmatprep.subr.mxu0 0.0
        %3769 = vmatpush2.xpose.msra.mxu0 0.0
        %3770 = vmatprep.subr.mxu0 0.0
        %3771 = vmatpush2.xpose.msra.mxu0 0.0
        %3772 = vmatprep.subr.mxu0 0.0
        %3773 = vmatpush2.xpose.msra.mxu0 0.0
        %3774 = vmatprep.subr.mxu0 0.0
        %3775 = vmatpush2.xpose.msra.mxu0 0.0
        %3776 = vmatprep.subr.mxu0 0.0
        %3777 = vmatpush2.xpose.msra.mxu0 0.0
        %3778 = vmatprep.subr.mxu0 0.0
        %3779 = vmatpush2.xpose.msra.mxu0 0.0
        %3780 = vmatprep.subr.mxu0 0.0
        %3781 = vmatpush2.xpose.msra.mxu0 0.0
        %3782 = vmatprep.subr.mxu0 0.0
        %3783 = vmatpush2.xpose.msra.mxu0 0.0
        %3784 = vmatprep.subr.mxu0 0.0
        %3785 = vmatpush2.xpose.msra.mxu0 0.0
        %3786 = vmatprep.subr.mxu0 0.0
        %3787 = vmatpush2.xpose.msra.mxu0 0.0
        %3788 = vmatprep.subr.mxu0 0.0
        %3789 = vmatpush2.xpose.msra.mxu0 0.0
        %3790 = vmatprep.mubr.f32.mxu0 0.0
        %3791 = vmatmul.mubr.f32.gmra.mxu0 %v3694
        %v3792 = vpop.f32.mrf.mxu0
        %v3793 = vadd.f32 0.0, %v3792
        %v3794 = vpop.f32.mrf.mxu0
        %3795 = vmatprep.mubr.f32.mxu0 0.0
        %3796 = vmatmul.mubr.f32.gmra.mxu0 %v3695
        %v3797 = vpop.f32.mrf.mxu0
        %v3798 = vadd.f32 0.0, %v3797
        %v3799 = vpop.f32.mrf.mxu0
        %3800 = vmatprep.mubr.f32.mxu0 0.0
        %3801 = vmatmul.mubr.f32.gmra.mxu0 %v3696
        %v3802 = vpop.f32.mrf.mxu0
        %v3803 = vadd.f32 0.0, %v3802
        %v3804 = vpop.f32.mrf.mxu0
        %3805 = vmatprep.mubr.f32.mxu0 0.0
        %3806 = vmatmul.mubr.f32.gmra.mxu0 %v3697
        %v3807 = vpop.f32.mrf.mxu0
        %v3808 = vadd.f32 0.0, %v3807
        %v3809 = vpop.f32.mrf.mxu0
        %3810 = vmatprep.mubr.f32.mxu0 0.0
        %3811 = vmatmul.mubr.f32.gmra.mxu0 %v3698
        %v3812 = vpop.f32.mrf.mxu0
        %v3813 = vadd.f32 0.0, %v3812
        %v3814 = vpop.f32.mrf.mxu0
        %3815 = vmatprep.mubr.f32.mxu0 0.0
        %3816 = vmatmul.mubr.f32.gmra.mxu0 %v3699
        %v3817 = vpop.f32.mrf.mxu0
        %v3818 = vadd.f32 0.0, %v3817
        %v3819 = vpop.f32.mrf.mxu0
        %3820 = vmatprep.mubr.f32.mxu0 0.0
        %3821 = vmatmul.mubr.f32.gmra.mxu0 %v3700
        %v3822 = vpop.f32.mrf.mxu0
        %v3823 = vadd.f32 0.0, %v3822
        %v3824 = vpop.f32.mrf.mxu0
        %3825 = vmatprep.mubr.f32.mxu0 0.0
        %3826 = vmatmul.mubr.f32.gmra.mxu0 %v3701
        %v3827 = vpop.f32.mrf.mxu0
        %v3828 = vadd.f32 0.0, %v3827
        %v3829 = vpop.f32.mrf.mxu0
        %3830 = vmatprep.mubr.f32.mxu0 0.0
        %3831 = vmatmul.mubr.f32.gmra.mxu0 %v3702
        %v3832 = vpop.f32.mrf.mxu0
        %v3833 = vadd.f32 0.0, %v3832
        %v3834 = vpop.f32.mrf.mxu0
        %3835 = vmatprep.mubr.f32.mxu0 0.0
        %3836 = vmatmul.mubr.f32.gmra.mxu0 %v3703
        %v3837 = vpop.f32.mrf.mxu0
        %v3838 = vadd.f32 0.0, %v3837
        %v3839 = vpop.f32.mrf.mxu0
        %3840 = vmatprep.mubr.f32.mxu0 0.0
        %3841 = vmatmul.mubr.f32.gmra.mxu0 %v3704
        %v3842 = vpop.f32.mrf.mxu0
        %v3843 = vadd.f32 0.0, %v3842
        %v3844 = vpop.f32.mrf.mxu0
        %3845 = vmatprep.mubr.f32.mxu0 0.0
        %3846 = vmatmul.mubr.f32.gmra.mxu0 %v3705
        %v3847 = vpop.f32.mrf.mxu0
        %v3848 = vadd.f32 0.0, %v3847
        %v3849 = vpop.f32.mrf.mxu0
        %3850 = vmatprep.mubr.f32.mxu0 0.0
        %3851 = vmatmul.mubr.f32.gmra.mxu0 %v3706
        %v3852 = vpop.f32.mrf.mxu0
        %v3853 = vadd.f32 0.0, %v3852
        %v3854 = vpop.f32.mrf.mxu0
        %3855 = vmatprep.mubr.f32.mxu0 0.0
        %3856 = vmatmul.mubr.f32.gmra.mxu0 %v3707
        %v3857 = vpop.f32.mrf.mxu0
        %v3858 = vadd.f32 0.0, %v3857
        %v3859 = vpop.f32.mrf.mxu0
        %3860 = vmatprep.mubr.f32.mxu0 0.0
        %3861 = vmatmul.mubr.f32.gmra.mxu0 %v3708
        %v3862 = vpop.f32.mrf.mxu0
        %v3863 = vadd.f32 0.0, %v3862
        %v3864 = vpop.f32.mrf.mxu0
        %3865 = vmatprep.mubr.f32.mxu0 0.0
        %3866 = vmatmul.mubr.f32.gmra.mxu0 %v3709
        %v3867 = vpop.f32.mrf.mxu0
        %v3868 = vadd.f32 0.0, %v3867
        %v3869 = vpop.f32.mrf.mxu0
        %3870 = vdwg.mxu0
        %v3871 = vadd.f32 %v3536, %v3793
        %v3872 = vadd.f32 %v3541, %v3798
        %v3873 = vadd.f32 %v3546, %v3803
        %v3874 = vadd.f32 %v3551, %v3808
        %v3875 = vadd.f32 %v3556, %v3813
        %v3876 = vadd.f32 %v3561, %v3818
        %v3877 = vadd.f32 %v3566, %v3823
        %v3878 = vadd.f32 %v3571, %v3828
        %v3879 = vadd.f32 %v3576, %v3833
        %v3880 = vadd.f32 %v3581, %v3838
        %v3881 = vadd.f32 %v3586, %v3843
        %v3882 = vadd.f32 %v3591, %v3848
        %v3883 = vadd.f32 %v3596, %v3853
        %v3884 = vadd.f32 %v3601, %v3858
        %v3885 = vadd.f32 %v3606, %v3863
        %v3886 = vadd.f32 %v3611, %v3868
        %v3887 = vsub.f32 %v301, %v3020
        %v3888 = vsub.f32 %v301, %v3025
        %v3889 = vsub.f32 %v301, %v3030
        %v3890 = vsub.f32 %v301, %v3035
        %v3891 = vsub.f32 %v301, %v3040
        %v3892 = vsub.f32 %v301, %v3045
        %v3893 = vsub.f32 %v301, %v3050
        %v3894 = vsub.f32 %v301, %v3055
        %v3895 = vsub.f32 %v301, %v3060
        %v3896 = vsub.f32 %v301, %v3065
        %v3897 = vsub.f32 %v301, %v3070
        %v3898 = vsub.f32 %v301, %v3075
        %v3899 = vsub.f32 %v301, %v3080
        %v3900 = vsub.f32 %v301, %v3085
        %v3901 = vsub.f32 %v301, %v3090
        %v3902 = vsub.f32 %v301, %v3095
        %v3903 = vmul.f32 %v3887, %v3887
        %v3904 = vmul.f32 %v3888, %v3888
        %v3905 = vmul.f32 %v3889, %v3889
        %v3906 = vmul.f32 %v3890, %v3890
        %v3907 = vmul.f32 %v3891, %v3891
        %v3908 = vmul.f32 %v3892, %v3892
        %v3909 = vmul.f32 %v3893, %v3893
        %v3910 = vmul.f32 %v3894, %v3894
        %v3911 = vmul.f32 %v3895, %v3895
        %v3912 = vmul.f32 %v3896, %v3896
        %v3913 = vmul.f32 %v3897, %v3897
        %v3914 = vmul.f32 %v3898, %v3898
        %v3915 = vmul.f32 %v3899, %v3899
        %v3916 = vmul.f32 %v3900, %v3900
        %v3917 = vmul.f32 %v3901, %v3901
        %v3918 = vmul.f32 %v3902, %v3902
        %v3919 = vsub.f32 0.0, %v3903
        %v3920 = vsub.f32 0.0, %v3904
        %v3921 = vsub.f32 0.0, %v3905
        %v3922 = vsub.f32 0.0, %v3906
        %v3923 = vsub.f32 0.0, %v3907
        %v3924 = vsub.f32 0.0, %v3908
        %v3925 = vsub.f32 0.0, %v3909
        %v3926 = vsub.f32 0.0, %v3910
        %v3927 = vsub.f32 0.0, %v3911
        %v3928 = vsub.f32 0.0, %v3912
        %v3929 = vsub.f32 0.0, %v3913
        %v3930 = vsub.f32 0.0, %v3914
        %v3931 = vsub.f32 0.0, %v3915
        %v3932 = vsub.f32 0.0, %v3916
        %v3933 = vsub.f32 0.0, %v3917
        %v3934 = vsub.f32 0.0, %v3918
        %v3935 = vmul.f32 %v3919, 1.442695
        %v3936 = vpow.pop %v3935
        %v3937 = vmul.f32 %v3920, 1.442695
        %v3938 = vpow.pop %v3937
        %v3939 = vmul.f32 %v3921, 1.442695
        %v3940 = vpow.pop %v3939
        %v3941 = vmul.f32 %v3922, 1.442695
        %v3942 = vpow.pop %v3941
        %v3943 = vmul.f32 %v3923, 1.442695
        %v3944 = vpow.pop %v3943
        %v3945 = vmul.f32 %v3924, 1.442695
        %v3946 = vpow.pop %v3945
        %v3947 = vmul.f32 %v3925, 1.442695
        %v3948 = vpow.pop %v3947
        %v3949 = vmul.f32 %v3926, 1.442695
        %v3950 = vpow.pop %v3949
        %v3951 = vmul.f32 %v3927, 1.442695
        %v3952 = vpow.pop %v3951
        %v3953 = vmul.f32 %v3928, 1.442695
        %v3954 = vpow.pop %v3953
        %v3955 = vmul.f32 %v3929, 1.442695
        %v3956 = vpow.pop %v3955
        %v3957 = vmul.f32 %v3930, 1.442695
        %v3958 = vpow.pop %v3957
        %v3959 = vmul.f32 %v3931, 1.442695
        %v3960 = vpow.pop %v3959
        %v3961 = vmul.f32 %v3932, 1.442695
        %v3962 = vpow.pop %v3961
        %v3963 = vmul.f32 %v3933, 1.442695
        %v3964 = vpow.pop %v3963
        %v3965 = vmul.f32 %v3934, 1.442695
        %v3966 = vpow.pop %v3965
        %v3967 = vmul.f32 %v3936, 39.89423
        %v3968 = vmul.f32 %v3938, 39.89423
        %v3969 = vmul.f32 %v3940, 39.89423
        %v3970 = vmul.f32 %v3942, 39.89423
        %v3971 = vmul.f32 %v3944, 39.89423
        %v3972 = vmul.f32 %v3946, 39.89423
        %v3973 = vmul.f32 %v3948, 39.89423
        %v3974 = vmul.f32 %v3950, 39.89423
        %v3975 = vmul.f32 %v3952, 39.89423
        %v3976 = vmul.f32 %v3954, 39.89423
        %v3977 = vmul.f32 %v3956, 39.89423
        %v3978 = vmul.f32 %v3958, 39.89423
        %v3979 = vmul.f32 %v3960, 39.89423
        %v3980 = vmul.f32 %v3962, 39.89423
        %v3981 = vmul.f32 %v3964, 39.89423
        %v3982 = vmul.f32 %v3966, 39.89423
        %3983 = vst [vmem:[%s3195 + $0x18] sm:$0xff] %v3967
        %3984 = vst [vmem:[%s3195 + $0x38] sm:$0xff] %v3968
        %3985 = vst [vmem:[%s3195 + $0x58] sm:$0xff] %v3969
        %3986 = vst [vmem:[%s3195 + $0x78] sm:$0xff] %v3970
        %3987 = vst [vmem:[%s3195 + $0x98] sm:$0xff] %v3971
        %3988 = vst [vmem:[%s3195 + $0xb8] sm:$0xff] %v3972
        %3989 = vst [vmem:[%s3195 + $0xd8] sm:$0xff] %v3973
        %3990 = vst [vmem:[%s3195 + $0xf8] sm:$0xff] %v3974
        %3991 = vst [vmem:[%s3195 + $0x118] sm:$0xff] %v3975
        %3992 = vst [vmem:[%s3195 + $0x138] sm:$0xff] %v3976
        %3993 = vst [vmem:[%s3195 + $0x158] sm:$0xff] %v3977
        %3994 = vst [vmem:[%s3195 + $0x178] sm:$0xff] %v3978
        %3995 = vst [vmem:[%s3195 + $0x198] sm:$0xff] %v3979
        %3996 = vst [vmem:[%s3195 + $0x1b8] sm:$0xff] %v3980
        %3997 = vst [vmem:[%s3195 + $0x1d8] sm:$0xff] %v3981
        %3998 = vst [vmem:[%s3195 + $0x1f8] sm:$0xff] %v3982
        %3999 = vmatprep.subr.mxu0 0.0
        %4000 = vmatpush1.xpose.msra.mxu0 0.0
        %4001 = vmatprep.subr.mxu0 0.0
        %4002 = vmatpush1.xpose.msra.mxu0 0.0
        %4003 = vmatprep.subr.mxu0 0.0
        %4004 = vmatpush1.xpose.msra.mxu0 0.0
        %4005 = vmatprep.subr.mxu0 0.0
        %4006 = vmatpush1.xpose.msra.mxu0 0.0
        %4007 = vmatprep.subr.mxu0 0.0
        %4008 = vmatpush1.xpose.msra.mxu0 0.0
        %4009 = vmatprep.subr.mxu0 0.0
        %4010 = vmatpush1.xpose.msra.mxu0 0.0
        %4011 = vmatprep.subr.mxu0 0.0
        %4012 = vmatpush1.xpose.msra.mxu0 0.0
        %4013 = vmatprep.subr.mxu0 0.0
        %4014 = vmatpush1.xpose.msra.mxu0 0.0
        %4015 = vmatprep.subr.mxu0 0.0
        %4016 = vmatpush1.xpose.msra.mxu0 0.0
        %4017 = vmatprep.subr.mxu0 0.0
        %4018 = vmatpush1.xpose.msra.mxu0 0.0
        %4019 = vmatprep.subr.mxu0 0.0
        %4020 = vmatpush1.xpose.msra.mxu0 0.0
        %4021 = vmatprep.subr.mxu0 0.0
        %4022 = vmatpush1.xpose.msra.mxu0 0.0
        %4023 = vmatprep.subr.mxu0 0.0
        %4024 = vmatpush1.xpose.msra.mxu0 0.0
        %4025 = vmatprep.subr.mxu0 0.0
        %4026 = vmatpush1.xpose.msra.mxu0 0.0
        %4027 = vmatprep.subr.mxu0 0.0
        %4028 = vmatpush1.xpose.msra.mxu0 0.0
        %4029 = vmatprep.subr.mxu0 0.0
        %4030 = vmatpush1.xpose.msra.mxu0 %v1320
        %4031 = vmatprep.subr.mxu0 0.0
        %4032 = vmatpush2.xpose.msra.mxu0 0.0
        %4033 = vmatprep.subr.mxu0 0.0
        %4034 = vmatpush2.xpose.msra.mxu0 0.0
        %4035 = vmatprep.subr.mxu0 0.0
        %4036 = vmatpush2.xpose.msra.mxu0 0.0
        %4037 = vmatprep.subr.mxu0 0.0
        %4038 = vmatpush2.xpose.msra.mxu0 0.0
        %4039 = vmatprep.subr.mxu0 0.0
        %4040 = vmatpush2.xpose.msra.mxu0 0.0
        %4041 = vmatprep.subr.mxu0 0.0
        %4042 = vmatpush2.xpose.msra.mxu0 0.0
        %4043 = vmatprep.subr.mxu0 0.0
        %4044 = vmatpush2.xpose.msra.mxu0 0.0
        %4045 = vmatprep.subr.mxu0 0.0
        %4046 = vmatpush2.xpose.msra.mxu0 0.0
        %4047 = vmatprep.subr.mxu0 0.0
        %4048 = vmatpush2.xpose.msra.mxu0 0.0
        %4049 = vmatprep.subr.mxu0 0.0
        %4050 = vmatpush2.xpose.msra.mxu0 0.0
        %4051 = vmatprep.subr.mxu0 0.0
        %4052 = vmatpush2.xpose.msra.mxu0 0.0
        %4053 = vmatprep.subr.mxu0 0.0
        %4054 = vmatpush2.xpose.msra.mxu0 0.0
        %4055 = vmatprep.subr.mxu0 0.0
        %4056 = vmatpush2.xpose.msra.mxu0 0.0
        %4057 = vmatprep.subr.mxu0 0.0
        %4058 = vmatpush2.xpose.msra.mxu0 0.0
        %4059 = vmatprep.subr.mxu0 0.0
        %4060 = vmatpush2.xpose.msra.mxu0 0.0
        %4061 = vmatprep.subr.mxu0 0.0
        %4062 = vmatpush2.xpose.msra.mxu0 0.0
        %4063 = vmatprep.mubr.f32.mxu0 0.0
        %4064 = vmatmul.mubr.f32.gmra.mxu0 %v3967
        %v4065 = vpop.f32.mrf.mxu0
        %v4066 = vadd.f32 0.0, %v4065
        %v4067 = vpop.f32.mrf.mxu0
        %4068 = vmatprep.mubr.f32.mxu0 0.0
        %4069 = vmatmul.mubr.f32.gmra.mxu0 %v3968
        %v4070 = vpop.f32.mrf.mxu0
        %v4071 = vadd.f32 0.0, %v4070
        %v4072 = vpop.f32.mrf.mxu0
        %4073 = vmatprep.mubr.f32.mxu0 0.0
        %4074 = vmatmul.mubr.f32.gmra.mxu0 %v3969
        %v4075 = vpop.f32.mrf.mxu0
        %v4076 = vadd.f32 0.0, %v4075
        %v4077 = vpop.f32.mrf.mxu0
        %4078 = vmatprep.mubr.f32.mxu0 0.0
        %4079 = vmatmul.mubr.f32.gmra.mxu0 %v3970
        %v4080 = vpop.f32.mrf.mxu0
        %v4081 = vadd.f32 0.0, %v4080
        %v4082 = vpop.f32.mrf.mxu0
        %4083 = vmatprep.mubr.f32.mxu0 0.0
        %4084 = vmatmul.mubr.f32.gmra.mxu0 %v3971
        %v4085 = vpop.f32.mrf.mxu0
        %v4086 = vadd.f32 0.0, %v4085
        %v4087 = vpop.f32.mrf.mxu0
        %4088 = vmatprep.mubr.f32.mxu0 0.0
        %4089 = vmatmul.mubr.f32.gmra.mxu0 %v3972
        %v4090 = vpop.f32.mrf.mxu0
        %v4091 = vadd.f32 0.0, %v4090
        %v4092 = vpop.f32.mrf.mxu0
        %4093 = vmatprep.mubr.f32.mxu0 0.0
        %4094 = vmatmul.mubr.f32.gmra.mxu0 %v3973
        %v4095 = vpop.f32.mrf.mxu0
        %v4096 = vadd.f32 0.0, %v4095
        %v4097 = vpop.f32.mrf.mxu0
        %4098 = vmatprep.mubr.f32.mxu0 0.0
        %4099 = vmatmul.mubr.f32.gmra.mxu0 %v3974
        %v4100 = vpop.f32.mrf.mxu0
        %v4101 = vadd.f32 0.0, %v4100
        %v4102 = vpop.f32.mrf.mxu0
        %4103 = vmatprep.mubr.f32.mxu0 0.0
        %4104 = vmatmul.mubr.f32.gmra.mxu0 %v3975
        %v4105 = vpop.f32.mrf.mxu0
        %v4106 = vadd.f32 0.0, %v4105
        %v4107 = vpop.f32.mrf.mxu0
        %4108 = vmatprep.mubr.f32.mxu0 0.0
        %4109 = vmatmul.mubr.f32.gmra.mxu0 %v3976
        %v4110 = vpop.f32.mrf.mxu0
        %v4111 = vadd.f32 0.0, %v4110
        %v4112 = vpop.f32.mrf.mxu0
        %4113 = vmatprep.mubr.f32.mxu0 0.0
        %4114 = vmatmul.mubr.f32.gmra.mxu0 %v3977
        %v4115 = vpop.f32.mrf.mxu0
        %v4116 = vadd.f32 0.0, %v4115
        %v4117 = vpop.f32.mrf.mxu0
        %4118 = vmatprep.mubr.f32.mxu0 0.0
        %4119 = vmatmul.mubr.f32.gmra.mxu0 %v3978
        %v4120 = vpop.f32.mrf.mxu0
        %v4121 = vadd.f32 0.0, %v4120
        %v4122 = vpop.f32.mrf.mxu0
        %4123 = vmatprep.mubr.f32.mxu0 0.0
        %4124 = vmatmul.mubr.f32.gmra.mxu0 %v3979
        %v4125 = vpop.f32.mrf.mxu0
        %v4126 = vadd.f32 0.0, %v4125
        %v4127 = vpop.f32.mrf.mxu0
        %4128 = vmatprep.mubr.f32.mxu0 0.0
        %4129 = vmatmul.mubr.f32.gmra.mxu0 %v3980
        %v4130 = vpop.f32.mrf.mxu0
        %v4131 = vadd.f32 0.0, %v4130
        %v4132 = vpop.f32.mrf.mxu0
        %4133 = vmatprep.mubr.f32.mxu0 0.0
        %4134 = vmatmul.mubr.f32.gmra.mxu0 %v3981
        %v4135 = vpop.f32.mrf.mxu0
        %v4136 = vadd.f32 0.0, %v4135
        %v4137 = vpop.f32.mrf.mxu0
        %4138 = vmatprep.mubr.f32.mxu0 0.0
        %4139 = vmatmul.mubr.f32.gmra.mxu0 %v3982
        %v4140 = vpop.f32.mrf.mxu0
        %v4141 = vadd.f32 0.0, %v4140
        %v4142 = vpop.f32.mrf.mxu0
        %4143 = vdwg.mxu0
        %v4144 = vadd.f32 %v3871, %v4066
        %v4145 = vadd.f32 %v3872, %v4071
        %v4146 = vadd.f32 %v3873, %v4076
        %v4147 = vadd.f32 %v3874, %v4081
        %v4148 = vadd.f32 %v3875, %v4086
        %v4149 = vadd.f32 %v3876, %v4091
        %v4150 = vadd.f32 %v3877, %v4096
        %v4151 = vadd.f32 %v3878, %v4101
        %v4152 = vadd.f32 %v3879, %v4106
        %v4153 = vadd.f32 %v3880, %v4111
        %v4154 = vadd.f32 %v3881, %v4116
        %v4155 = vadd.f32 %v3882, %v4121
        %v4156 = vadd.f32 %v3883, %v4126
        %v4157 = vadd.f32 %v3884, %v4131
        %v4158 = vadd.f32 %v3885, %v4136
        %v4159 = vadd.f32 %v3886, %v4141
        %v4160 = vmul.f32 %v2984, %v4144
        %v4161 = vmul.f32 %v2985, %v4145
        %v4162 = vmul.f32 %v2986, %v4146
        %v4163 = vmul.f32 %v2987, %v4147
        %v4164 = vmul.f32 %v2988, %v4148
        %v4165 = vmul.f32 %v2989, %v4149
        %v4166 = vmul.f32 %v2990, %v4150
        %v4167 = vmul.f32 %v2991, %v4151
        %v4168 = vmul.f32 %v2992, %v4152
        %v4169 = vmul.f32 %v2993, %v4153
        %v4170 = vmul.f32 %v2994, %v4154
        %v4171 = vmul.f32 %v2995, %v4155
        %v4172 = vmul.f32 %v2996, %v4156
        %v4173 = vmul.f32 %v2997, %v4157
        %v4174 = vmul.f32 %v2998, %v4158
        %v4175 = vmul.f32 %v2999, %v4159
        %v4176 = vsel %vm1499, %v4160, 0.0
        %4177 = vadd.xlane.f32.xlu0 %v4176
        %v4178 = vpop.xlane.xlu0 %4177
        %v4179 = vsel %vm1499, %v4161, 0.0
        %4180 = vadd.xlane.f32.xlu0 %v4179
        %v4181 = vpop.xlane.xlu0 %4180
        %v4182 = vsel %vm1499, %v4162, 0.0
        %4183 = vadd.xlane.f32.xlu0 %v4182
        %v4184 = vpop.xlane.xlu0 %4183
        %v4185 = vsel %vm1499, %v4163, 0.0
        %4186 = vadd.xlane.f32.xlu0 %v4185
        %v4187 = vpop.xlane.xlu0 %4186
        %v4188 = vsel %vm1499, %v4164, 0.0
        %4189 = vadd.xlane.f32.xlu0 %v4188
        %v4190 = vpop.xlane.xlu0 %4189
        %v4191 = vsel %vm1499, %v4165, 0.0
        %4192 = vadd.xlane.f32.xlu0 %v4191
        %v4193 = vpop.xlane.xlu0 %4192
        %v4194 = vsel %vm1499, %v4166, 0.0
        %4195 = vadd.xlane.f32.xlu0 %v4194
        %v4196 = vpop.xlane.xlu0 %4195
        %v4197 = vsel %vm1499, %v4167, 0.0
        %4198 = vadd.xlane.f32.xlu0 %v4197
        %v4199 = vpop.xlane.xlu0 %4198
        %v4200 = vsel %vm1499, %v4168, 0.0
        %4201 = vadd.xlane.f32.xlu0 %v4200
        %v4202 = vpop.xlane.xlu0 %4201
        %v4203 = vsel %vm1499, %v4169, 0.0
        %4204 = vadd.xlane.f32.xlu0 %v4203
        %v4205 = vpop.xlane.xlu0 %4204
        %v4206 = vsel %vm1499, %v4170, 0.0
        %4207 = vadd.xlane.f32.xlu0 %v4206
        %v4208 = vpop.xlane.xlu0 %4207
        %v4209 = vsel %vm1499, %v4171, 0.0
        %4210 = vadd.xlane.f32.xlu0 %v4209
        %v4211 = vpop.xlane.xlu0 %4210
        %v4212 = vsel %vm1499, %v4172, 0.0
        %4213 = vadd.xlane.f32.xlu0 %v4212
        %v4214 = vpop.xlane.xlu0 %4213
        %v4215 = vsel %vm1499, %v4173, 0.0
        %4216 = vadd.xlane.f32.xlu0 %v4215
        %v4217 = vpop.xlane.xlu0 %4216
        %v4218 = vsel %vm1499, %v4174, 0.0
        %4219 = vadd.xlane.f32.xlu0 %v4218
        %v4220 = vpop.xlane.xlu0 %4219
        %v4221 = vsel %vm1499, %v4175, 0.0
        %4222 = vadd.xlane.f32.xlu0 %v4221
        %v4223 = vpop.xlane.xlu0 %4222
        %v4224 = vmul.f32 %v4178, %v3001
        %v4225 = vmul.f32 %v4181, %v3002
        %v4226 = vmul.f32 %v4184, %v3003
        %v4227 = vmul.f32 %v4187, %v3004
        %v4228 = vmul.f32 %v4190, %v3005
        %v4229 = vmul.f32 %v4193, %v3006
        %v4230 = vmul.f32 %v4196, %v3007
        %v4231 = vmul.f32 %v4199, %v3008
        %v4232 = vmul.f32 %v4202, %v3009
        %v4233 = vmul.f32 %v4205, %v3010
        %v4234 = vmul.f32 %v4208, %v3011
        %v4235 = vmul.f32 %v4211, %v3012
        %v4236 = vmul.f32 %v4214, %v3013
        %v4237 = vmul.f32 %v4217, %v3014
        %v4238 = vmul.f32 %v4220, %v3015
        %v4239 = vmul.f32 %v4223, %v3016
        %4256 = vrot.lane.b32.xlu0 %v4224, 127
        %v4257 = vpop.permute.xlu0 %4256
        %4258 = vrot.lane.b32.xlu0 %v4225, 127
        %v4259 = vpop.permute.xlu0 %4258
        %4260 = vrot.lane.b32.xlu0 %v4226, 127
        %v4261 = vpop.permute.xlu0 %4260
        %4262 = vrot.lane.b32.xlu0 %v4227, 127
        %v4263 = vpop.permute.xlu0 %4262
        %4264 = vrot.lane.b32.xlu0 %v4228, 127
        %v4265 = vpop.permute.xlu0 %4264
        %4266 = vrot.lane.b32.xlu0 %v4229, 127
        %v4267 = vpop.permute.xlu0 %4266
        %4268 = vrot.lane.b32.xlu0 %v4230, 127
        %v4269 = vpop.permute.xlu0 %4268
        %4270 = vrot.lane.b32.xlu0 %v4231, 127
        %v4271 = vpop.permute.xlu0 %4270
        %4272 = vrot.lane.b32.xlu0 %v4232, 127
        %v4273 = vpop.permute.xlu0 %4272
        %4274 = vrot.lane.b32.xlu0 %v4233, 127
        %v4275 = vpop.permute.xlu0 %4274
        %4276 = vrot.lane.b32.xlu0 %v4234, 127
        %v4277 = vpop.permute.xlu0 %4276
        %4278 = vrot.lane.b32.xlu0 %v4235, 127
        %v4279 = vpop.permute.xlu0 %4278
        %4280 = vrot.lane.b32.xlu0 %v4236, 127
        %v4281 = vpop.permute.xlu0 %4280
        %4282 = vrot.lane.b32.xlu0 %v4237, 127
        %v4283 = vpop.permute.xlu0 %4282
        %4284 = vrot.lane.b32.xlu0 %v4238, 127
        %v4285 = vpop.permute.xlu0 %4284
        %4286 = vrot.lane.b32.xlu0 %v4239, 127
        %v4287 = vpop.permute.xlu0 %4286
        %s4304 = scalar_lea.vmem %s284, 256
        %4305 = vst.msk [vmem:[%s4304] sm:$0xff] %vm1628, %v4257
        %4306 = vst.msk [vmem:[%s4304 + $0x8] sm:$0xff] %vm1628, %v4259
        %4307 = vst.msk [vmem:[%s4304 + $0x10] sm:$0xff] %vm1628, %v4261
        %4308 = vst.msk [vmem:[%s4304 + $0x18] sm:$0xff] %vm1628, %v4263
        %4309 = vst.msk [vmem:[%s4304 + $0x20] sm:$0xff] %vm1628, %v4265
        %4310 = vst.msk [vmem:[%s4304 + $0x28] sm:$0xff] %vm1628, %v4267
        %4311 = vst.msk [vmem:[%s4304 + $0x30] sm:$0xff] %vm1628, %v4269
        %4312 = vst.msk [vmem:[%s4304 + $0x38] sm:$0xff] %vm1628, %v4271
        %4313 = vst.msk [vmem:[%s4304 + $0x40] sm:$0xff] %vm1628, %v4273
        %4314 = vst.msk [vmem:[%s4304 + $0x48] sm:$0xff] %vm1628, %v4275
        %4315 = vst.msk [vmem:[%s4304 + $0x50] sm:$0xff] %vm1628, %v4277
        %4316 = vst.msk [vmem:[%s4304 + $0x58] sm:$0xff] %vm1628, %v4279
        %4317 = vst.msk [vmem:[%s4304 + $0x60] sm:$0xff] %vm1628, %v4281
        %4318 = vst.msk [vmem:[%s4304 + $0x68] sm:$0xff] %vm1628, %v4283
        %4319 = vst.msk [vmem:[%s4304 + $0x70] sm:$0xff] %vm1628, %v4285
        %4320 = vst.msk [vmem:[%s4304 + $0x78] sm:$0xff] %vm1628, %v4287
        %s4321 = scalar_lea.vmem %s264, 384
        %v4322 = vld [vmem:[%s4321] sm:$0xff]
        %v4323 = vld [vmem:[%s4321 + $0x8] sm:$0xff]
        %v4324 = vld [vmem:[%s4321 + $0x10] sm:$0xff]
        %v4325 = vld [vmem:[%s4321 + $0x18] sm:$0xff]
        %v4326 = vld [vmem:[%s4321 + $0x20] sm:$0xff]
        %v4327 = vld [vmem:[%s4321 + $0x28] sm:$0xff]
        %v4328 = vld [vmem:[%s4321 + $0x30] sm:$0xff]
        %v4329 = vld [vmem:[%s4321 + $0x38] sm:$0xff]
        %v4330 = vld [vmem:[%s4321 + $0x40] sm:$0xff]
        %v4331 = vld [vmem:[%s4321 + $0x48] sm:$0xff]
        %v4332 = vld [vmem:[%s4321 + $0x50] sm:$0xff]
        %v4333 = vld [vmem:[%s4321 + $0x58] sm:$0xff]
        %v4334 = vld [vmem:[%s4321 + $0x60] sm:$0xff]
        %v4335 = vld [vmem:[%s4321 + $0x68] sm:$0xff]
        %v4336 = vld [vmem:[%s4321 + $0x70] sm:$0xff]
        %v4337 = vld [vmem:[%s4321 + $0x78] sm:$0xff]
        %s4338 = scalar_lea.vmem %s274, 384
        %v4339 = vld [vmem:[%s4338] sm:$0xff]
        %v4340 = vld [vmem:[%s4338 + $0x8] sm:$0xff]
        %v4341 = vld [vmem:[%s4338 + $0x10] sm:$0xff]
        %v4342 = vld [vmem:[%s4338 + $0x18] sm:$0xff]
        %v4343 = vld [vmem:[%s4338 + $0x20] sm:$0xff]
        %v4344 = vld [vmem:[%s4338 + $0x28] sm:$0xff]
        %v4345 = vld [vmem:[%s4338 + $0x30] sm:$0xff]
        %v4346 = vld [vmem:[%s4338 + $0x38] sm:$0xff]
        %v4347 = vld [vmem:[%s4338 + $0x40] sm:$0xff]
        %v4348 = vld [vmem:[%s4338 + $0x48] sm:$0xff]
        %v4349 = vld [vmem:[%s4338 + $0x50] sm:$0xff]
        %v4350 = vld [vmem:[%s4338 + $0x58] sm:$0xff]
        %v4351 = vld [vmem:[%s4338 + $0x60] sm:$0xff]
        %v4352 = vld [vmem:[%s4338 + $0x68] sm:$0xff]
        %v4353 = vld [vmem:[%s4338 + $0x70] sm:$0xff]
        %v4354 = vld [vmem:[%s4338 + $0x78] sm:$0xff]
        %4356 = vset.pattern.permute.xlu0 0
        %4357 = vperm.xlu0 %4356, %v4339
        %v4358 = vpop.permute.xlu0 %4357
        %4361 = vset.pattern.permute.xlu0 0
        %4362 = vperm.xlu0 %4361, %v4340
        %v4363 = vpop.permute.xlu0 %4362
        %4366 = vset.pattern.permute.xlu0 0
        %4367 = vperm.xlu0 %4366, %v4341
        %v4368 = vpop.permute.xlu0 %4367
        %4371 = vset.pattern.permute.xlu0 0
        %4372 = vperm.xlu0 %4371, %v4342
        %v4373 = vpop.permute.xlu0 %4372
        %4376 = vset.pattern.permute.xlu0 0
        %4377 = vperm.xlu0 %4376, %v4343
        %v4378 = vpop.permute.xlu0 %4377
        %4381 = vset.pattern.permute.xlu0 0
        %4382 = vperm.xlu0 %4381, %v4344
        %v4383 = vpop.permute.xlu0 %4382
        %4386 = vset.pattern.permute.xlu0 0
        %4387 = vperm.xlu0 %4386, %v4345
        %v4388 = vpop.permute.xlu0 %4387
        %4391 = vset.pattern.permute.xlu0 0
        %4392 = vperm.xlu0 %4391, %v4346
        %v4393 = vpop.permute.xlu0 %4392
        %4396 = vset.pattern.permute.xlu0 0
        %4397 = vperm.xlu0 %4396, %v4347
        %v4398 = vpop.permute.xlu0 %4397
        %4401 = vset.pattern.permute.xlu0 0
        %4402 = vperm.xlu0 %4401, %v4348
        %v4403 = vpop.permute.xlu0 %4402
        %4406 = vset.pattern.permute.xlu0 0
        %4407 = vperm.xlu0 %4406, %v4349
        %v4408 = vpop.permute.xlu0 %4407
        %4411 = vset.pattern.permute.xlu0 0
        %4412 = vperm.xlu0 %4411, %v4350
        %v4413 = vpop.permute.xlu0 %4412
        %4416 = vset.pattern.permute.xlu0 0
        %4417 = vperm.xlu0 %4416, %v4351
        %v4418 = vpop.permute.xlu0 %4417
        %4421 = vset.pattern.permute.xlu0 0
        %4422 = vperm.xlu0 %4421, %v4352
        %v4423 = vpop.permute.xlu0 %4422
        %4426 = vset.pattern.permute.xlu0 0
        %4427 = vperm.xlu0 %4426, %v4353
        %v4428 = vpop.permute.xlu0 %4427
        %4431 = vset.pattern.permute.xlu0 0
        %4432 = vperm.xlu0 %4431, %v4354
        %v4433 = vpop.permute.xlu0 %4432
        %v4435 = vsub.f32 %v292, %v4358
        %v4436 = vsub.f32 %v292, %v4363
        %v4437 = vsub.f32 %v292, %v4368
        %v4438 = vsub.f32 %v292, %v4373
        %v4439 = vsub.f32 %v292, %v4378
        %v4440 = vsub.f32 %v292, %v4383
        %v4441 = vsub.f32 %v292, %v4388
        %v4442 = vsub.f32 %v292, %v4393
        %v4443 = vsub.f32 %v292, %v4398
        %v4444 = vsub.f32 %v292, %v4403
        %v4445 = vsub.f32 %v292, %v4408
        %v4446 = vsub.f32 %v292, %v4413
        %v4447 = vsub.f32 %v292, %v4418
        %v4448 = vsub.f32 %v292, %v4423
        %v4449 = vsub.f32 %v292, %v4428
        %v4450 = vsub.f32 %v292, %v4433
        %v4451 = vmul.f32 %v4435, %v4435
        %v4452 = vmul.f32 %v4436, %v4436
        %v4453 = vmul.f32 %v4437, %v4437
        %v4454 = vmul.f32 %v4438, %v4438
        %v4455 = vmul.f32 %v4439, %v4439
        %v4456 = vmul.f32 %v4440, %v4440
        %v4457 = vmul.f32 %v4441, %v4441
        %v4458 = vmul.f32 %v4442, %v4442
        %v4459 = vmul.f32 %v4443, %v4443
        %v4460 = vmul.f32 %v4444, %v4444
        %v4461 = vmul.f32 %v4445, %v4445
        %v4462 = vmul.f32 %v4446, %v4446
        %v4463 = vmul.f32 %v4447, %v4447
        %v4464 = vmul.f32 %v4448, %v4448
        %v4465 = vmul.f32 %v4449, %v4449
        %v4466 = vmul.f32 %v4450, %v4450
        %v4467 = vsub.f32 0.0, %v4451
        %v4468 = vsub.f32 0.0, %v4452
        %v4469 = vsub.f32 0.0, %v4453
        %v4470 = vsub.f32 0.0, %v4454
        %v4471 = vsub.f32 0.0, %v4455
        %v4472 = vsub.f32 0.0, %v4456
        %v4473 = vsub.f32 0.0, %v4457
        %v4474 = vsub.f32 0.0, %v4458
        %v4475 = vsub.f32 0.0, %v4459
        %v4476 = vsub.f32 0.0, %v4460
        %v4477 = vsub.f32 0.0, %v4461
        %v4478 = vsub.f32 0.0, %v4462
        %v4479 = vsub.f32 0.0, %v4463
        %v4480 = vsub.f32 0.0, %v4464
        %v4481 = vsub.f32 0.0, %v4465
        %v4482 = vsub.f32 0.0, %v4466
        %v4483 = vmul.f32 %v4467, 1.442695
        %v4484 = vpow.pop %v4483
        %v4485 = vmul.f32 %v4468, 1.442695
        %v4486 = vpow.pop %v4485
        %v4487 = vmul.f32 %v4469, 1.442695
        %v4488 = vpow.pop %v4487
        %v4489 = vmul.f32 %v4470, 1.442695
        %v4490 = vpow.pop %v4489
        %v4491 = vmul.f32 %v4471, 1.442695
        %v4492 = vpow.pop %v4491
        %v4493 = vmul.f32 %v4472, 1.442695
        %v4494 = vpow.pop %v4493
        %v4495 = vmul.f32 %v4473, 1.442695
        %v4496 = vpow.pop %v4495
        %v4497 = vmul.f32 %v4474, 1.442695
        %v4498 = vpow.pop %v4497
        %v4499 = vmul.f32 %v4475, 1.442695
        %v4500 = vpow.pop %v4499
        %v4501 = vmul.f32 %v4476, 1.442695
        %v4502 = vpow.pop %v4501
        %v4503 = vmul.f32 %v4477, 1.442695
        %v4504 = vpow.pop %v4503
        %v4505 = vmul.f32 %v4478, 1.442695
        %v4506 = vpow.pop %v4505
        %v4507 = vmul.f32 %v4479, 1.442695
        %v4508 = vpow.pop %v4507
        %v4509 = vmul.f32 %v4480, 1.442695
        %v4510 = vpow.pop %v4509
        %v4511 = vmul.f32 %v4481, 1.442695
        %v4512 = vpow.pop %v4511
        %v4513 = vmul.f32 %v4482, 1.442695
        %v4514 = vpow.pop %v4513
        %v4515 = vmul.f32 %v4484, 39.89423
        %v4516 = vmul.f32 %v4486, 39.89423
        %v4517 = vmul.f32 %v4488, 39.89423
        %v4518 = vmul.f32 %v4490, 39.89423
        %v4519 = vmul.f32 %v4492, 39.89423
        %v4520 = vmul.f32 %v4494, 39.89423
        %v4521 = vmul.f32 %v4496, 39.89423
        %v4522 = vmul.f32 %v4498, 39.89423
        %v4523 = vmul.f32 %v4500, 39.89423
        %v4524 = vmul.f32 %v4502, 39.89423
        %v4525 = vmul.f32 %v4504, 39.89423
        %v4526 = vmul.f32 %v4506, 39.89423
        %v4527 = vmul.f32 %v4508, 39.89423
        %v4528 = vmul.f32 %v4510, 39.89423
        %v4529 = vmul.f32 %v4512, 39.89423
        %v4530 = vmul.f32 %v4514, 39.89423
        %s4531 = smul.u32 48, 4
        %s4532 = smul.addr %s4531, 8
        %s4533 = scalar_lea.vmem %s255, %s4532 [#allocation2]
        %4534 = vst [vmem:[%s4533] sm:$0xff] %v4515
        %4535 = vst [vmem:[%s4533 + $0x20] sm:$0xff] %v4516
        %4536 = vst [vmem:[%s4533 + $0x40] sm:$0xff] %v4517
        %4537 = vst [vmem:[%s4533 + $0x60] sm:$0xff] %v4518
        %4538 = vst [vmem:[%s4533 + $0x80] sm:$0xff] %v4519
        %4539 = vst [vmem:[%s4533 + $0xa0] sm:$0xff] %v4520
        %4540 = vst [vmem:[%s4533 + $0xc0] sm:$0xff] %v4521
        %4541 = vst [vmem:[%s4533 + $0xe0] sm:$0xff] %v4522
        %4542 = vst [vmem:[%s4533 + $0x100] sm:$0xff] %v4523
        %4543 = vst [vmem:[%s4533 + $0x120] sm:$0xff] %v4524
        %4544 = vst [vmem:[%s4533 + $0x140] sm:$0xff] %v4525
        %4545 = vst [vmem:[%s4533 + $0x160] sm:$0xff] %v4526
        %4546 = vst [vmem:[%s4533 + $0x180] sm:$0xff] %v4527
        %4547 = vst [vmem:[%s4533 + $0x1a0] sm:$0xff] %v4528
        %4548 = vst [vmem:[%s4533 + $0x1c0] sm:$0xff] %v4529
        %4549 = vst [vmem:[%s4533 + $0x1e0] sm:$0xff] %v4530
        %v4550 = vsub.f32 %v295, %v4358
        %v4551 = vsub.f32 %v295, %v4363
        %v4552 = vsub.f32 %v295, %v4368
        %v4553 = vsub.f32 %v295, %v4373
        %v4554 = vsub.f32 %v295, %v4378
        %v4555 = vsub.f32 %v295, %v4383
        %v4556 = vsub.f32 %v295, %v4388
        %v4557 = vsub.f32 %v295, %v4393
        %v4558 = vsub.f32 %v295, %v4398
        %v4559 = vsub.f32 %v295, %v4403
        %v4560 = vsub.f32 %v295, %v4408
        %v4561 = vsub.f32 %v295, %v4413
        %v4562 = vsub.f32 %v295, %v4418
        %v4563 = vsub.f32 %v295, %v4423
        %v4564 = vsub.f32 %v295, %v4428
        %v4565 = vsub.f32 %v295, %v4433
        %v4566 = vmul.f32 %v4550, %v4550
        %v4567 = vmul.f32 %v4551, %v4551
        %v4568 = vmul.f32 %v4552, %v4552
        %v4569 = vmul.f32 %v4553, %v4553
        %v4570 = vmul.f32 %v4554, %v4554
        %v4571 = vmul.f32 %v4555, %v4555
        %v4572 = vmul.f32 %v4556, %v4556
        %v4573 = vmul.f32 %v4557, %v4557
        %v4574 = vmul.f32 %v4558, %v4558
        %v4575 = vmul.f32 %v4559, %v4559
        %v4576 = vmul.f32 %v4560, %v4560
        %v4577 = vmul.f32 %v4561, %v4561
        %v4578 = vmul.f32 %v4562, %v4562
        %v4579 = vmul.f32 %v4563, %v4563
        %v4580 = vmul.f32 %v4564, %v4564
        %v4581 = vmul.f32 %v4565, %v4565
        %v4582 = vsub.f32 0.0, %v4566
        %v4583 = vsub.f32 0.0, %v4567
        %v4584 = vsub.f32 0.0, %v4568
        %v4585 = vsub.f32 0.0, %v4569
        %v4586 = vsub.f32 0.0, %v4570
        %v4587 = vsub.f32 0.0, %v4571
        %v4588 = vsub.f32 0.0, %v4572
        %v4589 = vsub.f32 0.0, %v4573
        %v4590 = vsub.f32 0.0, %v4574
        %v4591 = vsub.f32 0.0, %v4575
        %v4592 = vsub.f32 0.0, %v4576
        %v4593 = vsub.f32 0.0, %v4577
        %v4594 = vsub.f32 0.0, %v4578
        %v4595 = vsub.f32 0.0, %v4579
        %v4596 = vsub.f32 0.0, %v4580
        %v4597 = vsub.f32 0.0, %v4581
        %v4598 = vmul.f32 %v4582, 1.442695
        %v4599 = vpow.pop %v4598
        %v4600 = vmul.f32 %v4583, 1.442695
        %v4601 = vpow.pop %v4600
        %v4602 = vmul.f32 %v4584, 1.442695
        %v4603 = vpow.pop %v4602
        %v4604 = vmul.f32 %v4585, 1.442695
        %v4605 = vpow.pop %v4604
        %v4606 = vmul.f32 %v4586, 1.442695
        %v4607 = vpow.pop %v4606
        %v4608 = vmul.f32 %v4587, 1.442695
        %v4609 = vpow.pop %v4608
        %v4610 = vmul.f32 %v4588, 1.442695
        %v4611 = vpow.pop %v4610
        %v4612 = vmul.f32 %v4589, 1.442695
        %v4613 = vpow.pop %v4612
        %v4614 = vmul.f32 %v4590, 1.442695
        %v4615 = vpow.pop %v4614
        %v4616 = vmul.f32 %v4591, 1.442695
        %v4617 = vpow.pop %v4616
        %v4618 = vmul.f32 %v4592, 1.442695
        %v4619 = vpow.pop %v4618
        %v4620 = vmul.f32 %v4593, 1.442695
        %v4621 = vpow.pop %v4620
        %v4622 = vmul.f32 %v4594, 1.442695
        %v4623 = vpow.pop %v4622
        %v4624 = vmul.f32 %v4595, 1.442695
        %v4625 = vpow.pop %v4624
        %v4626 = vmul.f32 %v4596, 1.442695
        %v4627 = vpow.pop %v4626
        %v4628 = vmul.f32 %v4597, 1.442695
        %v4629 = vpow.pop %v4628
        %v4630 = vmul.f32 %v4599, 39.89423
        %v4631 = vmul.f32 %v4601, 39.89423
        %v4632 = vmul.f32 %v4603, 39.89423
        %v4633 = vmul.f32 %v4605, 39.89423
        %v4634 = vmul.f32 %v4607, 39.89423
        %v4635 = vmul.f32 %v4609, 39.89423
        %v4636 = vmul.f32 %v4611, 39.89423
        %v4637 = vmul.f32 %v4613, 39.89423
        %v4638 = vmul.f32 %v4615, 39.89423
        %v4639 = vmul.f32 %v4617, 39.89423
        %v4640 = vmul.f32 %v4619, 39.89423
        %v4641 = vmul.f32 %v4621, 39.89423
        %v4642 = vmul.f32 %v4623, 39.89423
        %v4643 = vmul.f32 %v4625, 39.89423
        %v4644 = vmul.f32 %v4627, 39.89423
        %v4645 = vmul.f32 %v4629, 39.89423
        %4646 = vst [vmem:[%s4533 + $0x8] sm:$0xff] %v4630
        %4647 = vst [vmem:[%s4533 + $0x28] sm:$0xff] %v4631
        %4648 = vst [vmem:[%s4533 + $0x48] sm:$0xff] %v4632
        %4649 = vst [vmem:[%s4533 + $0x68] sm:$0xff] %v4633
        %4650 = vst [vmem:[%s4533 + $0x88] sm:$0xff] %v4634
        %4651 = vst [vmem:[%s4533 + $0xa8] sm:$0xff] %v4635
        %4652 = vst [vmem:[%s4533 + $0xc8] sm:$0xff] %v4636
        %4653 = vst [vmem:[%s4533 + $0xe8] sm:$0xff] %v4637
        %4654 = vst [vmem:[%s4533 + $0x108] sm:$0xff] %v4638
        %4655 = vst [vmem:[%s4533 + $0x128] sm:$0xff] %v4639
        %4656 = vst [vmem:[%s4533 + $0x148] sm:$0xff] %v4640
        %4657 = vst [vmem:[%s4533 + $0x168] sm:$0xff] %v4641
        %4658 = vst [vmem:[%s4533 + $0x188] sm:$0xff] %v4642
        %4659 = vst [vmem:[%s4533 + $0x1a8] sm:$0xff] %v4643
        %4660 = vst [vmem:[%s4533 + $0x1c8] sm:$0xff] %v4644
        %4661 = vst [vmem:[%s4533 + $0x1e8] sm:$0xff] %v4645
        %4662 = vmatprep.subr.mxu0 0.0
        %4663 = vmatpush1.xpose.msra.mxu0 0.0
        %4664 = vmatprep.subr.mxu0 0.0
        %4665 = vmatpush1.xpose.msra.mxu0 0.0
        %4666 = vmatprep.subr.mxu0 0.0
        %4667 = vmatpush1.xpose.msra.mxu0 0.0
        %4668 = vmatprep.subr.mxu0 0.0
        %4669 = vmatpush1.xpose.msra.mxu0 0.0
        %4670 = vmatprep.subr.mxu0 0.0
        %4671 = vmatpush1.xpose.msra.mxu0 0.0
        %4672 = vmatprep.subr.mxu0 0.0
        %4673 = vmatpush1.xpose.msra.mxu0 0.0
        %4674 = vmatprep.subr.mxu0 0.0
        %4675 = vmatpush1.xpose.msra.mxu0 0.0
        %4676 = vmatprep.subr.mxu0 0.0
        %4677 = vmatpush1.xpose.msra.mxu0 0.0
        %4678 = vmatprep.subr.mxu0 0.0
        %4679 = vmatpush1.xpose.msra.mxu0 0.0
        %4680 = vmatprep.subr.mxu0 0.0
        %4681 = vmatpush1.xpose.msra.mxu0 0.0
        %4682 = vmatprep.subr.mxu0 0.0
        %4683 = vmatpush1.xpose.msra.mxu0 0.0
        %4684 = vmatprep.subr.mxu0 0.0
        %4685 = vmatpush1.xpose.msra.mxu0 0.0
        %4686 = vmatprep.subr.mxu0 0.0
        %4687 = vmatpush1.xpose.msra.mxu0 0.0
        %4688 = vmatprep.subr.mxu0 0.0
        %4689 = vmatpush1.xpose.msra.mxu0 0.0
        %4690 = vmatprep.subr.mxu0 0.0
        %4691 = vmatpush1.xpose.msra.mxu0 0.0
        %4692 = vmatprep.subr.mxu0 0.0
        %4693 = vmatpush1.xpose.msra.mxu0 %v642
        %4694 = vmatprep.subr.mxu0 0.0
        %4695 = vmatpush2.xpose.msra.mxu0 0.0
        %4696 = vmatprep.subr.mxu0 0.0
        %4697 = vmatpush2.xpose.msra.mxu0 0.0
        %4698 = vmatprep.subr.mxu0 0.0
        %4699 = vmatpush2.xpose.msra.mxu0 0.0
        %4700 = vmatprep.subr.mxu0 0.0
        %4701 = vmatpush2.xpose.msra.mxu0 0.0
        %4702 = vmatprep.subr.mxu0 0.0
        %4703 = vmatpush2.xpose.msra.mxu0 0.0
        %4704 = vmatprep.subr.mxu0 0.0
        %4705 = vmatpush2.xpose.msra.mxu0 0.0
        %4706 = vmatprep.subr.mxu0 0.0
        %4707 = vmatpush2.xpose.msra.mxu0 0.0
        %4708 = vmatprep.subr.mxu0 0.0
        %4709 = vmatpush2.xpose.msra.mxu0 0.0
        %4710 = vmatprep.subr.mxu0 0.0
        %4711 = vmatpush2.xpose.msra.mxu0 0.0
        %4712 = vmatprep.subr.mxu0 0.0
        %4713 = vmatpush2.xpose.msra.mxu0 0.0
        %4714 = vmatprep.subr.mxu0 0.0
        %4715 = vmatpush2.xpose.msra.mxu0 0.0
        %4716 = vmatprep.subr.mxu0 0.0
        %4717 = vmatpush2.xpose.msra.mxu0 0.0
        %4718 = vmatprep.subr.mxu0 0.0
        %4719 = vmatpush2.xpose.msra.mxu0 0.0
        %4720 = vmatprep.subr.mxu0 0.0
        %4721 = vmatpush2.xpose.msra.mxu0 0.0
        %4722 = vmatprep.subr.mxu0 0.0
        %4723 = vmatpush2.xpose.msra.mxu0 0.0
        %4724 = vmatprep.subr.mxu0 0.0
        %4725 = vmatpush2.xpose.msra.mxu0 0.0
        %4726 = vmatprep.mubr.f32.mxu0 0.0
        %4727 = vmatmul.mubr.f32.gmra.mxu0 %v4630
        %v4728 = vpop.f32.mrf.mxu0
        %v4729 = vadd.f32 0.0, %v4728
        %v4730 = vpop.f32.mrf.mxu0
        %4731 = vmatprep.mubr.f32.mxu0 0.0
        %4732 = vmatmul.mubr.f32.gmra.mxu0 %v4631
        %v4733 = vpop.f32.mrf.mxu0
        %v4734 = vadd.f32 0.0, %v4733
        %v4735 = vpop.f32.mrf.mxu0
        %4736 = vmatprep.mubr.f32.mxu0 0.0
        %4737 = vmatmul.mubr.f32.gmra.mxu0 %v4632
        %v4738 = vpop.f32.mrf.mxu0
        %v4739 = vadd.f32 0.0, %v4738
        %v4740 = vpop.f32.mrf.mxu0
        %4741 = vmatprep.mubr.f32.mxu0 0.0
        %4742 = vmatmul.mubr.f32.gmra.mxu0 %v4633
        %v4743 = vpop.f32.mrf.mxu0
        %v4744 = vadd.f32 0.0, %v4743
        %v4745 = vpop.f32.mrf.mxu0
        %4746 = vmatprep.mubr.f32.mxu0 0.0
        %4747 = vmatmul.mubr.f32.gmra.mxu0 %v4634
        %v4748 = vpop.f32.mrf.mxu0
        %v4749 = vadd.f32 0.0, %v4748
        %v4750 = vpop.f32.mrf.mxu0
        %4751 = vmatprep.mubr.f32.mxu0 0.0
        %4752 = vmatmul.mubr.f32.gmra.mxu0 %v4635
        %v4753 = vpop.f32.mrf.mxu0
        %v4754 = vadd.f32 0.0, %v4753
        %v4755 = vpop.f32.mrf.mxu0
        %4756 = vmatprep.mubr.f32.mxu0 0.0
        %4757 = vmatmul.mubr.f32.gmra.mxu0 %v4636
        %v4758 = vpop.f32.mrf.mxu0
        %v4759 = vadd.f32 0.0, %v4758
        %v4760 = vpop.f32.mrf.mxu0
        %4761 = vmatprep.mubr.f32.mxu0 0.0
        %4762 = vmatmul.mubr.f32.gmra.mxu0 %v4637
        %v4763 = vpop.f32.mrf.mxu0
        %v4764 = vadd.f32 0.0, %v4763
        %v4765 = vpop.f32.mrf.mxu0
        %4766 = vmatprep.mubr.f32.mxu0 0.0
        %4767 = vmatmul.mubr.f32.gmra.mxu0 %v4638
        %v4768 = vpop.f32.mrf.mxu0
        %v4769 = vadd.f32 0.0, %v4768
        %v4770 = vpop.f32.mrf.mxu0
        %4771 = vmatprep.mubr.f32.mxu0 0.0
        %4772 = vmatmul.mubr.f32.gmra.mxu0 %v4639
        %v4773 = vpop.f32.mrf.mxu0
        %v4774 = vadd.f32 0.0, %v4773
        %v4775 = vpop.f32.mrf.mxu0
        %4776 = vmatprep.mubr.f32.mxu0 0.0
        %4777 = vmatmul.mubr.f32.gmra.mxu0 %v4640
        %v4778 = vpop.f32.mrf.mxu0
        %v4779 = vadd.f32 0.0, %v4778
        %v4780 = vpop.f32.mrf.mxu0
        %4781 = vmatprep.mubr.f32.mxu0 0.0
        %4782 = vmatmul.mubr.f32.gmra.mxu0 %v4641
        %v4783 = vpop.f32.mrf.mxu0
        %v4784 = vadd.f32 0.0, %v4783
        %v4785 = vpop.f32.mrf.mxu0
        %4786 = vmatprep.mubr.f32.mxu0 0.0
        %4787 = vmatmul.mubr.f32.gmra.mxu0 %v4642
        %v4788 = vpop.f32.mrf.mxu0
        %v4789 = vadd.f32 0.0, %v4788
        %v4790 = vpop.f32.mrf.mxu0
        %4791 = vmatprep.mubr.f32.mxu0 0.0
        %4792 = vmatmul.mubr.f32.gmra.mxu0 %v4643
        %v4793 = vpop.f32.mrf.mxu0
        %v4794 = vadd.f32 0.0, %v4793
        %v4795 = vpop.f32.mrf.mxu0
        %4796 = vmatprep.mubr.f32.mxu0 0.0
        %4797 = vmatmul.mubr.f32.gmra.mxu0 %v4644
        %v4798 = vpop.f32.mrf.mxu0
        %v4799 = vadd.f32 0.0, %v4798
        %v4800 = vpop.f32.mrf.mxu0
        %4801 = vmatprep.mubr.f32.mxu0 0.0
        %4802 = vmatmul.mubr.f32.gmra.mxu0 %v4645
        %v4803 = vpop.f32.mrf.mxu0
        %v4804 = vadd.f32 0.0, %v4803
        %v4805 = vpop.f32.mrf.mxu0
        %4806 = vdwg.mxu0
        %4807 = vmatprep.subr.mxu0 0.0
        %4808 = vmatpush1.xpose.msra.mxu0 0.0
        %4809 = vmatprep.subr.mxu0 0.0
        %4810 = vmatpush1.xpose.msra.mxu0 0.0
        %4811 = vmatprep.subr.mxu0 0.0
        %4812 = vmatpush1.xpose.msra.mxu0 0.0
        %4813 = vmatprep.subr.mxu0 0.0
        %4814 = vmatpush1.xpose.msra.mxu0 0.0
        %4815 = vmatprep.subr.mxu0 0.0
        %4816 = vmatpush1.xpose.msra.mxu0 0.0
        %4817 = vmatprep.subr.mxu0 0.0
        %4818 = vmatpush1.xpose.msra.mxu0 0.0
        %4819 = vmatprep.subr.mxu0 0.0
        %4820 = vmatpush1.xpose.msra.mxu0 0.0
        %4821 = vmatprep.subr.mxu0 0.0
        %4822 = vmatpush1.xpose.msra.mxu0 0.0
        %4823 = vmatprep.subr.mxu0 0.0
        %4824 = vmatpush1.xpose.msra.mxu0 0.0
        %4825 = vmatprep.subr.mxu0 0.0
        %4826 = vmatpush1.xpose.msra.mxu0 0.0
        %4827 = vmatprep.subr.mxu0 0.0
        %4828 = vmatpush1.xpose.msra.mxu0 0.0
        %4829 = vmatprep.subr.mxu0 0.0
        %4830 = vmatpush1.xpose.msra.mxu0 0.0
        %4831 = vmatprep.subr.mxu0 0.0
        %4832 = vmatpush1.xpose.msra.mxu0 0.0
        %4833 = vmatprep.subr.mxu0 0.0
        %4834 = vmatpush1.xpose.msra.mxu0 0.0
        %4835 = vmatprep.subr.mxu0 0.0
        %4836 = vmatpush1.xpose.msra.mxu0 0.0
        %4837 = vmatprep.subr.mxu0 0.0
        %4838 = vmatpush1.xpose.msra.mxu0 %v287
        %4839 = vmatprep.subr.mxu0 0.0
        %4840 = vmatpush2.xpose.msra.mxu0 0.0
        %4841 = vmatprep.subr.mxu0 0.0
        %4842 = vmatpush2.xpose.msra.mxu0 0.0
        %4843 = vmatprep.subr.mxu0 0.0
        %4844 = vmatpush2.xpose.msra.mxu0 0.0
        %4845 = vmatprep.subr.mxu0 0.0
        %4846 = vmatpush2.xpose.msra.mxu0 0.0
        %4847 = vmatprep.subr.mxu0 0.0
        %4848 = vmatpush2.xpose.msra.mxu0 0.0
        %4849 = vmatprep.subr.mxu0 0.0
        %4850 = vmatpush2.xpose.msra.mxu0 0.0
        %4851 = vmatprep.subr.mxu0 0.0
        %4852 = vmatpush2.xpose.msra.mxu0 0.0
        %4853 = vmatprep.subr.mxu0 0.0
        %4854 = vmatpush2.xpose.msra.mxu0 0.0
        %4855 = vmatprep.subr.mxu0 0.0
        %4856 = vmatpush2.xpose.msra.mxu0 0.0
        %4857 = vmatprep.subr.mxu0 0.0
        %4858 = vmatpush2.xpose.msra.mxu0 0.0
        %4859 = vmatprep.subr.mxu0 0.0
        %4860 = vmatpush2.xpose.msra.mxu0 0.0
        %4861 = vmatprep.subr.mxu0 0.0
        %4862 = vmatpush2.xpose.msra.mxu0 0.0
        %4863 = vmatprep.subr.mxu0 0.0
        %4864 = vmatpush2.xpose.msra.mxu0 0.0
        %4865 = vmatprep.subr.mxu0 0.0
        %4866 = vmatpush2.xpose.msra.mxu0 0.0
        %4867 = vmatprep.subr.mxu0 0.0
        %4868 = vmatpush2.xpose.msra.mxu0 0.0
        %4869 = vmatprep.subr.mxu0 0.0
        %4870 = vmatpush2.xpose.msra.mxu0 0.0
        %4871 = vmatprep.mubr.f32.mxu0 0.0
        %4872 = vmatmul.mubr.f32.gmra.mxu0 %v4515
        %v4873 = vpop.f32.mrf.mxu0
        %v4874 = vadd.f32 %v4729, %v4873
        %v4875 = vpop.f32.mrf.mxu0
        %4876 = vmatprep.mubr.f32.mxu0 0.0
        %4877 = vmatmul.mubr.f32.gmra.mxu0 %v4516
        %v4878 = vpop.f32.mrf.mxu0
        %v4879 = vadd.f32 %v4734, %v4878
        %v4880 = vpop.f32.mrf.mxu0
        %4881 = vmatprep.mubr.f32.mxu0 0.0
        %4882 = vmatmul.mubr.f32.gmra.mxu0 %v4517
        %v4883 = vpop.f32.mrf.mxu0
        %v4884 = vadd.f32 %v4739, %v4883
        %v4885 = vpop.f32.mrf.mxu0
        %4886 = vmatprep.mubr.f32.mxu0 0.0
        %4887 = vmatmul.mubr.f32.gmra.mxu0 %v4518
        %v4888 = vpop.f32.mrf.mxu0
        %v4889 = vadd.f32 %v4744, %v4888
        %v4890 = vpop.f32.mrf.mxu0
        %4891 = vmatprep.mubr.f32.mxu0 0.0
        %4892 = vmatmul.mubr.f32.gmra.mxu0 %v4519
        %v4893 = vpop.f32.mrf.mxu0
        %v4894 = vadd.f32 %v4749, %v4893
        %v4895 = vpop.f32.mrf.mxu0
        %4896 = vmatprep.mubr.f32.mxu0 0.0
        %4897 = vmatmul.mubr.f32.gmra.mxu0 %v4520
        %v4898 = vpop.f32.mrf.mxu0
        %v4899 = vadd.f32 %v4754, %v4898
        %v4900 = vpop.f32.mrf.mxu0
        %4901 = vmatprep.mubr.f32.mxu0 0.0
        %4902 = vmatmul.mubr.f32.gmra.mxu0 %v4521
        %v4903 = vpop.f32.mrf.mxu0
        %v4904 = vadd.f32 %v4759, %v4903
        %v4905 = vpop.f32.mrf.mxu0
        %4906 = vmatprep.mubr.f32.mxu0 0.0
        %4907 = vmatmul.mubr.f32.gmra.mxu0 %v4522
        %v4908 = vpop.f32.mrf.mxu0
        %v4909 = vadd.f32 %v4764, %v4908
        %v4910 = vpop.f32.mrf.mxu0
        %4911 = vmatprep.mubr.f32.mxu0 0.0
        %4912 = vmatmul.mubr.f32.gmra.mxu0 %v4523
        %v4913 = vpop.f32.mrf.mxu0
        %v4914 = vadd.f32 %v4769, %v4913
        %v4915 = vpop.f32.mrf.mxu0
        %4916 = vmatprep.mubr.f32.mxu0 0.0
        %4917 = vmatmul.mubr.f32.gmra.mxu0 %v4524
        %v4918 = vpop.f32.mrf.mxu0
        %v4919 = vadd.f32 %v4774, %v4918
        %v4920 = vpop.f32.mrf.mxu0
        %4921 = vmatprep.mubr.f32.mxu0 0.0
        %4922 = vmatmul.mubr.f32.gmra.mxu0 %v4525
        %v4923 = vpop.f32.mrf.mxu0
        %v4924 = vadd.f32 %v4779, %v4923
        %v4925 = vpop.f32.mrf.mxu0
        %4926 = vmatprep.mubr.f32.mxu0 0.0
        %4927 = vmatmul.mubr.f32.gmra.mxu0 %v4526
        %v4928 = vpop.f32.mrf.mxu0
        %v4929 = vadd.f32 %v4784, %v4928
        %v4930 = vpop.f32.mrf.mxu0
        %4931 = vmatprep.mubr.f32.mxu0 0.0
        %4932 = vmatmul.mubr.f32.gmra.mxu0 %v4527
        %v4933 = vpop.f32.mrf.mxu0
        %v4934 = vadd.f32 %v4789, %v4933
        %v4935 = vpop.f32.mrf.mxu0
        %4936 = vmatprep.mubr.f32.mxu0 0.0
        %4937 = vmatmul.mubr.f32.gmra.mxu0 %v4528
        %v4938 = vpop.f32.mrf.mxu0
        %v4939 = vadd.f32 %v4794, %v4938
        %v4940 = vpop.f32.mrf.mxu0
        %4941 = vmatprep.mubr.f32.mxu0 0.0
        %4942 = vmatmul.mubr.f32.gmra.mxu0 %v4529
        %v4943 = vpop.f32.mrf.mxu0
        %v4944 = vadd.f32 %v4799, %v4943
        %v4945 = vpop.f32.mrf.mxu0
        %4946 = vmatprep.mubr.f32.mxu0 0.0
        %4947 = vmatmul.mubr.f32.gmra.mxu0 %v4530
        %v4948 = vpop.f32.mrf.mxu0
        %v4949 = vadd.f32 %v4804, %v4948
        %v4950 = vpop.f32.mrf.mxu0
        %4951 = vdwg.mxu0
        %v4952 = vsub.f32 %v298, %v4358
        %v4953 = vsub.f32 %v298, %v4363
        %v4954 = vsub.f32 %v298, %v4368
        %v4955 = vsub.f32 %v298, %v4373
        %v4956 = vsub.f32 %v298, %v4378
        %v4957 = vsub.f32 %v298, %v4383
        %v4958 = vsub.f32 %v298, %v4388
        %v4959 = vsub.f32 %v298, %v4393
        %v4960 = vsub.f32 %v298, %v4398
        %v4961 = vsub.f32 %v298, %v4403
        %v4962 = vsub.f32 %v298, %v4408
        %v4963 = vsub.f32 %v298, %v4413
        %v4964 = vsub.f32 %v298, %v4418
        %v4965 = vsub.f32 %v298, %v4423
        %v4966 = vsub.f32 %v298, %v4428
        %v4967 = vsub.f32 %v298, %v4433
        %v4968 = vmul.f32 %v4952, %v4952
        %v4969 = vmul.f32 %v4953, %v4953
        %v4970 = vmul.f32 %v4954, %v4954
        %v4971 = vmul.f32 %v4955, %v4955
        %v4972 = vmul.f32 %v4956, %v4956
        %v4973 = vmul.f32 %v4957, %v4957
        %v4974 = vmul.f32 %v4958, %v4958
        %v4975 = vmul.f32 %v4959, %v4959
        %v4976 = vmul.f32 %v4960, %v4960
        %v4977 = vmul.f32 %v4961, %v4961
        %v4978 = vmul.f32 %v4962, %v4962
        %v4979 = vmul.f32 %v4963, %v4963
        %v4980 = vmul.f32 %v4964, %v4964
        %v4981 = vmul.f32 %v4965, %v4965
        %v4982 = vmul.f32 %v4966, %v4966
        %v4983 = vmul.f32 %v4967, %v4967
        %v4984 = vsub.f32 0.0, %v4968
        %v4985 = vsub.f32 0.0, %v4969
        %v4986 = vsub.f32 0.0, %v4970
        %v4987 = vsub.f32 0.0, %v4971
        %v4988 = vsub.f32 0.0, %v4972
        %v4989 = vsub.f32 0.0, %v4973
        %v4990 = vsub.f32 0.0, %v4974
        %v4991 = vsub.f32 0.0, %v4975
        %v4992 = vsub.f32 0.0, %v4976
        %v4993 = vsub.f32 0.0, %v4977
        %v4994 = vsub.f32 0.0, %v4978
        %v4995 = vsub.f32 0.0, %v4979
        %v4996 = vsub.f32 0.0, %v4980
        %v4997 = vsub.f32 0.0, %v4981
        %v4998 = vsub.f32 0.0, %v4982
        %v4999 = vsub.f32 0.0, %v4983
        %v5000 = vmul.f32 %v4984, 1.442695
        %v5001 = vpow.pop %v5000
        %v5002 = vmul.f32 %v4985, 1.442695
        %v5003 = vpow.pop %v5002
        %v5004 = vmul.f32 %v4986, 1.442695
        %v5005 = vpow.pop %v5004
        %v5006 = vmul.f32 %v4987, 1.442695
        %v5007 = vpow.pop %v5006
        %v5008 = vmul.f32 %v4988, 1.442695
        %v5009 = vpow.pop %v5008
        %v5010 = vmul.f32 %v4989, 1.442695
        %v5011 = vpow.pop %v5010
        %v5012 = vmul.f32 %v4990, 1.442695
        %v5013 = vpow.pop %v5012
        %v5014 = vmul.f32 %v4991, 1.442695
        %v5015 = vpow.pop %v5014
        %v5016 = vmul.f32 %v4992, 1.442695
        %v5017 = vpow.pop %v5016
        %v5018 = vmul.f32 %v4993, 1.442695
        %v5019 = vpow.pop %v5018
        %v5020 = vmul.f32 %v4994, 1.442695
        %v5021 = vpow.pop %v5020
        %v5022 = vmul.f32 %v4995, 1.442695
        %v5023 = vpow.pop %v5022
        %v5024 = vmul.f32 %v4996, 1.442695
        %v5025 = vpow.pop %v5024
        %v5026 = vmul.f32 %v4997, 1.442695
        %v5027 = vpow.pop %v5026
        %v5028 = vmul.f32 %v4998, 1.442695
        %v5029 = vpow.pop %v5028
        %v5030 = vmul.f32 %v4999, 1.442695
        %v5031 = vpow.pop %v5030
        %v5032 = vmul.f32 %v5001, 39.89423
        %v5033 = vmul.f32 %v5003, 39.89423
        %v5034 = vmul.f32 %v5005, 39.89423
        %v5035 = vmul.f32 %v5007, 39.89423
        %v5036 = vmul.f32 %v5009, 39.89423
        %v5037 = vmul.f32 %v5011, 39.89423
        %v5038 = vmul.f32 %v5013, 39.89423
        %v5039 = vmul.f32 %v5015, 39.89423
        %v5040 = vmul.f32 %v5017, 39.89423
        %v5041 = vmul.f32 %v5019, 39.89423
        %v5042 = vmul.f32 %v5021, 39.89423
        %v5043 = vmul.f32 %v5023, 39.89423
        %v5044 = vmul.f32 %v5025, 39.89423
        %v5045 = vmul.f32 %v5027, 39.89423
        %v5046 = vmul.f32 %v5029, 39.89423
        %v5047 = vmul.f32 %v5031, 39.89423
        %5048 = vst [vmem:[%s4533 + $0x10] sm:$0xff] %v5032
        %5049 = vst [vmem:[%s4533 + $0x30] sm:$0xff] %v5033
        %5050 = vst [vmem:[%s4533 + $0x50] sm:$0xff] %v5034
        %5051 = vst [vmem:[%s4533 + $0x70] sm:$0xff] %v5035
        %5052 = vst [vmem:[%s4533 + $0x90] sm:$0xff] %v5036
        %5053 = vst [vmem:[%s4533 + $0xb0] sm:$0xff] %v5037
        %5054 = vst [vmem:[%s4533 + $0xd0] sm:$0xff] %v5038
        %5055 = vst [vmem:[%s4533 + $0xf0] sm:$0xff] %v5039
        %5056 = vst [vmem:[%s4533 + $0x110] sm:$0xff] %v5040
        %5057 = vst [vmem:[%s4533 + $0x130] sm:$0xff] %v5041
        %5058 = vst [vmem:[%s4533 + $0x150] sm:$0xff] %v5042
        %5059 = vst [vmem:[%s4533 + $0x170] sm:$0xff] %v5043
        %5060 = vst [vmem:[%s4533 + $0x190] sm:$0xff] %v5044
        %5061 = vst [vmem:[%s4533 + $0x1b0] sm:$0xff] %v5045
        %5062 = vst [vmem:[%s4533 + $0x1d0] sm:$0xff] %v5046
        %5063 = vst [vmem:[%s4533 + $0x1f0] sm:$0xff] %v5047
        %5064 = vmatprep.subr.mxu0 0.0
        %5065 = vmatpush1.xpose.msra.mxu0 0.0
        %5066 = vmatprep.subr.mxu0 0.0
        %5067 = vmatpush1.xpose.msra.mxu0 0.0
        %5068 = vmatprep.subr.mxu0 0.0
        %5069 = vmatpush1.xpose.msra.mxu0 0.0
        %5070 = vmatprep.subr.mxu0 0.0
        %5071 = vmatpush1.xpose.msra.mxu0 0.0
        %5072 = vmatprep.subr.mxu0 0.0
        %5073 = vmatpush1.xpose.msra.mxu0 0.0
        %5074 = vmatprep.subr.mxu0 0.0
        %5075 = vmatpush1.xpose.msra.mxu0 0.0
        %5076 = vmatprep.subr.mxu0 0.0
        %5077 = vmatpush1.xpose.msra.mxu0 0.0
        %5078 = vmatprep.subr.mxu0 0.0
        %5079 = vmatpush1.xpose.msra.mxu0 0.0
        %5080 = vmatprep.subr.mxu0 0.0
        %5081 = vmatpush1.xpose.msra.mxu0 0.0
        %5082 = vmatprep.subr.mxu0 0.0
        %5083 = vmatpush1.xpose.msra.mxu0 0.0
        %5084 = vmatprep.subr.mxu0 0.0
        %5085 = vmatpush1.xpose.msra.mxu0 0.0
        %5086 = vmatprep.subr.mxu0 0.0
        %5087 = vmatpush1.xpose.msra.mxu0 0.0
        %5088 = vmatprep.subr.mxu0 0.0
        %5089 = vmatpush1.xpose.msra.mxu0 0.0
        %5090 = vmatprep.subr.mxu0 0.0
        %5091 = vmatpush1.xpose.msra.mxu0 0.0
        %5092 = vmatprep.subr.mxu0 0.0
        %5093 = vmatpush1.xpose.msra.mxu0 0.0
        %5094 = vmatprep.subr.mxu0 0.0
        %5095 = vmatpush1.xpose.msra.mxu0 %v288
        %5096 = vmatprep.subr.mxu0 0.0
        %5097 = vmatpush2.xpose.msra.mxu0 0.0
        %5098 = vmatprep.subr.mxu0 0.0
        %5099 = vmatpush2.xpose.msra.mxu0 0.0
        %5100 = vmatprep.subr.mxu0 0.0
        %5101 = vmatpush2.xpose.msra.mxu0 0.0
        %5102 = vmatprep.subr.mxu0 0.0
        %5103 = vmatpush2.xpose.msra.mxu0 0.0
        %5104 = vmatprep.subr.mxu0 0.0
        %5105 = vmatpush2.xpose.msra.mxu0 0.0
        %5106 = vmatprep.subr.mxu0 0.0
        %5107 = vmatpush2.xpose.msra.mxu0 0.0
        %5108 = vmatprep.subr.mxu0 0.0
        %5109 = vmatpush2.xpose.msra.mxu0 0.0
        %5110 = vmatprep.subr.mxu0 0.0
        %5111 = vmatpush2.xpose.msra.mxu0 0.0
        %5112 = vmatprep.subr.mxu0 0.0
        %5113 = vmatpush2.xpose.msra.mxu0 0.0
        %5114 = vmatprep.subr.mxu0 0.0
        %5115 = vmatpush2.xpose.msra.mxu0 0.0
        %5116 = vmatprep.subr.mxu0 0.0
        %5117 = vmatpush2.xpose.msra.mxu0 0.0
        %5118 = vmatprep.subr.mxu0 0.0
        %5119 = vmatpush2.xpose.msra.mxu0 0.0
        %5120 = vmatprep.subr.mxu0 0.0
        %5121 = vmatpush2.xpose.msra.mxu0 0.0
        %5122 = vmatprep.subr.mxu0 0.0
        %5123 = vmatpush2.xpose.msra.mxu0 0.0
        %5124 = vmatprep.subr.mxu0 0.0
        %5125 = vmatpush2.xpose.msra.mxu0 0.0
        %5126 = vmatprep.subr.mxu0 0.0
        %5127 = vmatpush2.xpose.msra.mxu0 0.0
        %5128 = vmatprep.mubr.f32.mxu0 0.0
        %5129 = vmatmul.mubr.f32.gmra.mxu0 %v5032
        %v5130 = vpop.f32.mrf.mxu0
        %v5131 = vadd.f32 0.0, %v5130
        %v5132 = vpop.f32.mrf.mxu0
        %5133 = vmatprep.mubr.f32.mxu0 0.0
        %5134 = vmatmul.mubr.f32.gmra.mxu0 %v5033
        %v5135 = vpop.f32.mrf.mxu0
        %v5136 = vadd.f32 0.0, %v5135
        %v5137 = vpop.f32.mrf.mxu0
        %5138 = vmatprep.mubr.f32.mxu0 0.0
        %5139 = vmatmul.mubr.f32.gmra.mxu0 %v5034
        %v5140 = vpop.f32.mrf.mxu0
        %v5141 = vadd.f32 0.0, %v5140
        %v5142 = vpop.f32.mrf.mxu0
        %5143 = vmatprep.mubr.f32.mxu0 0.0
        %5144 = vmatmul.mubr.f32.gmra.mxu0 %v5035
        %v5145 = vpop.f32.mrf.mxu0
        %v5146 = vadd.f32 0.0, %v5145
        %v5147 = vpop.f32.mrf.mxu0
        %5148 = vmatprep.mubr.f32.mxu0 0.0
        %5149 = vmatmul.mubr.f32.gmra.mxu0 %v5036
        %v5150 = vpop.f32.mrf.mxu0
        %v5151 = vadd.f32 0.0, %v5150
        %v5152 = vpop.f32.mrf.mxu0
        %5153 = vmatprep.mubr.f32.mxu0 0.0
        %5154 = vmatmul.mubr.f32.gmra.mxu0 %v5037
        %v5155 = vpop.f32.mrf.mxu0
        %v5156 = vadd.f32 0.0, %v5155
        %v5157 = vpop.f32.mrf.mxu0
        %5158 = vmatprep.mubr.f32.mxu0 0.0
        %5159 = vmatmul.mubr.f32.gmra.mxu0 %v5038
        %v5160 = vpop.f32.mrf.mxu0
        %v5161 = vadd.f32 0.0, %v5160
        %v5162 = vpop.f32.mrf.mxu0
        %5163 = vmatprep.mubr.f32.mxu0 0.0
        %5164 = vmatmul.mubr.f32.gmra.mxu0 %v5039
        %v5165 = vpop.f32.mrf.mxu0
        %v5166 = vadd.f32 0.0, %v5165
        %v5167 = vpop.f32.mrf.mxu0
        %5168 = vmatprep.mubr.f32.mxu0 0.0
        %5169 = vmatmul.mubr.f32.gmra.mxu0 %v5040
        %v5170 = vpop.f32.mrf.mxu0
        %v5171 = vadd.f32 0.0, %v5170
        %v5172 = vpop.f32.mrf.mxu0
        %5173 = vmatprep.mubr.f32.mxu0 0.0
        %5174 = vmatmul.mubr.f32.gmra.mxu0 %v5041
        %v5175 = vpop.f32.mrf.mxu0
        %v5176 = vadd.f32 0.0, %v5175
        %v5177 = vpop.f32.mrf.mxu0
        %5178 = vmatprep.mubr.f32.mxu0 0.0
        %5179 = vmatmul.mubr.f32.gmra.mxu0 %v5042
        %v5180 = vpop.f32.mrf.mxu0
        %v5181 = vadd.f32 0.0, %v5180
        %v5182 = vpop.f32.mrf.mxu0
        %5183 = vmatprep.mubr.f32.mxu0 0.0
        %5184 = vmatmul.mubr.f32.gmra.mxu0 %v5043
        %v5185 = vpop.f32.mrf.mxu0
        %v5186 = vadd.f32 0.0, %v5185
        %v5187 = vpop.f32.mrf.mxu0
        %5188 = vmatprep.mubr.f32.mxu0 0.0
        %5189 = vmatmul.mubr.f32.gmra.mxu0 %v5044
        %v5190 = vpop.f32.mrf.mxu0
        %v5191 = vadd.f32 0.0, %v5190
        %v5192 = vpop.f32.mrf.mxu0
        %5193 = vmatprep.mubr.f32.mxu0 0.0
        %5194 = vmatmul.mubr.f32.gmra.mxu0 %v5045
        %v5195 = vpop.f32.mrf.mxu0
        %v5196 = vadd.f32 0.0, %v5195
        %v5197 = vpop.f32.mrf.mxu0
        %5198 = vmatprep.mubr.f32.mxu0 0.0
        %5199 = vmatmul.mubr.f32.gmra.mxu0 %v5046
        %v5200 = vpop.f32.mrf.mxu0
        %v5201 = vadd.f32 0.0, %v5200
        %v5202 = vpop.f32.mrf.mxu0
        %5203 = vmatprep.mubr.f32.mxu0 0.0
        %5204 = vmatmul.mubr.f32.gmra.mxu0 %v5047
        %v5205 = vpop.f32.mrf.mxu0
        %v5206 = vadd.f32 0.0, %v5205
        %v5207 = vpop.f32.mrf.mxu0
        %5208 = vdwg.mxu0
        %v5209 = vadd.f32 %v4874, %v5131
        %v5210 = vadd.f32 %v4879, %v5136
        %v5211 = vadd.f32 %v4884, %v5141
        %v5212 = vadd.f32 %v4889, %v5146
        %v5213 = vadd.f32 %v4894, %v5151
        %v5214 = vadd.f32 %v4899, %v5156
        %v5215 = vadd.f32 %v4904, %v5161
        %v5216 = vadd.f32 %v4909, %v5166
        %v5217 = vadd.f32 %v4914, %v5171
        %v5218 = vadd.f32 %v4919, %v5176
        %v5219 = vadd.f32 %v4924, %v5181
        %v5220 = vadd.f32 %v4929, %v5186
        %v5221 = vadd.f32 %v4934, %v5191
        %v5222 = vadd.f32 %v4939, %v5196
        %v5223 = vadd.f32 %v4944, %v5201
        %v5224 = vadd.f32 %v4949, %v5206
        %v5225 = vsub.f32 %v301, %v4358
        %v5226 = vsub.f32 %v301, %v4363
        %v5227 = vsub.f32 %v301, %v4368
        %v5228 = vsub.f32 %v301, %v4373
        %v5229 = vsub.f32 %v301, %v4378
        %v5230 = vsub.f32 %v301, %v4383
        %v5231 = vsub.f32 %v301, %v4388
        %v5232 = vsub.f32 %v301, %v4393
        %v5233 = vsub.f32 %v301, %v4398
        %v5234 = vsub.f32 %v301, %v4403
        %v5235 = vsub.f32 %v301, %v4408
        %v5236 = vsub.f32 %v301, %v4413
        %v5237 = vsub.f32 %v301, %v4418
        %v5238 = vsub.f32 %v301, %v4423
        %v5239 = vsub.f32 %v301, %v4428
        %v5240 = vsub.f32 %v301, %v4433
        %v5241 = vmul.f32 %v5225, %v5225
        %v5242 = vmul.f32 %v5226, %v5226
        %v5243 = vmul.f32 %v5227, %v5227
        %v5244 = vmul.f32 %v5228, %v5228
        %v5245 = vmul.f32 %v5229, %v5229
        %v5246 = vmul.f32 %v5230, %v5230
        %v5247 = vmul.f32 %v5231, %v5231
        %v5248 = vmul.f32 %v5232, %v5232
        %v5249 = vmul.f32 %v5233, %v5233
        %v5250 = vmul.f32 %v5234, %v5234
        %v5251 = vmul.f32 %v5235, %v5235
        %v5252 = vmul.f32 %v5236, %v5236
        %v5253 = vmul.f32 %v5237, %v5237
        %v5254 = vmul.f32 %v5238, %v5238
        %v5255 = vmul.f32 %v5239, %v5239
        %v5256 = vmul.f32 %v5240, %v5240
        %v5257 = vsub.f32 0.0, %v5241
        %v5258 = vsub.f32 0.0, %v5242
        %v5259 = vsub.f32 0.0, %v5243
        %v5260 = vsub.f32 0.0, %v5244
        %v5261 = vsub.f32 0.0, %v5245
        %v5262 = vsub.f32 0.0, %v5246
        %v5263 = vsub.f32 0.0, %v5247
        %v5264 = vsub.f32 0.0, %v5248
        %v5265 = vsub.f32 0.0, %v5249
        %v5266 = vsub.f32 0.0, %v5250
        %v5267 = vsub.f32 0.0, %v5251
        %v5268 = vsub.f32 0.0, %v5252
        %v5269 = vsub.f32 0.0, %v5253
        %v5270 = vsub.f32 0.0, %v5254
        %v5271 = vsub.f32 0.0, %v5255
        %v5272 = vsub.f32 0.0, %v5256
        %v5273 = vmul.f32 %v5257, 1.442695
        %v5274 = vpow.pop %v5273
        %v5275 = vmul.f32 %v5258, 1.442695
        %v5276 = vpow.pop %v5275
        %v5277 = vmul.f32 %v5259, 1.442695
        %v5278 = vpow.pop %v5277
        %v5279 = vmul.f32 %v5260, 1.442695
        %v5280 = vpow.pop %v5279
        %v5281 = vmul.f32 %v5261, 1.442695
        %v5282 = vpow.pop %v5281
        %v5283 = vmul.f32 %v5262, 1.442695
        %v5284 = vpow.pop %v5283
        %v5285 = vmul.f32 %v5263, 1.442695
        %v5286 = vpow.pop %v5285
        %v5287 = vmul.f32 %v5264, 1.442695
        %v5288 = vpow.pop %v5287
        %v5289 = vmul.f32 %v5265, 1.442695
        %v5290 = vpow.pop %v5289
        %v5291 = vmul.f32 %v5266, 1.442695
        %v5292 = vpow.pop %v5291
        %v5293 = vmul.f32 %v5267, 1.442695
        %v5294 = vpow.pop %v5293
        %v5295 = vmul.f32 %v5268, 1.442695
        %v5296 = vpow.pop %v5295
        %v5297 = vmul.f32 %v5269, 1.442695
        %v5298 = vpow.pop %v5297
        %v5299 = vmul.f32 %v5270, 1.442695
        %v5300 = vpow.pop %v5299
        %v5301 = vmul.f32 %v5271, 1.442695
        %v5302 = vpow.pop %v5301
        %v5303 = vmul.f32 %v5272, 1.442695
        %v5304 = vpow.pop %v5303
        %v5305 = vmul.f32 %v5274, 39.89423
        %v5306 = vmul.f32 %v5276, 39.89423
        %v5307 = vmul.f32 %v5278, 39.89423
        %v5308 = vmul.f32 %v5280, 39.89423
        %v5309 = vmul.f32 %v5282, 39.89423
        %v5310 = vmul.f32 %v5284, 39.89423
        %v5311 = vmul.f32 %v5286, 39.89423
        %v5312 = vmul.f32 %v5288, 39.89423
        %v5313 = vmul.f32 %v5290, 39.89423
        %v5314 = vmul.f32 %v5292, 39.89423
        %v5315 = vmul.f32 %v5294, 39.89423
        %v5316 = vmul.f32 %v5296, 39.89423
        %v5317 = vmul.f32 %v5298, 39.89423
        %v5318 = vmul.f32 %v5300, 39.89423
        %v5319 = vmul.f32 %v5302, 39.89423
        %v5320 = vmul.f32 %v5304, 39.89423
        %5321 = vst [vmem:[%s4533 + $0x18] sm:$0xff] %v5305
        %5322 = vst [vmem:[%s4533 + $0x38] sm:$0xff] %v5306
        %5323 = vst [vmem:[%s4533 + $0x58] sm:$0xff] %v5307
        %5324 = vst [vmem:[%s4533 + $0x78] sm:$0xff] %v5308
        %5325 = vst [vmem:[%s4533 + $0x98] sm:$0xff] %v5309
        %5326 = vst [vmem:[%s4533 + $0xb8] sm:$0xff] %v5310
        %5327 = vst [vmem:[%s4533 + $0xd8] sm:$0xff] %v5311
        %5328 = vst [vmem:[%s4533 + $0xf8] sm:$0xff] %v5312
        %5329 = vst [vmem:[%s4533 + $0x118] sm:$0xff] %v5313
        %5330 = vst [vmem:[%s4533 + $0x138] sm:$0xff] %v5314
        %5331 = vst [vmem:[%s4533 + $0x158] sm:$0xff] %v5315
        %5332 = vst [vmem:[%s4533 + $0x178] sm:$0xff] %v5316
        %5333 = vst [vmem:[%s4533 + $0x198] sm:$0xff] %v5317
        %5334 = vst [vmem:[%s4533 + $0x1b8] sm:$0xff] %v5318
        %5335 = vst [vmem:[%s4533 + $0x1d8] sm:$0xff] %v5319
        %5336 = vst [vmem:[%s4533 + $0x1f8] sm:$0xff] %v5320
        %5337 = vmatprep.subr.mxu0 0.0
        %5338 = vmatpush1.xpose.msra.mxu0 0.0
        %5339 = vmatprep.subr.mxu0 0.0
        %5340 = vmatpush1.xpose.msra.mxu0 0.0
        %5341 = vmatprep.subr.mxu0 0.0
        %5342 = vmatpush1.xpose.msra.mxu0 0.0
        %5343 = vmatprep.subr.mxu0 0.0
        %5344 = vmatpush1.xpose.msra.mxu0 0.0
        %5345 = vmatprep.subr.mxu0 0.0
        %5346 = vmatpush1.xpose.msra.mxu0 0.0
        %5347 = vmatprep.subr.mxu0 0.0
        %5348 = vmatpush1.xpose.msra.mxu0 0.0
        %5349 = vmatprep.subr.mxu0 0.0
        %5350 = vmatpush1.xpose.msra.mxu0 0.0
        %5351 = vmatprep.subr.mxu0 0.0
        %5352 = vmatpush1.xpose.msra.mxu0 0.0
        %5353 = vmatprep.subr.mxu0 0.0
        %5354 = vmatpush1.xpose.msra.mxu0 0.0
        %5355 = vmatprep.subr.mxu0 0.0
        %5356 = vmatpush1.xpose.msra.mxu0 0.0
        %5357 = vmatprep.subr.mxu0 0.0
        %5358 = vmatpush1.xpose.msra.mxu0 0.0
        %5359 = vmatprep.subr.mxu0 0.0
        %5360 = vmatpush1.xpose.msra.mxu0 0.0
        %5361 = vmatprep.subr.mxu0 0.0
        %5362 = vmatpush1.xpose.msra.mxu0 0.0
        %5363 = vmatprep.subr.mxu0 0.0
        %5364 = vmatpush1.xpose.msra.mxu0 0.0
        %5365 = vmatprep.subr.mxu0 0.0
        %5366 = vmatpush1.xpose.msra.mxu0 0.0
        %5367 = vmatprep.subr.mxu0 0.0
        %5368 = vmatpush1.xpose.msra.mxu0 %v1320
        %5369 = vmatprep.subr.mxu0 0.0
        %5370 = vmatpush2.xpose.msra.mxu0 0.0
        %5371 = vmatprep.subr.mxu0 0.0
        %5372 = vmatpush2.xpose.msra.mxu0 0.0
        %5373 = vmatprep.subr.mxu0 0.0
        %5374 = vmatpush2.xpose.msra.mxu0 0.0
        %5375 = vmatprep.subr.mxu0 0.0
        %5376 = vmatpush2.xpose.msra.mxu0 0.0
        %5377 = vmatprep.subr.mxu0 0.0
        %5378 = vmatpush2.xpose.msra.mxu0 0.0
        %5379 = vmatprep.subr.mxu0 0.0
        %5380 = vmatpush2.xpose.msra.mxu0 0.0
        %5381 = vmatprep.subr.mxu0 0.0
        %5382 = vmatpush2.xpose.msra.mxu0 0.0
        %5383 = vmatprep.subr.mxu0 0.0
        %5384 = vmatpush2.xpose.msra.mxu0 0.0
        %5385 = vmatprep.subr.mxu0 0.0
        %5386 = vmatpush2.xpose.msra.mxu0 0.0
        %5387 = vmatprep.subr.mxu0 0.0
        %5388 = vmatpush2.xpose.msra.mxu0 0.0
        %5389 = vmatprep.subr.mxu0 0.0
        %5390 = vmatpush2.xpose.msra.mxu0 0.0
        %5391 = vmatprep.subr.mxu0 0.0
        %5392 = vmatpush2.xpose.msra.mxu0 0.0
        %5393 = vmatprep.subr.mxu0 0.0
        %5394 = vmatpush2.xpose.msra.mxu0 0.0
        %5395 = vmatprep.subr.mxu0 0.0
        %5396 = vmatpush2.xpose.msra.mxu0 0.0
        %5397 = vmatprep.subr.mxu0 0.0
        %5398 = vmatpush2.xpose.msra.mxu0 0.0
        %5399 = vmatprep.subr.mxu0 0.0
        %5400 = vmatpush2.xpose.msra.mxu0 0.0
        %5401 = vmatprep.mubr.f32.mxu0 0.0
        %5402 = vmatmul.mubr.f32.gmra.mxu0 %v5305
        %v5403 = vpop.f32.mrf.mxu0
        %v5404 = vadd.f32 0.0, %v5403
        %v5405 = vpop.f32.mrf.mxu0
        %5406 = vmatprep.mubr.f32.mxu0 0.0
        %5407 = vmatmul.mubr.f32.gmra.mxu0 %v5306
        %v5408 = vpop.f32.mrf.mxu0
        %v5409 = vadd.f32 0.0, %v5408
        %v5410 = vpop.f32.mrf.mxu0
        %5411 = vmatprep.mubr.f32.mxu0 0.0
        %5412 = vmatmul.mubr.f32.gmra.mxu0 %v5307
        %v5413 = vpop.f32.mrf.mxu0
        %v5414 = vadd.f32 0.0, %v5413
        %v5415 = vpop.f32.mrf.mxu0
        %5416 = vmatprep.mubr.f32.mxu0 0.0
        %5417 = vmatmul.mubr.f32.gmra.mxu0 %v5308
        %v5418 = vpop.f32.mrf.mxu0
        %v5419 = vadd.f32 0.0, %v5418
        %v5420 = vpop.f32.mrf.mxu0
        %5421 = vmatprep.mubr.f32.mxu0 0.0
        %5422 = vmatmul.mubr.f32.gmra.mxu0 %v5309
        %v5423 = vpop.f32.mrf.mxu0
        %v5424 = vadd.f32 0.0, %v5423
        %v5425 = vpop.f32.mrf.mxu0
        %5426 = vmatprep.mubr.f32.mxu0 0.0
        %5427 = vmatmul.mubr.f32.gmra.mxu0 %v5310
        %v5428 = vpop.f32.mrf.mxu0
        %v5429 = vadd.f32 0.0, %v5428
        %v5430 = vpop.f32.mrf.mxu0
        %5431 = vmatprep.mubr.f32.mxu0 0.0
        %5432 = vmatmul.mubr.f32.gmra.mxu0 %v5311
        %v5433 = vpop.f32.mrf.mxu0
        %v5434 = vadd.f32 0.0, %v5433
        %v5435 = vpop.f32.mrf.mxu0
        %5436 = vmatprep.mubr.f32.mxu0 0.0
        %5437 = vmatmul.mubr.f32.gmra.mxu0 %v5312
        %v5438 = vpop.f32.mrf.mxu0
        %v5439 = vadd.f32 0.0, %v5438
        %v5440 = vpop.f32.mrf.mxu0
        %5441 = vmatprep.mubr.f32.mxu0 0.0
        %5442 = vmatmul.mubr.f32.gmra.mxu0 %v5313
        %v5443 = vpop.f32.mrf.mxu0
        %v5444 = vadd.f32 0.0, %v5443
        %v5445 = vpop.f32.mrf.mxu0
        %5446 = vmatprep.mubr.f32.mxu0 0.0
        %5447 = vmatmul.mubr.f32.gmra.mxu0 %v5314
        %v5448 = vpop.f32.mrf.mxu0
        %v5449 = vadd.f32 0.0, %v5448
        %v5450 = vpop.f32.mrf.mxu0
        %5451 = vmatprep.mubr.f32.mxu0 0.0
        %5452 = vmatmul.mubr.f32.gmra.mxu0 %v5315
        %v5453 = vpop.f32.mrf.mxu0
        %v5454 = vadd.f32 0.0, %v5453
        %v5455 = vpop.f32.mrf.mxu0
        %5456 = vmatprep.mubr.f32.mxu0 0.0
        %5457 = vmatmul.mubr.f32.gmra.mxu0 %v5316
        %v5458 = vpop.f32.mrf.mxu0
        %v5459 = vadd.f32 0.0, %v5458
        %v5460 = vpop.f32.mrf.mxu0
        %5461 = vmatprep.mubr.f32.mxu0 0.0
        %5462 = vmatmul.mubr.f32.gmra.mxu0 %v5317
        %v5463 = vpop.f32.mrf.mxu0
        %v5464 = vadd.f32 0.0, %v5463
        %v5465 = vpop.f32.mrf.mxu0
        %5466 = vmatprep.mubr.f32.mxu0 0.0
        %5467 = vmatmul.mubr.f32.gmra.mxu0 %v5318
        %v5468 = vpop.f32.mrf.mxu0
        %v5469 = vadd.f32 0.0, %v5468
        %v5470 = vpop.f32.mrf.mxu0
        %5471 = vmatprep.mubr.f32.mxu0 0.0
        %5472 = vmatmul.mubr.f32.gmra.mxu0 %v5319
        %v5473 = vpop.f32.mrf.mxu0
        %v5474 = vadd.f32 0.0, %v5473
        %v5475 = vpop.f32.mrf.mxu0
        %5476 = vmatprep.mubr.f32.mxu0 0.0
        %5477 = vmatmul.mubr.f32.gmra.mxu0 %v5320
        %v5478 = vpop.f32.mrf.mxu0
        %v5479 = vadd.f32 0.0, %v5478
        %v5480 = vpop.f32.mrf.mxu0
        %5481 = vdwg.mxu0
        %v5482 = vadd.f32 %v5209, %v5404
        %v5483 = vadd.f32 %v5210, %v5409
        %v5484 = vadd.f32 %v5211, %v5414
        %v5485 = vadd.f32 %v5212, %v5419
        %v5486 = vadd.f32 %v5213, %v5424
        %v5487 = vadd.f32 %v5214, %v5429
        %v5488 = vadd.f32 %v5215, %v5434
        %v5489 = vadd.f32 %v5216, %v5439
        %v5490 = vadd.f32 %v5217, %v5444
        %v5491 = vadd.f32 %v5218, %v5449
        %v5492 = vadd.f32 %v5219, %v5454
        %v5493 = vadd.f32 %v5220, %v5459
        %v5494 = vadd.f32 %v5221, %v5464
        %v5495 = vadd.f32 %v5222, %v5469
        %v5496 = vadd.f32 %v5223, %v5474
        %v5497 = vadd.f32 %v5224, %v5479
        %v5498 = vmul.f32 %v4322, %v5482
        %v5499 = vmul.f32 %v4323, %v5483
        %v5500 = vmul.f32 %v4324, %v5484
        %v5501 = vmul.f32 %v4325, %v5485
        %v5502 = vmul.f32 %v4326, %v5486
        %v5503 = vmul.f32 %v4327, %v5487
        %v5504 = vmul.f32 %v4328, %v5488
        %v5505 = vmul.f32 %v4329, %v5489
        %v5506 = vmul.f32 %v4330, %v5490
        %v5507 = vmul.f32 %v4331, %v5491
        %v5508 = vmul.f32 %v4332, %v5492
        %v5509 = vmul.f32 %v4333, %v5493
        %v5510 = vmul.f32 %v4334, %v5494
        %v5511 = vmul.f32 %v4335, %v5495
        %v5512 = vmul.f32 %v4336, %v5496
        %v5513 = vmul.f32 %v4337, %v5497
        %v5514 = vsel %vm1499, %v5498, 0.0
        %5515 = vadd.xlane.f32.xlu0 %v5514
        %v5516 = vpop.xlane.xlu0 %5515
        %v5517 = vsel %vm1499, %v5499, 0.0
        %5518 = vadd.xlane.f32.xlu0 %v5517
        %v5519 = vpop.xlane.xlu0 %5518
        %v5520 = vsel %vm1499, %v5500, 0.0
        %5521 = vadd.xlane.f32.xlu0 %v5520
        %v5522 = vpop.xlane.xlu0 %5521
        %v5523 = vsel %vm1499, %v5501, 0.0
        %5524 = vadd.xlane.f32.xlu0 %v5523
        %v5525 = vpop.xlane.xlu0 %5524
        %v5526 = vsel %vm1499, %v5502, 0.0
        %5527 = vadd.xlane.f32.xlu0 %v5526
        %v5528 = vpop.xlane.xlu0 %5527
        %v5529 = vsel %vm1499, %v5503, 0.0
        %5530 = vadd.xlane.f32.xlu0 %v5529
        %v5531 = vpop.xlane.xlu0 %5530
        %v5532 = vsel %vm1499, %v5504, 0.0
        %5533 = vadd.xlane.f32.xlu0 %v5532
        %v5534 = vpop.xlane.xlu0 %5533
        %v5535 = vsel %vm1499, %v5505, 0.0
        %5536 = vadd.xlane.f32.xlu0 %v5535
        %v5537 = vpop.xlane.xlu0 %5536
        %v5538 = vsel %vm1499, %v5506, 0.0
        %5539 = vadd.xlane.f32.xlu0 %v5538
        %v5540 = vpop.xlane.xlu0 %5539
        %v5541 = vsel %vm1499, %v5507, 0.0
        %5542 = vadd.xlane.f32.xlu0 %v5541
        %v5543 = vpop.xlane.xlu0 %5542
        %v5544 = vsel %vm1499, %v5508, 0.0
        %5545 = vadd.xlane.f32.xlu0 %v5544
        %v5546 = vpop.xlane.xlu0 %5545
        %v5547 = vsel %vm1499, %v5509, 0.0
        %5548 = vadd.xlane.f32.xlu0 %v5547
        %v5549 = vpop.xlane.xlu0 %5548
        %v5550 = vsel %vm1499, %v5510, 0.0
        %5551 = vadd.xlane.f32.xlu0 %v5550
        %v5552 = vpop.xlane.xlu0 %5551
        %v5553 = vsel %vm1499, %v5511, 0.0
        %5554 = vadd.xlane.f32.xlu0 %v5553
        %v5555 = vpop.xlane.xlu0 %5554
        %v5556 = vsel %vm1499, %v5512, 0.0
        %5557 = vadd.xlane.f32.xlu0 %v5556
        %v5558 = vpop.xlane.xlu0 %5557
        %v5559 = vsel %vm1499, %v5513, 0.0
        %5560 = vadd.xlane.f32.xlu0 %v5559
        %v5561 = vpop.xlane.xlu0 %5560
        %v5562 = vmul.f32 %v5516, %v4339
        %v5563 = vmul.f32 %v5519, %v4340
        %v5564 = vmul.f32 %v5522, %v4341
        %v5565 = vmul.f32 %v5525, %v4342
        %v5566 = vmul.f32 %v5528, %v4343
        %v5567 = vmul.f32 %v5531, %v4344
        %v5568 = vmul.f32 %v5534, %v4345
        %v5569 = vmul.f32 %v5537, %v4346
        %v5570 = vmul.f32 %v5540, %v4347
        %v5571 = vmul.f32 %v5543, %v4348
        %v5572 = vmul.f32 %v5546, %v4349
        %v5573 = vmul.f32 %v5549, %v4350
        %v5574 = vmul.f32 %v5552, %v4351
        %v5575 = vmul.f32 %v5555, %v4352
        %v5576 = vmul.f32 %v5558, %v4353
        %v5577 = vmul.f32 %v5561, %v4354
        %5594 = vrot.lane.b32.xlu0 %v5562, 127
        %v5595 = vpop.permute.xlu0 %5594
        %5596 = vrot.lane.b32.xlu0 %v5563, 127
        %v5597 = vpop.permute.xlu0 %5596
        %5598 = vrot.lane.b32.xlu0 %v5564, 127
        %v5599 = vpop.permute.xlu0 %5598
        %5600 = vrot.lane.b32.xlu0 %v5565, 127
        %v5601 = vpop.permute.xlu0 %5600
        %5602 = vrot.lane.b32.xlu0 %v5566, 127
        %v5603 = vpop.permute.xlu0 %5602
        %5604 = vrot.lane.b32.xlu0 %v5567, 127
        %v5605 = vpop.permute.xlu0 %5604
        %5606 = vrot.lane.b32.xlu0 %v5568, 127
        %v5607 = vpop.permute.xlu0 %5606
        %5608 = vrot.lane.b32.xlu0 %v5569, 127
        %v5609 = vpop.permute.xlu0 %5608
        %5610 = vrot.lane.b32.xlu0 %v5570, 127
        %v5611 = vpop.permute.xlu0 %5610
        %5612 = vrot.lane.b32.xlu0 %v5571, 127
        %v5613 = vpop.permute.xlu0 %5612
        %5614 = vrot.lane.b32.xlu0 %v5572, 127
        %v5615 = vpop.permute.xlu0 %5614
        %5616 = vrot.lane.b32.xlu0 %v5573, 127
        %v5617 = vpop.permute.xlu0 %5616
        %5618 = vrot.lane.b32.xlu0 %v5574, 127
        %v5619 = vpop.permute.xlu0 %5618
        %5620 = vrot.lane.b32.xlu0 %v5575, 127
        %v5621 = vpop.permute.xlu0 %5620
        %5622 = vrot.lane.b32.xlu0 %v5576, 127
        %v5623 = vpop.permute.xlu0 %5622
        %5624 = vrot.lane.b32.xlu0 %v5577, 127
        %v5625 = vpop.permute.xlu0 %5624
        %s5642 = scalar_lea.vmem %s284, 384
        %5643 = vst.msk [vmem:[%s5642] sm:$0xff] %vm1628, %v5595
        %5644 = vst.msk [vmem:[%s5642 + $0x8] sm:$0xff] %vm1628, %v5597
        %5645 = vst.msk [vmem:[%s5642 + $0x10] sm:$0xff] %vm1628, %v5599
        %5646 = vst.msk [vmem:[%s5642 + $0x18] sm:$0xff] %vm1628, %v5601
        %5647 = vst.msk [vmem:[%s5642 + $0x20] sm:$0xff] %vm1628, %v5603
        %5648 = vst.msk [vmem:[%s5642 + $0x28] sm:$0xff] %vm1628, %v5605
        %5649 = vst.msk [vmem:[%s5642 + $0x30] sm:$0xff] %vm1628, %v5607
        %5650 = vst.msk [vmem:[%s5642 + $0x38] sm:$0xff] %vm1628, %v5609
        %5651 = vst.msk [vmem:[%s5642 + $0x40] sm:$0xff] %vm1628, %v5611
        %5652 = vst.msk [vmem:[%s5642 + $0x48] sm:$0xff] %vm1628, %v5613
        %5653 = vst.msk [vmem:[%s5642 + $0x50] sm:$0xff] %vm1628, %v5615
        %5654 = vst.msk [vmem:[%s5642 + $0x58] sm:$0xff] %vm1628, %v5617
        %5655 = vst.msk [vmem:[%s5642 + $0x60] sm:$0xff] %vm1628, %v5619
        %5656 = vst.msk [vmem:[%s5642 + $0x68] sm:$0xff] %vm1628, %v5621
        %5657 = vst.msk [vmem:[%s5642 + $0x70] sm:$0xff] %vm1628, %v5623
        %5658 = vst.msk [vmem:[%s5642 + $0x78] sm:$0xff] %vm1628, %v5625
        %s5659 = smul.u32 64, %s24
        %p5660 = scmp.lt.s32.totalorder %s23, 1
        %s5661 = scalar_select %p5660, %s23, 1
        %p5662 = scmp.lt.s32.totalorder %s5659, 63
        %s5663 = scalar_select %p5662, %s5659, 63
        %s5664 = smul.addr %s5661, 64
        %s5665 = sadd.s32 %s5663, %s5664
        %s5666 = smul.addr %s5665, 8
        %s5667 = scalar_lea.vmem %s3, %s5666
        %s5668 = sand.u32 %s146, 1
        %s5669 = scalar_lea.sflag [#allocation3], %s5668
        %s5670 = sand.u32 %s146, 1
        %s5671 = smul.addr %s5670, 2048
        %s5672 = scalar_lea.vmem [#allocation2], %s5671
        // Predicated region
        $region33: #{wavetable_synth_forward.1} parent=31 // pred_check
          %p5673 = pneg %p128
        $region34: #{wavetable_synth_forward.1} parent=31 // pred_check_branch
          %5675 = sbr.rel (%p5673) target = $region36
        $region35: #{wavetable_synth_forward.1} parent=31 // pred_region
          %s5676 = smul.u32 64, %s24
        $region36: #{wavetable_synth_forward.1} parent=31 // pred_fallthru
          _
        // Predicated region
        $region37: #{wavetable_synth_forward.1} parent=31 // pred_check
          %p5677 = pneg %p156
        $region38: #{wavetable_synth_forward.1} parent=31 // pred_check_branch
          %5679 = sbr.rel (%p5677) target = $region40
        $region39: #{wavetable_synth_forward.1} parent=31 // pred_region
          %s5680 = smul.u32 64, %s24
          %s5682 = ssub.s32 32768, 32768
          %5683 = vsyncadd %s5669, %s5682
          %s5684 = smul.addr %s5680, 4
          %s5685 = smul.addr %s23, 256
          %s5686 = sadd.s32 %s5684, %s5685
          %s5687 = smul.addr %s5686, 128
          %s5688 = scalar_lea.hbm %s4, %s5687
          %s5689 = sshll.u32 %s5672, 4
          %s5690 = int_to_ptr.vmem [resolvable:$true] %s5689
          %5695 = dma.vmem_to_hbm [thread:$0]  %s5690, 32768, %s5688, %s5669, 512, 512, 32
        $region40: #{wavetable_synth_forward.1} parent=31 // pred_fallthru
          _
      $region32: #{wavetable_synth_forward.1} parent=5 // pred_fallthru
        _
      %p5696 = scmp.le.s32.totalorder 2, %s14
      // Predicated region
      $region41: #{wavetable_synth_forward.1} parent=5 // pred_check
        %p5697 = pneg %p5696
      $region42: #{wavetable_synth_forward.1} parent=5 // pred_check_branch
        %5699 = sbr.rel (%p5697) target = $region44
      $region43: #{wavetable_synth_forward.1} parent=5 // pred_region
        %s5700 = ssub.s32 %s14, 2
        // Predicated region
        $region45: #{wavetable_synth_forward.1} parent=43 // pred_check
          %p5701 = pneg %p134
        $region46: #{wavetable_synth_forward.1} parent=43 // pred_check_branch
          %5703 = sbr.rel (%p5701) target = $region48
        $region47: #{wavetable_synth_forward.1} parent=43 // pred_region
          %s5704 = smul.u32 64, %s26
          %p5705 = scmp.lt.s32.totalorder %s25, 1
          %s5706 = scalar_select %p5705, %s25, 1
          %p5707 = scmp.lt.s32.totalorder %s5704, 63
          %s5708 = scalar_select %p5707, %s5704, 63
          %s5709 = smul.addr %s5706, 64
          %s5710 = sadd.s32 %s5708, %s5709
          %s5711 = smul.addr %s5710, 8
          %s5712 = scalar_lea.vmem %s3, %s5711
        $region48: #{wavetable_synth_forward.1} parent=43 // pred_fallthru
          _
        // Predicated region
        $region49: #{wavetable_synth_forward.1} parent=43 // pred_check
          %p5713 = pneg %p162
        $region50: #{wavetable_synth_forward.1} parent=43 // pred_check_branch
          %5715 = sbr.rel (%p5713) target = $region52
        $region51: #{wavetable_synth_forward.1} parent=43 // pred_region
          %s5716 = sand.u32 %s147, 1
          %s5717 = scalar_lea.sflag [#allocation3], %s5716
          %s5718 = sand.u32 %s147, 1
          %s5719 = smul.addr %s5718, 2048
          %s5720 = scalar_lea.vmem [#allocation2], %s5719
          %5721 = dma.done %s5717, 32768
        $region52: #{wavetable_synth_forward.1} parent=43 // pred_fallthru
          _
      $region44: #{wavetable_synth_forward.1} parent=5 // pred_fallthru
        _
    $region6: #{wavetable_synth_forward.1} parent=1 // loop_footer
      %s18 = sadd.s32 1, %s14
    $region7: #{wavetable_synth_forward.1} parent=1 // loop_footer_branch
      %13 = sbr.rel target = $region3
    $region8: #{wavetable_synth_forward.1} parent=1 // loop_exit
      _
    %5722 = vsyncpa [#allocation3], 1
    %s5723 = scalar_lea.sflag [#allocation3], 1
    %5724 = vsyncpa %s5723, 1

</llo_original>
